<compile_context>
chip_gen: v7x
topology: tpu7x:2x2x1
jax: 0.10.0
libtpu: 0.0.40
codegen_flags: <defaults>
</compile_context>

<pallas_src>
import jax
import jax.numpy as jnp
from jax.experimental import pallas as pl
from jax.experimental.pallas import tpu as pltpu

# ---------------- scaled-down config ----------------
BATCH      = 2        # batch_size
FRAMES     = 8        # frames (sequence length)
C_IN       = 4        # input channels
IMG        = 16       # H = W
K          = 3        # conv kernel size
FEAT_DIM   = 64       # stands in for resnet50's 2048-d pooled features
HIDDEN     = 32       # stands in for hidden_dim=512
NUM_LAYERS = 3        # LSTM layers
FC_MID     = 64       # stands in for 1024
NUM_CLS    = 2
EPS_BN     = 1e-5


# ------- kernel 1: conv3x3 + ReLU + global avg pool + LSTM layer-0 input projection -------
def conv_gap_proj_kernel(patches_ref, w_ref, b_ref, wih0_ref, out_ref):
    # patches: (BT, HW, CKK); w: (CKK, F); b: (1, F); wih0: (F, 4H); out: (BT, 4H)
    BT, HW, CKK = patches_ref.shape
    x = patches_ref[...].reshape(BT * HW, CKK)
    y = jnp.dot(x, w_ref[...], preferred_element_type=jnp.float32)     # conv as one big matmul
    y = jnp.maximum(y + b_ref[...], 0.0)                                # ReLU
    feats = jnp.mean(y.reshape(BT, HW, -1), axis=1)                     # AdaptiveAvgPool2d((1,1))
    # Hoisted LSTM layer-0 input projection for all timesteps at once.
    out_ref[...] = jnp.dot(feats, wih0_ref[...], preferred_element_type=jnp.float32)


def conv_gap_proj(patches, w, b, wih0):
    BT = patches.shape[0]
    G = wih0.shape[1]
    vmem = pl.BlockSpec(memory_space=pltpu.MemorySpace.VMEM)
    return pl.pallas_call(
        conv_gap_proj_kernel,
        out_shape=jax.ShapeDtypeStruct((BT, G), jnp.float32),
        in_specs=[vmem] * 4,
        out_specs=vmem,
    )(patches, w, b, wih0)


# ------- kernel 2: fused 3-layer LSTM over time + FC head at the last step -------
def lstm_head_kernel(pregates_ref, wih_ref, whh_ref, b_ref,
                     w1_ref, b1_ref, w2_ref, b2_ref,
                     out_ref, h_scr, c_scr):
    # pregates: (B, 4H) precomputed x_t @ W_ih0 for this timestep
    # wih: (L-1, H, 4H) for layers >= 1; whh: (L, H, 4H); b: (L, 1, 4H)
    # w1: (H, FC_MID) BN-folded; b1: (1, FC_MID); w2: (FC_MID, NUM_CLS); b2: (1, NUM_CLS)
    t = pl.program_id(0)

    @pl.when(t == 0)
    def _():
        h_scr[...] = jnp.zeros_like(h_scr)
        c_scr[...] = jnp.zeros_like(c_scr)

    H = h_scr.shape[-1]
    layer_in = None
    # Statically unrolled loop over the 3 layers; all weights stay resident in VMEM.
    for l in range(NUM_LAYERS):
        if l == 0:
            gates = (pregates_ref[...]
                     + jnp.dot(h_scr[0], whh_ref[0], preferred_element_type=jnp.float32)
                     + b_ref[0])
        else:
            gates = (jnp.dot(layer_in, wih_ref[l - 1], preferred_element_type=jnp.float32)
                     + jnp.dot(h_scr[l], whh_ref[l], preferred_element_type=jnp.float32)
                     + b_ref[l])
        # PyTorch gate order (i, f, g, o)
        i = jax.nn.sigmoid(gates[:, 0 * H:1 * H])
        f = jax.nn.sigmoid(gates[:, 1 * H:2 * H])
        g = jnp.tanh(gates[:, 2 * H:3 * H])
        o = jax.nn.sigmoid(gates[:, 3 * H:4 * H])
        c = f * c_scr[l] + i * g
        h = o * jnp.tanh(c)
        c_scr[l] = c
        h_scr[l] = h
        layer_in = h

    # Fused FC head at the final timestep: Linear -> BN(eval, folded) -> ReLU
    # -> Dropout(eval, identity) -> Linear.
    # TODO(synk): Dropout(0.2) is identity in eval mode; train-mode masking not implemented.
    @pl.when(t == pl.num_programs(0) - 1)
    def _():
        hf = h_scr[NUM_LAYERS - 1]
        y = jnp.maximum(
            jnp.dot(hf, w1_ref[...], preferred_element_type=jnp.float32) + b1_ref[...], 0.0)
        out_ref[...] = jnp.dot(y, w2_ref[...], preferred_element_type=jnp.float32) + b2_ref[...]


def lstm_head(pregates, w_ih_rest, w_hh, biases, w1, b1, w2, b2):
    # pregates: (T, B, 4H) time-major
    T, B, G = pregates.shape
    L, H, _ = w_hh.shape
    n_cls = w2.shape[1]
    return pl.pallas_call(
        lstm_head_kernel,
        out_shape=jax.ShapeDtypeStruct((B, n_cls), jnp.float32),
        grid_spec=pltpu.PrefetchScalarGridSpec(
            num_scalar_prefetch=0,
            grid=(T,),
            in_specs=[
                pl.BlockSpec((None, B, G), lambda t: (t, 0, 0)),
                pl.BlockSpec((L - 1, H, G), lambda t: (0, 0, 0)),
                pl.BlockSpec((L, H, G), lambda t: (0, 0, 0)),
                pl.BlockSpec((L, 1, G), lambda t: (0, 0, 0)),
                pl.BlockSpec(w1.shape, lambda t: (0, 0)),
                pl.BlockSpec(b1.shape, lambda t: (0, 0)),
                pl.BlockSpec(w2.shape, lambda t: (0, 0)),
                pl.BlockSpec(b2.shape, lambda t: (0, 0)),
            ],
            out_specs=pl.BlockSpec((B, n_cls), lambda t: (0, 0)),
            scratch_shapes=[pltpu.VMEM((L, B, H), jnp.float32),   # h state per layer
                            pltpu.VMEM((L, B, H), jnp.float32)],  # c state per layer
        ),
        compiler_params=pltpu.CompilerParams(
            dimension_semantics=("arbitrary",)),  # T carries h/c state — must stay arbitrary
    )(pregates, w_ih_rest, w_hh, biases, w1, b1, w2, b2)


# ---------------- JAX glue ----------------
def im2col(x, k):
    # x: (N, C, H, W) -> (N, H*W, C*k*k), 'same' padding for 3x3 stride-1 conv
    N, C, H, W = x.shape
    p = k // 2
    xp = jnp.pad(x, ((0, 0), (0, 0), (p, p), (p, p)))
    cols = []
    for dy in range(k):
        for dx in range(k):
            cols.append(xp[:, :, dy:dy + H, dx:dx + W])
    p_ = jnp.stack(cols, axis=0)              # (k*k, N, C, H, W)
    p_ = p_.transpose(1, 3, 4, 2, 0)          # (N, H, W, C, k*k)
    return p_.reshape(N, H * W, C * k * k)


def cnn_lstm_forward(x, params):
    B, T, C, Hh, Ww = x.shape
    xi = x.reshape(B * T, C, Hh, Ww)                                  # view(batch*frames, C, H, W)
    patches = im2col(xi, K)                                           # (B*T, H*W, C*K*K)
    wconv = params["conv_w"].reshape(FEAT_DIM, C * K * K).T           # (C*K*K, FEAT)
    wih0 = params["lstm"][0][0].T                                     # (FEAT, 4H)
    pregates = conv_gap_proj(patches, wconv,
                             params["conv_b"].reshape(1, FEAT_DIM), wih0)       # (B*T, 4H)
    pregates = pregates.reshape(B, T, 4 * HIDDEN).transpose(1, 0, 2)            # (T, B, 4H) time-major

    # Stack LSTM weights so one kernel call holds all layers resident.
    w_hh = jnp.stack([w.T for (_, w, _) in params["lstm"]])                     # (L, H, 4H)
    w_ih_rest = jnp.stack([params["lstm"][l][0].T for l in range(1, NUM_LAYERS)])  # (L-1, H, 4H)
    biases = jnp.stack([b.reshape(1, 4 * HIDDEN) for (_, _, b) in params["lstm"]])  # (L, 1, 4H)

    # Fold BatchNorm1d (eval mode, running stats) into the first FC layer.
    scale = params["bn_gamma"] * jax.lax.rsqrt(params["bn_var"] + EPS_BN)
    w1f = params["fc_w1"].T * scale[None, :]                                    # (H, FC_MID)
    b1f = ((params["fc_b1"] - params["bn_mean"]) * scale + params["bn_beta"]).reshape(1, FC_MID)

    return lstm_head(pregates, w_ih_rest, w_hh, biases,
                     w1f, b1f, params["fc_w2"].T,
                     params["fc_b2"].reshape(1, NUM_CLS))                       # (B, NUM_CLS)


def init_params(key):
    keys = jax.random.split(key, 32)
    params = {}
    params["conv_w"] = 0.1 * jax.random.normal(keys[0], (FEAT_DIM, C_IN, K, K), jnp.float32)
    params["conv_b"] = 0.1 * jax.random.normal(keys[1], (FEAT_DIM,), jnp.float32)

    lstm = []
    kidx = 2
    s = 1.0 / jnp.sqrt(HIDDEN).astype(jnp.float32)
    for layer in range(NUM_LAYERS):
        in_dim = FEAT_DIM if layer == 0 else HIDDEN
        w_ih = jax.random.uniform(keys[kidx], (4 * HIDDEN, in_dim), jnp.float32, -s, s); kidx += 1
        w_hh = jax.random.uniform(keys[kidx], (4 * HIDDEN, HIDDEN), jnp.float32, -s, s); kidx += 1
        b_ih = jax.random.uniform(keys[kidx], (4 * HIDDEN,), jnp.float32, -s, s); kidx += 1
        b_hh = jax.random.uniform(keys[kidx], (4 * HIDDEN,), jnp.float32, -s, s); kidx += 1
        lstm.append((w_ih, w_hh, b_ih + b_hh))   # PyTorch adds both biases
    params["lstm"] = lstm

    params["fc_w1"] = 0.1 * jax.random.normal(keys[kidx], (FC_MID, HIDDEN), jnp.float32); kidx += 1
    params["fc_b1"] = 0.1 * jax.random.normal(keys[kidx], (FC_MID,), jnp.float32); kidx += 1
    params["bn_gamma"] = jnp.ones((FC_MID,), jnp.float32)
    params["bn_beta"]  = jnp.zeros((FC_MID,), jnp.float32)
    params["bn_mean"]  = jnp.zeros((FC_MID,), jnp.float32)
    params["bn_var"]   = jnp.ones((FC_MID,), jnp.float32)
    params["fc_w2"] = 0.1 * jax.random.normal(keys[kidx], (NUM_CLS, FC_MID), jnp.float32); kidx += 1
    params["fc_b2"] = 0.1 * jax.random.normal(keys[kidx], (NUM_CLS,), jnp.float32); kidx += 1
    return params


if __name__ == "__main__":
    key = jax.random.PRNGKey(0)
    k_x, k_p = jax.random.split(key)
    x = jax.random.normal(k_x, (BATCH, FRAMES, C_IN, IMG, IMG), jnp.float32)
    params = init_params(k_p)

    out = cnn_lstm_forward(x, params)
    out = jax.block_until_ready(out)
    assert out.shape == (BATCH, NUM_CLS) and out.dtype == jnp.float32
    print("KERNEL_OK")
</pallas_src>

<mosaic_0001>
module attributes {stable_mosaic.version = 11 : i64} {
  func.func @conv_gap_proj_kernel(%arg0: memref<16x256x36xf32, #tpu.memory_space<vmem>>, %arg1: memref<36x64xf32, #tpu.memory_space<vmem>>, %arg2: memref<1x64xf32, #tpu.memory_space<vmem>>, %arg3: memref<64x128xf32, #tpu.memory_space<vmem>>, %arg4: memref<16x128xf32, #tpu.memory_space<vmem>>) attributes {dimension_semantics = [], scalar_prefetch = 0 : i64, scratch_operands = 0 : i64, tpu.core_type = #tpu.core_type<tc>} {
    %c0 = arith.constant 0 : index
    %c0_0 = arith.constant 0 : index
    %c0_1 = arith.constant 0 : index
    %0 = vector.load %arg0[%c0, %c0_0, %c0_1] : memref<16x256x36xf32, #tpu.memory_space<vmem>>, vector<16x256x36xf32>
    %1 = vector.shape_cast %0 : vector<16x256x36xf32> to vector<4096x36xf32>
    %c0_2 = arith.constant 0 : index
    %c0_3 = arith.constant 0 : index
    %2 = vector.load %arg1[%c0_2, %c0_3] : memref<36x64xf32, #tpu.memory_space<vmem>>, vector<36x64xf32>
    %cst = arith.constant dense<0.000000e+00> : vector<4096x64xf32>
    %3 = tpu.matmul %1, %2, %cst {dimension_numbers = #tpu.dot_dimension_numbers<[1], [0], [0], [1], [0, 0, 1, 1], [], []>} : vector<4096x36xf32>, vector<36x64xf32>, vector<4096x64xf32> -> vector<4096x64xf32>
    %c0_4 = arith.constant 0 : index
    %c0_5 = arith.constant 0 : index
    %4 = vector.load %arg2[%c0_4, %c0_5] : memref<1x64xf32, #tpu.memory_space<vmem>>, vector<1x64xf32>
    %5 = vector.broadcast %4 : vector<1x64xf32> to vector<4096x64xf32>
    %6 = arith.addf %3, %5 : vector<4096x64xf32>
    %cst_6 = arith.constant 0.000000e+00 : f32
    %7 = vector.broadcast %cst_6 : f32 to vector<4096x64xf32>
    %8 = arith.maximumf %6, %7 : vector<4096x64xf32>
    %9 = vector.shape_cast %8 : vector<4096x64xf32> to vector<16x256x64xf32>
    %cst_7 = arith.constant dense<0.000000e+00> : vector<16x64xf32>
    %10 = vector.multi_reduction <add>, %9, %cst_7 [1] : vector<16x256x64xf32> to vector<16x64xf32>
    %cst_8 = arith.constant 2.560000e+02 : f32
    %11 = vector.broadcast %cst_8 : f32 to vector<16x64xf32>
    %12 = arith.divf %10, %11 : vector<16x64xf32>
    %c0_9 = arith.constant 0 : index
    %c0_10 = arith.constant 0 : index
    %13 = vector.load %arg3[%c0_9, %c0_10] : memref<64x128xf32, #tpu.memory_space<vmem>>, vector<64x128xf32>
    %cst_11 = arith.constant dense<0.000000e+00> : vector<16x128xf32>
    %14 = tpu.matmul %12, %13, %cst_11 {dimension_numbers = #tpu.dot_dimension_numbers<[1], [0], [0], [1], [0, 0, 1, 1], [], []>} : vector<16x64xf32>, vector<64x128xf32>, vector<16x128xf32> -> vector<16x128xf32>
    %c0_12 = arith.constant 0 : index
    %c0_13 = arith.constant 0 : index
    %15 = vector.load %arg4[%c0_12, %c0_13] : memref<16x128xf32, #tpu.memory_space<vmem>>, vector<16x128xf32>
    tpu.vector_store %arg4[%c0_12, %c0_13], %14 {strides = array<i32>} : memref<16x128xf32, #tpu.memory_space<vmem>>, vector<16x128xf32>,
    return
  }
}

</mosaic_0001>

<llo_original>
// kernel: tpu_custom_call.1
$region0: #{tpu_custom_call.1}
  #allocation0 [shape = 'u32[]', space=smem, size = 0x4, offset = 0x4, fixed_abs, tag = 'smem constant byte address 0x4 - core index']
  #allocation1 [shape = 'u32[144,128]{1,0:T(1,128)}', space=vmem, size = 0x12000, scoped, tag = 'internal scratch']
  %s0 = inlined_call_operand.vmem [shape: f32[16,256,36], index: 0, kind: input, shape index: {}]
  %s1 = inlined_call_operand.vmem [shape: f32[36,64], index: 1, kind: input, shape index: {}]
  %s2 = inlined_call_operand.vmem [shape: f32[1,64], index: 2, kind: input, shape index: {}]
  %s3 = inlined_call_operand.vmem [shape: f32[64,128], index: 3, kind: input, shape index: {}]
  %s4 = inlined_call_operand.hbm [shape: f32[16,128], index: 4, kind: output, shape index: {}]
  %s5 = sld [smem:[#allocation0]]
  $region26: #{tpu_custom_call.1} parent=0
    _
  %s7 = ssub.s32 1, %s5
  %s8 = scalar_select 0, %s7, %s5
  $region1: #{tpu_custom_call.1} parent=0
    #allocation2 [shape = 'u8[8192]{0}', space=vmem, size = 0x2000, scoped, tag = 'output window, operand 0, single buffered']
    #allocation3 [shape = 's32[1]{0}', space=sflag, size = 0x4, scoped, tag = 'scoped memory for tpu_custom_call.1']
    %9 = vsyncpa [#allocation3], 0
    // Predicated region
    $region2: #{tpu_custom_call.1} parent=1 // pred_check
      _
    $region3: #{tpu_custom_call.1} parent=1 // pred_check_branch
      %11 = sbr.rel (0) target = $region5
    $region4: #{tpu_custom_call.1} parent=1 // pred_region
      _
    $region5: #{tpu_custom_call.1} parent=1 // pred_fallthru
      _
    // Predicated region
    $region6: #{tpu_custom_call.1} parent=1 // pred_check
      _
    $region7: #{tpu_custom_call.1} parent=1 // pred_check_branch
      %13 = sbr.rel (0) target = $region9
    $region8: #{tpu_custom_call.1} parent=1 // pred_region
      _
    $region9: #{tpu_custom_call.1} parent=1 // pred_fallthru
      _
    // Predicated region
    $region10: #{tpu_custom_call.1} parent=1 // pred_check
      _
    $region11: #{tpu_custom_call.1} parent=1 // pred_check_branch
      %15 = sbr.rel (0) target = $region13
    $region12: #{tpu_custom_call.1} parent=1 // pred_region
      _
    $region13: #{tpu_custom_call.1} parent=1 // pred_fallthru
      _
    // Predicated region
    $region14: #{tpu_custom_call.1} parent=1 // pred_check
      _
    $region15: #{tpu_custom_call.1} parent=1 // pred_check_branch
      %17 = sbr.rel (0) target = $region17
    $region16: #{tpu_custom_call.1} parent=1 // pred_region
      _
    $region17: #{tpu_custom_call.1} parent=1 // pred_fallthru
      _
    %v18 = vld [vmem:[%s0] sm:$0xff]
    %v19 = vld [vmem:[%s0 + $0x8] sm:$0xff]
    %v20 = vld [vmem:[%s0 + $0x10] sm:$0xff]
    %v21 = vld [vmem:[%s0 + $0x18] sm:$0xff]
    %v22 = vld [vmem:[%s0 + $0x20] sm:$0xff]
    %v23 = vld [vmem:[%s0 + $0x28] sm:$0xff]
    %v24 = vld [vmem:[%s0 + $0x30] sm:$0xff]
    %v25 = vld [vmem:[%s0 + $0x38] sm:$0xff]
    %v26 = vld [vmem:[%s0 + $0x40] sm:$0xff]
    %v27 = vld [vmem:[%s0 + $0x48] sm:$0xff]
    %v28 = vld [vmem:[%s0 + $0x50] sm:$0xff]
    %v29 = vld [vmem:[%s0 + $0x58] sm:$0xff]
    %v30 = vld [vmem:[%s0 + $0x60] sm:$0xff]
    %v31 = vld [vmem:[%s0 + $0x68] sm:$0xff]
    %v32 = vld [vmem:[%s0 + $0x70] sm:$0xff]
    %v33 = vld [vmem:[%s0 + $0x78] sm:$0xff]
    %v34 = vld [vmem:[%s0 + $0x80] sm:$0xff]
    %v35 = vld [vmem:[%s0 + $0x88] sm:$0xff]
    %v36 = vld [vmem:[%s0 + $0x90] sm:$0xff]
    %v37 = vld [vmem:[%s0 + $0x98] sm:$0xff]
    %v38 = vld [vmem:[%s0 + $0xa0] sm:$0xff]
    %v39 = vld [vmem:[%s0 + $0xa8] sm:$0xff]
    %v40 = vld [vmem:[%s0 + $0xb0] sm:$0xff]
    %v41 = vld [vmem:[%s0 + $0xb8] sm:$0xff]
    %v42 = vld [vmem:[%s0 + $0xc0] sm:$0xff]
    %v43 = vld [vmem:[%s0 + $0xc8] sm:$0xff]
    %v44 = vld [vmem:[%s0 + $0xd0] sm:$0xff]
    %v45 = vld [vmem:[%s0 + $0xd8] sm:$0xff]
    %v46 = vld [vmem:[%s0 + $0xe0] sm:$0xff]
    %v47 = vld [vmem:[%s0 + $0xe8] sm:$0xff]
    %v48 = vld [vmem:[%s0 + $0xf0] sm:$0xff]
    %v49 = vld [vmem:[%s0 + $0xf8] sm:$0xff]
    %v50 = vld [vmem:[%s0 + $0x100] sm:$0xff]
    %v51 = vld [vmem:[%s0 + $0x108] sm:$0xff]
    %v52 = vld [vmem:[%s0 + $0x110] sm:$0xff]
    %v53 = vld [vmem:[%s0 + $0x118] sm:$0xff]
    %v54 = vld [vmem:[%s0 + $0x120] sm:$0xff]
    %v55 = vld [vmem:[%s0 + $0x128] sm:$0xff]
    %v56 = vld [vmem:[%s0 + $0x130] sm:$0xff]
    %v57 = vld [vmem:[%s0 + $0x138] sm:$0xff]
    %v58 = vld [vmem:[%s0 + $0x140] sm:$0xff]
    %v59 = vld [vmem:[%s0 + $0x148] sm:$0xff]
    %v60 = vld [vmem:[%s0 + $0x150] sm:$0xff]
    %v61 = vld [vmem:[%s0 + $0x158] sm:$0xff]
    %v62 = vld [vmem:[%s0 + $0x160] sm:$0xff]
    %v63 = vld [vmem:[%s0 + $0x168] sm:$0xff]
    %v64 = vld [vmem:[%s0 + $0x170] sm:$0xff]
    %v65 = vld [vmem:[%s0 + $0x178] sm:$0xff]
    %v66 = vld [vmem:[%s0 + $0x180] sm:$0xff]
    %v67 = vld [vmem:[%s0 + $0x188] sm:$0xff]
    %v68 = vld [vmem:[%s0 + $0x190] sm:$0xff]
    %v69 = vld [vmem:[%s0 + $0x198] sm:$0xff]
    %v70 = vld [vmem:[%s0 + $0x1a0] sm:$0xff]
    %v71 = vld [vmem:[%s0 + $0x1a8] sm:$0xff]
    %v72 = vld [vmem:[%s0 + $0x1b0] sm:$0xff]
    %v73 = vld [vmem:[%s0 + $0x1b8] sm:$0xff]
    %v74 = vld [vmem:[%s0 + $0x1c0] sm:$0xff]
    %v75 = vld [vmem:[%s0 + $0x1c8] sm:$0xff]
    %v76 = vld [vmem:[%s0 + $0x1d0] sm:$0xff]
    %v77 = vld [vmem:[%s0 + $0x1d8] sm:$0xff]
    %v78 = vld [vmem:[%s0 + $0x1e0] sm:$0xff]
    %v79 = vld [vmem:[%s0 + $0x1e8] sm:$0xff]
    %v80 = vld [vmem:[%s0 + $0x1f0] sm:$0xff]
    %v81 = vld [vmem:[%s0 + $0x1f8] sm:$0xff]
    %v82 = vld [vmem:[%s0 + $0x200] sm:$0xff]
    %v83 = vld [vmem:[%s0 + $0x208] sm:$0xff]
    %v84 = vld [vmem:[%s0 + $0x210] sm:$0xff]
    %v85 = vld [vmem:[%s0 + $0x218] sm:$0xff]
    %v86 = vld [vmem:[%s0 + $0x220] sm:$0xff]
    %v87 = vld [vmem:[%s0 + $0x228] sm:$0xff]
    %v88 = vld [vmem:[%s0 + $0x230] sm:$0xff]
    %v89 = vld [vmem:[%s0 + $0x238] sm:$0xff]
    %v90 = vld [vmem:[%s0 + $0x240] sm:$0xff]
    %v91 = vld [vmem:[%s0 + $0x248] sm:$0xff]
    %v92 = vld [vmem:[%s0 + $0x250] sm:$0xff]
    %v93 = vld [vmem:[%s0 + $0x258] sm:$0xff]
    %v94 = vld [vmem:[%s0 + $0x260] sm:$0xff]
    %v95 = vld [vmem:[%s0 + $0x268] sm:$0xff]
    %v96 = vld [vmem:[%s0 + $0x270] sm:$0xff]
    %v97 = vld [vmem:[%s0 + $0x278] sm:$0xff]
    %v98 = vld [vmem:[%s0 + $0x280] sm:$0xff]
    %v99 = vld [vmem:[%s0 + $0x288] sm:$0xff]
    %v100 = vld [vmem:[%s0 + $0x290] sm:$0xff]
    %v101 = vld [vmem:[%s0 + $0x298] sm:$0xff]
    %v102 = vld [vmem:[%s0 + $0x2a0] sm:$0xff]
    %v103 = vld [vmem:[%s0 + $0x2a8] sm:$0xff]
    %v104 = vld [vmem:[%s0 + $0x2b0] sm:$0xff]
    %v105 = vld [vmem:[%s0 + $0x2b8] sm:$0xff]
    %v106 = vld [vmem:[%s0 + $0x2c0] sm:$0xff]
    %v107 = vld [vmem:[%s0 + $0x2c8] sm:$0xff]
    %v108 = vld [vmem:[%s0 + $0x2d0] sm:$0xff]
    %v109 = vld [vmem:[%s0 + $0x2d8] sm:$0xff]
    %v110 = vld [vmem:[%s0 + $0x2e0] sm:$0xff]
    %v111 = vld [vmem:[%s0 + $0x2e8] sm:$0xff]
    %v112 = vld [vmem:[%s0 + $0x2f0] sm:$0xff]
    %v113 = vld [vmem:[%s0 + $0x2f8] sm:$0xff]
    %v114 = vld [vmem:[%s0 + $0x300] sm:$0xff]
    %v115 = vld [vmem:[%s0 + $0x308] sm:$0xff]
    %v116 = vld [vmem:[%s0 + $0x310] sm:$0xff]
    %v117 = vld [vmem:[%s0 + $0x318] sm:$0xff]
    %v118 = vld [vmem:[%s0 + $0x320] sm:$0xff]
    %v119 = vld [vmem:[%s0 + $0x328] sm:$0xff]
    %v120 = vld [vmem:[%s0 + $0x330] sm:$0xff]
    %v121 = vld [vmem:[%s0 + $0x338] sm:$0xff]
    %v122 = vld [vmem:[%s0 + $0x340] sm:$0xff]
    %v123 = vld [vmem:[%s0 + $0x348] sm:$0xff]
    %v124 = vld [vmem:[%s0 + $0x350] sm:$0xff]
    %v125 = vld [vmem:[%s0 + $0x358] sm:$0xff]
    %v126 = vld [vmem:[%s0 + $0x360] sm:$0xff]
    %v127 = vld [vmem:[%s0 + $0x368] sm:$0xff]
    %v128 = vld [vmem:[%s0 + $0x370] sm:$0xff]
    %v129 = vld [vmem:[%s0 + $0x378] sm:$0xff]
    %v130 = vld [vmem:[%s0 + $0x380] sm:$0xff]
    %v131 = vld [vmem:[%s0 + $0x388] sm:$0xff]
    %v132 = vld [vmem:[%s0 + $0x390] sm:$0xff]
    %v133 = vld [vmem:[%s0 + $0x398] sm:$0xff]
    %v134 = vld [vmem:[%s0 + $0x3a0] sm:$0xff]
    %v135 = vld [vmem:[%s0 + $0x3a8] sm:$0xff]
    %v136 = vld [vmem:[%s0 + $0x3b0] sm:$0xff]
    %v137 = vld [vmem:[%s0 + $0x3b8] sm:$0xff]
    %v138 = vld [vmem:[%s0 + $0x3c0] sm:$0xff]
    %v139 = vld [vmem:[%s0 + $0x3c8] sm:$0xff]
    %v140 = vld [vmem:[%s0 + $0x3d0] sm:$0xff]
    %v141 = vld [vmem:[%s0 + $0x3d8] sm:$0xff]
    %v142 = vld [vmem:[%s0 + $0x3e0] sm:$0xff]
    %v143 = vld [vmem:[%s0 + $0x3e8] sm:$0xff]
    %v144 = vld [vmem:[%s0 + $0x3f0] sm:$0xff]
    %v145 = vld [vmem:[%s0 + $0x3f8] sm:$0xff]
    %v146 = vld [vmem:[%s0 + $0x400] sm:$0xff]
    %v147 = vld [vmem:[%s0 + $0x408] sm:$0xff]
    %v148 = vld [vmem:[%s0 + $0x410] sm:$0xff]
    %v149 = vld [vmem:[%s0 + $0x418] sm:$0xff]
    %v150 = vld [vmem:[%s0 + $0x420] sm:$0xff]
    %v151 = vld [vmem:[%s0 + $0x428] sm:$0xff]
    %v152 = vld [vmem:[%s0 + $0x430] sm:$0xff]
    %v153 = vld [vmem:[%s0 + $0x438] sm:$0xff]
    %v154 = vld [vmem:[%s0 + $0x440] sm:$0xff]
    %v155 = vld [vmem:[%s0 + $0x448] sm:$0xff]
    %v156 = vld [vmem:[%s0 + $0x450] sm:$0xff]
    %v157 = vld [vmem:[%s0 + $0x458] sm:$0xff]
    %v158 = vld [vmem:[%s0 + $0x460] sm:$0xff]
    %v159 = vld [vmem:[%s0 + $0x468] sm:$0xff]
    %v160 = vld [vmem:[%s0 + $0x470] sm:$0xff]
    %v161 = vld [vmem:[%s0 + $0x478] sm:$0xff]
    %v162 = vld [vmem:[%s0 + $0x480] sm:$0xff]
    %v163 = vld [vmem:[%s0 + $0x488] sm:$0xff]
    %v164 = vld [vmem:[%s0 + $0x490] sm:$0xff]
    %v165 = vld [vmem:[%s0 + $0x498] sm:$0xff]
    %v166 = vld [vmem:[%s0 + $0x4a0] sm:$0xff]
    %v167 = vld [vmem:[%s0 + $0x4a8] sm:$0xff]
    %v168 = vld [vmem:[%s0 + $0x4b0] sm:$0xff]
    %v169 = vld [vmem:[%s0 + $0x4b8] sm:$0xff]
    %v170 = vld [vmem:[%s0 + $0x4c0] sm:$0xff]
    %v171 = vld [vmem:[%s0 + $0x4c8] sm:$0xff]
    %v172 = vld [vmem:[%s0 + $0x4d0] sm:$0xff]
    %v173 = vld [vmem:[%s0 + $0x4d8] sm:$0xff]
    %v174 = vld [vmem:[%s0 + $0x4e0] sm:$0xff]
    %v175 = vld [vmem:[%s0 + $0x4e8] sm:$0xff]
    %v176 = vld [vmem:[%s0 + $0x4f0] sm:$0xff]
    %v177 = vld [vmem:[%s0 + $0x4f8] sm:$0xff]
    %v178 = vld [vmem:[%s0 + $0x500] sm:$0xff]
    %v179 = vld [vmem:[%s0 + $0x508] sm:$0xff]
    %v180 = vld [vmem:[%s0 + $0x510] sm:$0xff]
    %v181 = vld [vmem:[%s0 + $0x518] sm:$0xff]
    %v182 = vld [vmem:[%s0 + $0x520] sm:$0xff]
    %v183 = vld [vmem:[%s0 + $0x528] sm:$0xff]
    %v184 = vld [vmem:[%s0 + $0x530] sm:$0xff]
    %v185 = vld [vmem:[%s0 + $0x538] sm:$0xff]
    %v186 = vld [vmem:[%s0 + $0x540] sm:$0xff]
    %v187 = vld [vmem:[%s0 + $0x548] sm:$0xff]
    %v188 = vld [vmem:[%s0 + $0x550] sm:$0xff]
    %v189 = vld [vmem:[%s0 + $0x558] sm:$0xff]
    %v190 = vld [vmem:[%s0 + $0x560] sm:$0xff]
    %v191 = vld [vmem:[%s0 + $0x568] sm:$0xff]
    %v192 = vld [vmem:[%s0 + $0x570] sm:$0xff]
    %v193 = vld [vmem:[%s0 + $0x578] sm:$0xff]
    %v194 = vld [vmem:[%s0 + $0x580] sm:$0xff]
    %v195 = vld [vmem:[%s0 + $0x588] sm:$0xff]
    %v196 = vld [vmem:[%s0 + $0x590] sm:$0xff]
    %v197 = vld [vmem:[%s0 + $0x598] sm:$0xff]
    %v198 = vld [vmem:[%s0 + $0x5a0] sm:$0xff]
    %v199 = vld [vmem:[%s0 + $0x5a8] sm:$0xff]
    %v200 = vld [vmem:[%s0 + $0x5b0] sm:$0xff]
    %v201 = vld [vmem:[%s0 + $0x5b8] sm:$0xff]
    %v202 = vld [vmem:[%s0 + $0x5c0] sm:$0xff]
    %v203 = vld [vmem:[%s0 + $0x5c8] sm:$0xff]
    %v204 = vld [vmem:[%s0 + $0x5d0] sm:$0xff]
    %v205 = vld [vmem:[%s0 + $0x5d8] sm:$0xff]
    %v206 = vld [vmem:[%s0 + $0x5e0] sm:$0xff]
    %v207 = vld [vmem:[%s0 + $0x5e8] sm:$0xff]
    %v208 = vld [vmem:[%s0 + $0x5f0] sm:$0xff]
    %v209 = vld [vmem:[%s0 + $0x5f8] sm:$0xff]
    %v210 = vld [vmem:[%s0 + $0x600] sm:$0xff]
    %v211 = vld [vmem:[%s0 + $0x608] sm:$0xff]
    %v212 = vld [vmem:[%s0 + $0x610] sm:$0xff]
    %v213 = vld [vmem:[%s0 + $0x618] sm:$0xff]
    %v214 = vld [vmem:[%s0 + $0x620] sm:$0xff]
    %v215 = vld [vmem:[%s0 + $0x628] sm:$0xff]
    %v216 = vld [vmem:[%s0 + $0x630] sm:$0xff]
    %v217 = vld [vmem:[%s0 + $0x638] sm:$0xff]
    %v218 = vld [vmem:[%s0 + $0x640] sm:$0xff]
    %v219 = vld [vmem:[%s0 + $0x648] sm:$0xff]
    %v220 = vld [vmem:[%s0 + $0x650] sm:$0xff]
    %v221 = vld [vmem:[%s0 + $0x658] sm:$0xff]
    %v222 = vld [vmem:[%s0 + $0x660] sm:$0xff]
    %v223 = vld [vmem:[%s0 + $0x668] sm:$0xff]
    %v224 = vld [vmem:[%s0 + $0x670] sm:$0xff]
    %v225 = vld [vmem:[%s0 + $0x678] sm:$0xff]
    %v226 = vld [vmem:[%s0 + $0x680] sm:$0xff]
    %v227 = vld [vmem:[%s0 + $0x688] sm:$0xff]
    %v228 = vld [vmem:[%s0 + $0x690] sm:$0xff]
    %v229 = vld [vmem:[%s0 + $0x698] sm:$0xff]
    %v230 = vld [vmem:[%s0 + $0x6a0] sm:$0xff]
    %v231 = vld [vmem:[%s0 + $0x6a8] sm:$0xff]
    %v232 = vld [vmem:[%s0 + $0x6b0] sm:$0xff]
    %v233 = vld [vmem:[%s0 + $0x6b8] sm:$0xff]
    %v234 = vld [vmem:[%s0 + $0x6c0] sm:$0xff]
    %v235 = vld [vmem:[%s0 + $0x6c8] sm:$0xff]
    %v236 = vld [vmem:[%s0 + $0x6d0] sm:$0xff]
    %v237 = vld [vmem:[%s0 + $0x6d8] sm:$0xff]
    %v238 = vld [vmem:[%s0 + $0x6e0] sm:$0xff]
    %v239 = vld [vmem:[%s0 + $0x6e8] sm:$0xff]
    %v240 = vld [vmem:[%s0 + $0x6f0] sm:$0xff]
    %v241 = vld [vmem:[%s0 + $0x6f8] sm:$0xff]
    %v242 = vld [vmem:[%s0 + $0x700] sm:$0xff]
    %v243 = vld [vmem:[%s0 + $0x708] sm:$0xff]
    %v244 = vld [vmem:[%s0 + $0x710] sm:$0xff]
    %v245 = vld [vmem:[%s0 + $0x718] sm:$0xff]
    %v246 = vld [vmem:[%s0 + $0x720] sm:$0xff]
    %v247 = vld [vmem:[%s0 + $0x728] sm:$0xff]
    %v248 = vld [vmem:[%s0 + $0x730] sm:$0xff]
    %v249 = vld [vmem:[%s0 + $0x738] sm:$0xff]
    %v250 = vld [vmem:[%s0 + $0x740] sm:$0xff]
    %v251 = vld [vmem:[%s0 + $0x748] sm:$0xff]
    %v252 = vld [vmem:[%s0 + $0x750] sm:$0xff]
    %v253 = vld [vmem:[%s0 + $0x758] sm:$0xff]
    %v254 = vld [vmem:[%s0 + $0x760] sm:$0xff]
    %v255 = vld [vmem:[%s0 + $0x768] sm:$0xff]
    %v256 = vld [vmem:[%s0 + $0x770] sm:$0xff]
    %v257 = vld [vmem:[%s0 + $0x778] sm:$0xff]
    %v258 = vld [vmem:[%s0 + $0x780] sm:$0xff]
    %v259 = vld [vmem:[%s0 + $0x788] sm:$0xff]
    %v260 = vld [vmem:[%s0 + $0x790] sm:$0xff]
    %v261 = vld [vmem:[%s0 + $0x798] sm:$0xff]
    %v262 = vld [vmem:[%s0 + $0x7a0] sm:$0xff]
    %v263 = vld [vmem:[%s0 + $0x7a8] sm:$0xff]
    %v264 = vld [vmem:[%s0 + $0x7b0] sm:$0xff]
    %v265 = vld [vmem:[%s0 + $0x7b8] sm:$0xff]
    %v266 = vld [vmem:[%s0 + $0x7c0] sm:$0xff]
    %v267 = vld [vmem:[%s0 + $0x7c8] sm:$0xff]
    %v268 = vld [vmem:[%s0 + $0x7d0] sm:$0xff]
    %v269 = vld [vmem:[%s0 + $0x7d8] sm:$0xff]
    %v270 = vld [vmem:[%s0 + $0x7e0] sm:$0xff]
    %v271 = vld [vmem:[%s0 + $0x7e8] sm:$0xff]
    %v272 = vld [vmem:[%s0 + $0x7f0] sm:$0xff]
    %v273 = vld [vmem:[%s0 + $0x7f8] sm:$0xff]
    %v274 = vld [vmem:[%s0 + $0x800] sm:$0xff]
    %v275 = vld [vmem:[%s0 + $0x808] sm:$0xff]
    %v276 = vld [vmem:[%s0 + $0x810] sm:$0xff]
    %v277 = vld [vmem:[%s0 + $0x818] sm:$0xff]
    %v278 = vld [vmem:[%s0 + $0x820] sm:$0xff]
    %v279 = vld [vmem:[%s0 + $0x828] sm:$0xff]
    %v280 = vld [vmem:[%s0 + $0x830] sm:$0xff]
    %v281 = vld [vmem:[%s0 + $0x838] sm:$0xff]
    %v282 = vld [vmem:[%s0 + $0x840] sm:$0xff]
    %v283 = vld [vmem:[%s0 + $0x848] sm:$0xff]
    %v284 = vld [vmem:[%s0 + $0x850] sm:$0xff]
    %v285 = vld [vmem:[%s0 + $0x858] sm:$0xff]
    %v286 = vld [vmem:[%s0 + $0x860] sm:$0xff]
    %v287 = vld [vmem:[%s0 + $0x868] sm:$0xff]
    %v288 = vld [vmem:[%s0 + $0x870] sm:$0xff]
    %v289 = vld [vmem:[%s0 + $0x878] sm:$0xff]
    %v290 = vld [vmem:[%s0 + $0x880] sm:$0xff]
    %v291 = vld [vmem:[%s0 + $0x888] sm:$0xff]
    %v292 = vld [vmem:[%s0 + $0x890] sm:$0xff]
    %v293 = vld [vmem:[%s0 + $0x898] sm:$0xff]
    %v294 = vld [vmem:[%s0 + $0x8a0] sm:$0xff]
    %v295 = vld [vmem:[%s0 + $0x8a8] sm:$0xff]
    %v296 = vld [vmem:[%s0 + $0x8b0] sm:$0xff]
    %v297 = vld [vmem:[%s0 + $0x8b8] sm:$0xff]
    %v298 = vld [vmem:[%s0 + $0x8c0] sm:$0xff]
    %v299 = vld [vmem:[%s0 + $0x8c8] sm:$0xff]
    %v300 = vld [vmem:[%s0 + $0x8d0] sm:$0xff]
    %v301 = vld [vmem:[%s0 + $0x8d8] sm:$0xff]
    %v302 = vld [vmem:[%s0 + $0x8e0] sm:$0xff]
    %v303 = vld [vmem:[%s0 + $0x8e8] sm:$0xff]
    %v304 = vld [vmem:[%s0 + $0x8f0] sm:$0xff]
    %v305 = vld [vmem:[%s0 + $0x8f8] sm:$0xff]
    %v306 = vld [vmem:[%s0 + $0x900] sm:$0xff]
    %v307 = vld [vmem:[%s0 + $0x908] sm:$0xff]
    %v308 = vld [vmem:[%s0 + $0x910] sm:$0xff]
    %v309 = vld [vmem:[%s0 + $0x918] sm:$0xff]
    %v310 = vld [vmem:[%s0 + $0x920] sm:$0xff]
    %v311 = vld [vmem:[%s0 + $0x928] sm:$0xff]
    %v312 = vld [vmem:[%s0 + $0x930] sm:$0xff]
    %v313 = vld [vmem:[%s0 + $0x938] sm:$0xff]
    %v314 = vld [vmem:[%s0 + $0x940] sm:$0xff]
    %v315 = vld [vmem:[%s0 + $0x948] sm:$0xff]
    %v316 = vld [vmem:[%s0 + $0x950] sm:$0xff]
    %v317 = vld [vmem:[%s0 + $0x958] sm:$0xff]
    %v318 = vld [vmem:[%s0 + $0x960] sm:$0xff]
    %v319 = vld [vmem:[%s0 + $0x968] sm:$0xff]
    %v320 = vld [vmem:[%s0 + $0x970] sm:$0xff]
    %v321 = vld [vmem:[%s0 + $0x978] sm:$0xff]
    %v322 = vld [vmem:[%s0 + $0x980] sm:$0xff]
    %v323 = vld [vmem:[%s0 + $0x988] sm:$0xff]
    %v324 = vld [vmem:[%s0 + $0x990] sm:$0xff]
    %v325 = vld [vmem:[%s0 + $0x998] sm:$0xff]
    %v326 = vld [vmem:[%s0 + $0x9a0] sm:$0xff]
    %v327 = vld [vmem:[%s0 + $0x9a8] sm:$0xff]
    %v328 = vld [vmem:[%s0 + $0x9b0] sm:$0xff]
    %v329 = vld [vmem:[%s0 + $0x9b8] sm:$0xff]
    %v330 = vld [vmem:[%s0 + $0x9c0] sm:$0xff]
    %v331 = vld [vmem:[%s0 + $0x9c8] sm:$0xff]
    %v332 = vld [vmem:[%s0 + $0x9d0] sm:$0xff]
    %v333 = vld [vmem:[%s0 + $0x9d8] sm:$0xff]
    %v334 = vld [vmem:[%s0 + $0x9e0] sm:$0xff]
    %v335 = vld [vmem:[%s0 + $0x9e8] sm:$0xff]
    %v336 = vld [vmem:[%s0 + $0x9f0] sm:$0xff]
    %v337 = vld [vmem:[%s0 + $0x9f8] sm:$0xff]
    %v338 = vld [vmem:[%s0 + $0xa00] sm:$0xff]
    %v339 = vld [vmem:[%s0 + $0xa08] sm:$0xff]
    %v340 = vld [vmem:[%s0 + $0xa10] sm:$0xff]
    %v341 = vld [vmem:[%s0 + $0xa18] sm:$0xff]
    %v342 = vld [vmem:[%s0 + $0xa20] sm:$0xff]
    %v343 = vld [vmem:[%s0 + $0xa28] sm:$0xff]
    %v344 = vld [vmem:[%s0 + $0xa30] sm:$0xff]
    %v345 = vld [vmem:[%s0 + $0xa38] sm:$0xff]
    %v346 = vld [vmem:[%s0 + $0xa40] sm:$0xff]
    %v347 = vld [vmem:[%s0 + $0xa48] sm:$0xff]
    %v348 = vld [vmem:[%s0 + $0xa50] sm:$0xff]
    %v349 = vld [vmem:[%s0 + $0xa58] sm:$0xff]
    %v350 = vld [vmem:[%s0 + $0xa60] sm:$0xff]
    %v351 = vld [vmem:[%s0 + $0xa68] sm:$0xff]
    %v352 = vld [vmem:[%s0 + $0xa70] sm:$0xff]
    %v353 = vld [vmem:[%s0 + $0xa78] sm:$0xff]
    %v354 = vld [vmem:[%s0 + $0xa80] sm:$0xff]
    %v355 = vld [vmem:[%s0 + $0xa88] sm:$0xff]
    %v356 = vld [vmem:[%s0 + $0xa90] sm:$0xff]
    %v357 = vld [vmem:[%s0 + $0xa98] sm:$0xff]
    %v358 = vld [vmem:[%s0 + $0xaa0] sm:$0xff]
    %v359 = vld [vmem:[%s0 + $0xaa8] sm:$0xff]
    %v360 = vld [vmem:[%s0 + $0xab0] sm:$0xff]
    %v361 = vld [vmem:[%s0 + $0xab8] sm:$0xff]
    %v362 = vld [vmem:[%s0 + $0xac0] sm:$0xff]
    %v363 = vld [vmem:[%s0 + $0xac8] sm:$0xff]
    %v364 = vld [vmem:[%s0 + $0xad0] sm:$0xff]
    %v365 = vld [vmem:[%s0 + $0xad8] sm:$0xff]
    %v366 = vld [vmem:[%s0 + $0xae0] sm:$0xff]
    %v367 = vld [vmem:[%s0 + $0xae8] sm:$0xff]
    %v368 = vld [vmem:[%s0 + $0xaf0] sm:$0xff]
    %v369 = vld [vmem:[%s0 + $0xaf8] sm:$0xff]
    %v370 = vld [vmem:[%s0 + $0xb00] sm:$0xff]
    %v371 = vld [vmem:[%s0 + $0xb08] sm:$0xff]
    %v372 = vld [vmem:[%s0 + $0xb10] sm:$0xff]
    %v373 = vld [vmem:[%s0 + $0xb18] sm:$0xff]
    %v374 = vld [vmem:[%s0 + $0xb20] sm:$0xff]
    %v375 = vld [vmem:[%s0 + $0xb28] sm:$0xff]
    %v376 = vld [vmem:[%s0 + $0xb30] sm:$0xff]
    %v377 = vld [vmem:[%s0 + $0xb38] sm:$0xff]
    %v378 = vld [vmem:[%s0 + $0xb40] sm:$0xff]
    %v379 = vld [vmem:[%s0 + $0xb48] sm:$0xff]
    %v380 = vld [vmem:[%s0 + $0xb50] sm:$0xff]
    %v381 = vld [vmem:[%s0 + $0xb58] sm:$0xff]
    %v382 = vld [vmem:[%s0 + $0xb60] sm:$0xff]
    %v383 = vld [vmem:[%s0 + $0xb68] sm:$0xff]
    %v384 = vld [vmem:[%s0 + $0xb70] sm:$0xff]
    %v385 = vld [vmem:[%s0 + $0xb78] sm:$0xff]
    %v386 = vld [vmem:[%s0 + $0xb80] sm:$0xff]
    %v387 = vld [vmem:[%s0 + $0xb88] sm:$0xff]
    %v388 = vld [vmem:[%s0 + $0xb90] sm:$0xff]
    %v389 = vld [vmem:[%s0 + $0xb98] sm:$0xff]
    %v390 = vld [vmem:[%s0 + $0xba0] sm:$0xff]
    %v391 = vld [vmem:[%s0 + $0xba8] sm:$0xff]
    %v392 = vld [vmem:[%s0 + $0xbb0] sm:$0xff]
    %v393 = vld [vmem:[%s0 + $0xbb8] sm:$0xff]
    %v394 = vld [vmem:[%s0 + $0xbc0] sm:$0xff]
    %v395 = vld [vmem:[%s0 + $0xbc8] sm:$0xff]
    %v396 = vld [vmem:[%s0 + $0xbd0] sm:$0xff]
    %v397 = vld [vmem:[%s0 + $0xbd8] sm:$0xff]
    %v398 = vld [vmem:[%s0 + $0xbe0] sm:$0xff]
    %v399 = vld [vmem:[%s0 + $0xbe8] sm:$0xff]
    %v400 = vld [vmem:[%s0 + $0xbf0] sm:$0xff]
    %v401 = vld [vmem:[%s0 + $0xbf8] sm:$0xff]
    %v402 = vld [vmem:[%s0 + $0xc00] sm:$0xff]
    %v403 = vld [vmem:[%s0 + $0xc08] sm:$0xff]
    %v404 = vld [vmem:[%s0 + $0xc10] sm:$0xff]
    %v405 = vld [vmem:[%s0 + $0xc18] sm:$0xff]
    %v406 = vld [vmem:[%s0 + $0xc20] sm:$0xff]
    %v407 = vld [vmem:[%s0 + $0xc28] sm:$0xff]
    %v408 = vld [vmem:[%s0 + $0xc30] sm:$0xff]
    %v409 = vld [vmem:[%s0 + $0xc38] sm:$0xff]
    %v410 = vld [vmem:[%s0 + $0xc40] sm:$0xff]
    %v411 = vld [vmem:[%s0 + $0xc48] sm:$0xff]
    %v412 = vld [vmem:[%s0 + $0xc50] sm:$0xff]
    %v413 = vld [vmem:[%s0 + $0xc58] sm:$0xff]
    %v414 = vld [vmem:[%s0 + $0xc60] sm:$0xff]
    %v415 = vld [vmem:[%s0 + $0xc68] sm:$0xff]
    %v416 = vld [vmem:[%s0 + $0xc70] sm:$0xff]
    %v417 = vld [vmem:[%s0 + $0xc78] sm:$0xff]
    %v418 = vld [vmem:[%s0 + $0xc80] sm:$0xff]
    %v419 = vld [vmem:[%s0 + $0xc88] sm:$0xff]
    %v420 = vld [vmem:[%s0 + $0xc90] sm:$0xff]
    %v421 = vld [vmem:[%s0 + $0xc98] sm:$0xff]
    %v422 = vld [vmem:[%s0 + $0xca0] sm:$0xff]
    %v423 = vld [vmem:[%s0 + $0xca8] sm:$0xff]
    %v424 = vld [vmem:[%s0 + $0xcb0] sm:$0xff]
    %v425 = vld [vmem:[%s0 + $0xcb8] sm:$0xff]
    %v426 = vld [vmem:[%s0 + $0xcc0] sm:$0xff]
    %v427 = vld [vmem:[%s0 + $0xcc8] sm:$0xff]
    %v428 = vld [vmem:[%s0 + $0xcd0] sm:$0xff]
    %v429 = vld [vmem:[%s0 + $0xcd8] sm:$0xff]
    %v430 = vld [vmem:[%s0 + $0xce0] sm:$0xff]
    %v431 = vld [vmem:[%s0 + $0xce8] sm:$0xff]
    %v432 = vld [vmem:[%s0 + $0xcf0] sm:$0xff]
    %v433 = vld [vmem:[%s0 + $0xcf8] sm:$0xff]
    %v434 = vld [vmem:[%s0 + $0xd00] sm:$0xff]
    %v435 = vld [vmem:[%s0 + $0xd08] sm:$0xff]
    %v436 = vld [vmem:[%s0 + $0xd10] sm:$0xff]
    %v437 = vld [vmem:[%s0 + $0xd18] sm:$0xff]
    %v438 = vld [vmem:[%s0 + $0xd20] sm:$0xff]
    %v439 = vld [vmem:[%s0 + $0xd28] sm:$0xff]
    %v440 = vld [vmem:[%s0 + $0xd30] sm:$0xff]
    %v441 = vld [vmem:[%s0 + $0xd38] sm:$0xff]
    %v442 = vld [vmem:[%s0 + $0xd40] sm:$0xff]
    %v443 = vld [vmem:[%s0 + $0xd48] sm:$0xff]
    %v444 = vld [vmem:[%s0 + $0xd50] sm:$0xff]
    %v445 = vld [vmem:[%s0 + $0xd58] sm:$0xff]
    %v446 = vld [vmem:[%s0 + $0xd60] sm:$0xff]
    %v447 = vld [vmem:[%s0 + $0xd68] sm:$0xff]
    %v448 = vld [vmem:[%s0 + $0xd70] sm:$0xff]
    %v449 = vld [vmem:[%s0 + $0xd78] sm:$0xff]
    %v450 = vld [vmem:[%s0 + $0xd80] sm:$0xff]
    %v451 = vld [vmem:[%s0 + $0xd88] sm:$0xff]
    %v452 = vld [vmem:[%s0 + $0xd90] sm:$0xff]
    %v453 = vld [vmem:[%s0 + $0xd98] sm:$0xff]
    %v454 = vld [vmem:[%s0 + $0xda0] sm:$0xff]
    %v455 = vld [vmem:[%s0 + $0xda8] sm:$0xff]
    %v456 = vld [vmem:[%s0 + $0xdb0] sm:$0xff]
    %v457 = vld [vmem:[%s0 + $0xdb8] sm:$0xff]
    %v458 = vld [vmem:[%s0 + $0xdc0] sm:$0xff]
    %v459 = vld [vmem:[%s0 + $0xdc8] sm:$0xff]
    %v460 = vld [vmem:[%s0 + $0xdd0] sm:$0xff]
    %v461 = vld [vmem:[%s0 + $0xdd8] sm:$0xff]
    %v462 = vld [vmem:[%s0 + $0xde0] sm:$0xff]
    %v463 = vld [vmem:[%s0 + $0xde8] sm:$0xff]
    %v464 = vld [vmem:[%s0 + $0xdf0] sm:$0xff]
    %v465 = vld [vmem:[%s0 + $0xdf8] sm:$0xff]
    %v466 = vld [vmem:[%s0 + $0xe00] sm:$0xff]
    %v467 = vld [vmem:[%s0 + $0xe08] sm:$0xff]
    %v468 = vld [vmem:[%s0 + $0xe10] sm:$0xff]
    %v469 = vld [vmem:[%s0 + $0xe18] sm:$0xff]
    %v470 = vld [vmem:[%s0 + $0xe20] sm:$0xff]
    %v471 = vld [vmem:[%s0 + $0xe28] sm:$0xff]
    %v472 = vld [vmem:[%s0 + $0xe30] sm:$0xff]
    %v473 = vld [vmem:[%s0 + $0xe38] sm:$0xff]
    %v474 = vld [vmem:[%s0 + $0xe40] sm:$0xff]
    %v475 = vld [vmem:[%s0 + $0xe48] sm:$0xff]
    %v476 = vld [vmem:[%s0 + $0xe50] sm:$0xff]
    %v477 = vld [vmem:[%s0 + $0xe58] sm:$0xff]
    %v478 = vld [vmem:[%s0 + $0xe60] sm:$0xff]
    %v479 = vld [vmem:[%s0 + $0xe68] sm:$0xff]
    %v480 = vld [vmem:[%s0 + $0xe70] sm:$0xff]
    %v481 = vld [vmem:[%s0 + $0xe78] sm:$0xff]
    %v482 = vld [vmem:[%s0 + $0xe80] sm:$0xff]
    %v483 = vld [vmem:[%s0 + $0xe88] sm:$0xff]
    %v484 = vld [vmem:[%s0 + $0xe90] sm:$0xff]
    %v485 = vld [vmem:[%s0 + $0xe98] sm:$0xff]
    %v486 = vld [vmem:[%s0 + $0xea0] sm:$0xff]
    %v487 = vld [vmem:[%s0 + $0xea8] sm:$0xff]
    %v488 = vld [vmem:[%s0 + $0xeb0] sm:$0xff]
    %v489 = vld [vmem:[%s0 + $0xeb8] sm:$0xff]
    %v490 = vld [vmem:[%s0 + $0xec0] sm:$0xff]
    %v491 = vld [vmem:[%s0 + $0xec8] sm:$0xff]
    %v492 = vld [vmem:[%s0 + $0xed0] sm:$0xff]
    %v493 = vld [vmem:[%s0 + $0xed8] sm:$0xff]
    %v494 = vld [vmem:[%s0 + $0xee0] sm:$0xff]
    %v495 = vld [vmem:[%s0 + $0xee8] sm:$0xff]
    %v496 = vld [vmem:[%s0 + $0xef0] sm:$0xff]
    %v497 = vld [vmem:[%s0 + $0xef8] sm:$0xff]
    %v498 = vld [vmem:[%s0 + $0xf00] sm:$0xff]
    %v499 = vld [vmem:[%s0 + $0xf08] sm:$0xff]
    %v500 = vld [vmem:[%s0 + $0xf10] sm:$0xff]
    %v501 = vld [vmem:[%s0 + $0xf18] sm:$0xff]
    %v502 = vld [vmem:[%s0 + $0xf20] sm:$0xff]
    %v503 = vld [vmem:[%s0 + $0xf28] sm:$0xff]
    %v504 = vld [vmem:[%s0 + $0xf30] sm:$0xff]
    %v505 = vld [vmem:[%s0 + $0xf38] sm:$0xff]
    %v506 = vld [vmem:[%s0 + $0xf40] sm:$0xff]
    %v507 = vld [vmem:[%s0 + $0xf48] sm:$0xff]
    %v508 = vld [vmem:[%s0 + $0xf50] sm:$0xff]
    %v509 = vld [vmem:[%s0 + $0xf58] sm:$0xff]
    %v510 = vld [vmem:[%s0 + $0xf60] sm:$0xff]
    %v511 = vld [vmem:[%s0 + $0xf68] sm:$0xff]
    %v512 = vld [vmem:[%s0 + $0xf70] sm:$0xff]
    %v513 = vld [vmem:[%s0 + $0xf78] sm:$0xff]
    %v514 = vld [vmem:[%s0 + $0xf80] sm:$0xff]
    %v515 = vld [vmem:[%s0 + $0xf88] sm:$0xff]
    %v516 = vld [vmem:[%s0 + $0xf90] sm:$0xff]
    %v517 = vld [vmem:[%s0 + $0xf98] sm:$0xff]
    %v518 = vld [vmem:[%s0 + $0xfa0] sm:$0xff]
    %v519 = vld [vmem:[%s0 + $0xfa8] sm:$0xff]
    %v520 = vld [vmem:[%s0 + $0xfb0] sm:$0xff]
    %v521 = vld [vmem:[%s0 + $0xfb8] sm:$0xff]
    %v522 = vld [vmem:[%s0 + $0xfc0] sm:$0xff]
    %v523 = vld [vmem:[%s0 + $0xfc8] sm:$0xff]
    %v524 = vld [vmem:[%s0 + $0xfd0] sm:$0xff]
    %v525 = vld [vmem:[%s0 + $0xfd8] sm:$0xff]
    %v526 = vld [vmem:[%s0 + $0xfe0] sm:$0xff]
    %v527 = vld [vmem:[%s0 + $0xfe8] sm:$0xff]
    %v528 = vld [vmem:[%s0 + $0xff0] sm:$0xff]
    %v529 = vld [vmem:[%s0 + $0xff8] sm:$0xff]
    %v530 = vld [vmem:[%s1] sm:$0xff]
    %v531 = vld [vmem:[%s1 + $0x8] sm:$0xff]
    %v532 = vld [vmem:[%s1 + $0x10] sm:$0xff]
    %v533 = vld [vmem:[%s1 + $0x18] sm:$0xff]
    %v534 = vld [vmem:[%s1 + $0x20] sm:$0xf]
    %v535 = vld [vmem:[%s2] sm:$0x1]
    %v537 = vlaneseq
    %v538 = vshrl.u32 %v537, 7
    %v539 = vsub.s32 0, %v538
    %v540 = vrot.slane %v535, %v539
    %vm542 = vcmask 293888
    %v544 = vsel %vm542, %v18, 0
    %v547 = vsel %vm542, %v19, 0
    %v550 = vsel %vm542, %v20, 0
    %v553 = vsel %vm542, %v21, 0
    %v556 = vsel %vm542, %v22, 0
    %v559 = vsel %vm542, %v23, 0
    %v562 = vsel %vm542, %v24, 0
    %v565 = vsel %vm542, %v25, 0
    %v568 = vsel %vm542, %v26, 0
    %v571 = vsel %vm542, %v27, 0
    %v574 = vsel %vm542, %v28, 0
    %v577 = vsel %vm542, %v29, 0
    %v580 = vsel %vm542, %v30, 0
    %v583 = vsel %vm542, %v31, 0
    %v586 = vsel %vm542, %v32, 0
    %v589 = vsel %vm542, %v33, 0
    %v592 = vsel %vm542, %v34, 0
    %v595 = vsel %vm542, %v35, 0
    %v598 = vsel %vm542, %v36, 0
    %v601 = vsel %vm542, %v37, 0
    %v604 = vsel %vm542, %v38, 0
    %v607 = vsel %vm542, %v39, 0
    %v610 = vsel %vm542, %v40, 0
    %v613 = vsel %vm542, %v41, 0
    %v616 = vsel %vm542, %v42, 0
    %v619 = vsel %vm542, %v43, 0
    %v622 = vsel %vm542, %v44, 0
    %v625 = vsel %vm542, %v45, 0
    %v628 = vsel %vm542, %v46, 0
    %v631 = vsel %vm542, %v47, 0
    %v634 = vsel %vm542, %v48, 0
    %v637 = vsel %vm542, %v49, 0
    %v640 = vsel %vm542, %v50, 0
    %v643 = vsel %vm542, %v51, 0
    %v646 = vsel %vm542, %v52, 0
    %v649 = vsel %vm542, %v53, 0
    %v652 = vsel %vm542, %v54, 0
    %v655 = vsel %vm542, %v55, 0
    %v658 = vsel %vm542, %v56, 0
    %v661 = vsel %vm542, %v57, 0
    %v664 = vsel %vm542, %v58, 0
    %v667 = vsel %vm542, %v59, 0
    %v670 = vsel %vm542, %v60, 0
    %v673 = vsel %vm542, %v61, 0
    %v676 = vsel %vm542, %v62, 0
    %v679 = vsel %vm542, %v63, 0
    %v682 = vsel %vm542, %v64, 0
    %v685 = vsel %vm542, %v65, 0
    %v688 = vsel %vm542, %v66, 0
    %v691 = vsel %vm542, %v67, 0
    %v694 = vsel %vm542, %v68, 0
    %v697 = vsel %vm542, %v69, 0
    %v700 = vsel %vm542, %v70, 0
    %v703 = vsel %vm542, %v71, 0
    %v706 = vsel %vm542, %v72, 0
    %v709 = vsel %vm542, %v73, 0
    %v712 = vsel %vm542, %v74, 0
    %v715 = vsel %vm542, %v75, 0
    %v718 = vsel %vm542, %v76, 0
    %v721 = vsel %vm542, %v77, 0
    %v724 = vsel %vm542, %v78, 0
    %v727 = vsel %vm542, %v79, 0
    %v730 = vsel %vm542, %v80, 0
    %v733 = vsel %vm542, %v81, 0
    %v736 = vsel %vm542, %v82, 0
    %v739 = vsel %vm542, %v83, 0
    %v742 = vsel %vm542, %v84, 0
    %v745 = vsel %vm542, %v85, 0
    %v748 = vsel %vm542, %v86, 0
    %v751 = vsel %vm542, %v87, 0
    %v754 = vsel %vm542, %v88, 0
    %v757 = vsel %vm542, %v89, 0
    %v760 = vsel %vm542, %v90, 0
    %v763 = vsel %vm542, %v91, 0
    %v766 = vsel %vm542, %v92, 0
    %v769 = vsel %vm542, %v93, 0
    %v772 = vsel %vm542, %v94, 0
    %v775 = vsel %vm542, %v95, 0
    %v778 = vsel %vm542, %v96, 0
    %v781 = vsel %vm542, %v97, 0
    %v784 = vsel %vm542, %v98, 0
    %v787 = vsel %vm542, %v99, 0
    %v790 = vsel %vm542, %v100, 0
    %v793 = vsel %vm542, %v101, 0
    %v796 = vsel %vm542, %v102, 0
    %v799 = vsel %vm542, %v103, 0
    %v802 = vsel %vm542, %v104, 0
    %v805 = vsel %vm542, %v105, 0
    %v808 = vsel %vm542, %v106, 0
    %v811 = vsel %vm542, %v107, 0
    %v814 = vsel %vm542, %v108, 0
    %v817 = vsel %vm542, %v109, 0
    %v820 = vsel %vm542, %v110, 0
    %v823 = vsel %vm542, %v111, 0
    %v826 = vsel %vm542, %v112, 0
    %v829 = vsel %vm542, %v113, 0
    %v832 = vsel %vm542, %v114, 0
    %v835 = vsel %vm542, %v115, 0
    %v838 = vsel %vm542, %v116, 0
    %v841 = vsel %vm542, %v117, 0
    %v844 = vsel %vm542, %v118, 0
    %v847 = vsel %vm542, %v119, 0
    %v850 = vsel %vm542, %v120, 0
    %v853 = vsel %vm542, %v121, 0
    %v856 = vsel %vm542, %v122, 0
    %v859 = vsel %vm542, %v123, 0
    %v862 = vsel %vm542, %v124, 0
    %v865 = vsel %vm542, %v125, 0
    %v868 = vsel %vm542, %v126, 0
    %v871 = vsel %vm542, %v127, 0
    %v874 = vsel %vm542, %v128, 0
    %v877 = vsel %vm542, %v129, 0
    %v880 = vsel %vm542, %v130, 0
    %v883 = vsel %vm542, %v131, 0
    %v886 = vsel %vm542, %v132, 0
    %v889 = vsel %vm542, %v133, 0
    %v892 = vsel %vm542, %v134, 0
    %v895 = vsel %vm542, %v135, 0
    %v898 = vsel %vm542, %v136, 0
    %v901 = vsel %vm542, %v137, 0
    %v904 = vsel %vm542, %v138, 0
    %v907 = vsel %vm542, %v139, 0
    %v910 = vsel %vm542, %v140, 0
    %v913 = vsel %vm542, %v141, 0
    %v916 = vsel %vm542, %v142, 0
    %v919 = vsel %vm542, %v143, 0
    %v922 = vsel %vm542, %v144, 0
    %v925 = vsel %vm542, %v145, 0
    %v928 = vsel %vm542, %v146, 0
    %v931 = vsel %vm542, %v147, 0
    %v934 = vsel %vm542, %v148, 0
    %v937 = vsel %vm542, %v149, 0
    %v940 = vsel %vm542, %v150, 0
    %v943 = vsel %vm542, %v151, 0
    %v946 = vsel %vm542, %v152, 0
    %v949 = vsel %vm542, %v153, 0
    %v952 = vsel %vm542, %v154, 0
    %v955 = vsel %vm542, %v155, 0
    %v958 = vsel %vm542, %v156, 0
    %v961 = vsel %vm542, %v157, 0
    %v964 = vsel %vm542, %v158, 0
    %v967 = vsel %vm542, %v159, 0
    %v970 = vsel %vm542, %v160, 0
    %v973 = vsel %vm542, %v161, 0
    %v976 = vsel %vm542, %v162, 0
    %v979 = vsel %vm542, %v163, 0
    %v982 = vsel %vm542, %v164, 0
    %v985 = vsel %vm542, %v165, 0
    %v988 = vsel %vm542, %v166, 0
    %v991 = vsel %vm542, %v167, 0
    %v994 = vsel %vm542, %v168, 0
    %v997 = vsel %vm542, %v169, 0
    %v1000 = vsel %vm542, %v170, 0
    %v1003 = vsel %vm542, %v171, 0
    %v1006 = vsel %vm542, %v172, 0
    %v1009 = vsel %vm542, %v173, 0
    %v1012 = vsel %vm542, %v174, 0
    %v1015 = vsel %vm542, %v175, 0
    %v1018 = vsel %vm542, %v176, 0
    %v1021 = vsel %vm542, %v177, 0
    %v1024 = vsel %vm542, %v178, 0
    %v1027 = vsel %vm542, %v179, 0
    %v1030 = vsel %vm542, %v180, 0
    %v1033 = vsel %vm542, %v181, 0
    %v1036 = vsel %vm542, %v182, 0
    %v1039 = vsel %vm542, %v183, 0
    %v1042 = vsel %vm542, %v184, 0
    %v1045 = vsel %vm542, %v185, 0
    %v1048 = vsel %vm542, %v186, 0
    %v1051 = vsel %vm542, %v187, 0
    %v1054 = vsel %vm542, %v188, 0
    %v1057 = vsel %vm542, %v189, 0
    %v1060 = vsel %vm542, %v190, 0
    %v1063 = vsel %vm542, %v191, 0
    %v1066 = vsel %vm542, %v192, 0
    %v1069 = vsel %vm542, %v193, 0
    %v1072 = vsel %vm542, %v194, 0
    %v1075 = vsel %vm542, %v195, 0
    %v1078 = vsel %vm542, %v196, 0
    %v1081 = vsel %vm542, %v197, 0
    %v1084 = vsel %vm542, %v198, 0
    %v1087 = vsel %vm542, %v199, 0
    %v1090 = vsel %vm542, %v200, 0
    %v1093 = vsel %vm542, %v201, 0
    %v1096 = vsel %vm542, %v202, 0
    %v1099 = vsel %vm542, %v203, 0
    %v1102 = vsel %vm542, %v204, 0
    %v1105 = vsel %vm542, %v205, 0
    %v1108 = vsel %vm542, %v206, 0
    %v1111 = vsel %vm542, %v207, 0
    %v1114 = vsel %vm542, %v208, 0
    %v1117 = vsel %vm542, %v209, 0
    %v1120 = vsel %vm542, %v210, 0
    %v1123 = vsel %vm542, %v211, 0
    %v1126 = vsel %vm542, %v212, 0
    %v1129 = vsel %vm542, %v213, 0
    %v1132 = vsel %vm542, %v214, 0
    %v1135 = vsel %vm542, %v215, 0
    %v1138 = vsel %vm542, %v216, 0
    %v1141 = vsel %vm542, %v217, 0
    %v1144 = vsel %vm542, %v218, 0
    %v1147 = vsel %vm542, %v219, 0
    %v1150 = vsel %vm542, %v220, 0
    %v1153 = vsel %vm542, %v221, 0
    %v1156 = vsel %vm542, %v222, 0
    %v1159 = vsel %vm542, %v223, 0
    %v1162 = vsel %vm542, %v224, 0
    %v1165 = vsel %vm542, %v225, 0
    %v1168 = vsel %vm542, %v226, 0
    %v1171 = vsel %vm542, %v227, 0
    %v1174 = vsel %vm542, %v228, 0
    %v1177 = vsel %vm542, %v229, 0
    %v1180 = vsel %vm542, %v230, 0
    %v1183 = vsel %vm542, %v231, 0
    %v1186 = vsel %vm542, %v232, 0
    %v1189 = vsel %vm542, %v233, 0
    %v1192 = vsel %vm542, %v234, 0
    %v1195 = vsel %vm542, %v235, 0
    %v1198 = vsel %vm542, %v236, 0
    %v1201 = vsel %vm542, %v237, 0
    %v1204 = vsel %vm542, %v238, 0
    %v1207 = vsel %vm542, %v239, 0
    %v1210 = vsel %vm542, %v240, 0
    %v1213 = vsel %vm542, %v241, 0
    %v1216 = vsel %vm542, %v242, 0
    %v1219 = vsel %vm542, %v243, 0
    %v1222 = vsel %vm542, %v244, 0
    %v1225 = vsel %vm542, %v245, 0
    %v1228 = vsel %vm542, %v246, 0
    %v1231 = vsel %vm542, %v247, 0
    %v1234 = vsel %vm542, %v248, 0
    %v1237 = vsel %vm542, %v249, 0
    %v1240 = vsel %vm542, %v250, 0
    %v1243 = vsel %vm542, %v251, 0
    %v1246 = vsel %vm542, %v252, 0
    %v1249 = vsel %vm542, %v253, 0
    %v1252 = vsel %vm542, %v254, 0
    %v1255 = vsel %vm542, %v255, 0
    %v1258 = vsel %vm542, %v256, 0
    %v1261 = vsel %vm542, %v257, 0
    %v1264 = vsel %vm542, %v258, 0
    %v1267 = vsel %vm542, %v259, 0
    %v1270 = vsel %vm542, %v260, 0
    %v1273 = vsel %vm542, %v261, 0
    %v1276 = vsel %vm542, %v262, 0
    %v1279 = vsel %vm542, %v263, 0
    %v1282 = vsel %vm542, %v264, 0
    %v1285 = vsel %vm542, %v265, 0
    %v1288 = vsel %vm542, %v266, 0
    %v1291 = vsel %vm542, %v267, 0
    %v1294 = vsel %vm542, %v268, 0
    %v1297 = vsel %vm542, %v269, 0
    %v1300 = vsel %vm542, %v270, 0
    %v1303 = vsel %vm542, %v271, 0
    %v1306 = vsel %vm542, %v272, 0
    %v1309 = vsel %vm542, %v273, 0
    %v1312 = vsel %vm542, %v274, 0
    %v1315 = vsel %vm542, %v275, 0
    %v1318 = vsel %vm542, %v276, 0
    %v1321 = vsel %vm542, %v277, 0
    %v1324 = vsel %vm542, %v278, 0
    %v1327 = vsel %vm542, %v279, 0
    %v1330 = vsel %vm542, %v280, 0
    %v1333 = vsel %vm542, %v281, 0
    %v1336 = vsel %vm542, %v282, 0
    %v1339 = vsel %vm542, %v283, 0
    %v1342 = vsel %vm542, %v284, 0
    %v1345 = vsel %vm542, %v285, 0
    %v1348 = vsel %vm542, %v286, 0
    %v1351 = vsel %vm542, %v287, 0
    %v1354 = vsel %vm542, %v288, 0
    %v1357 = vsel %vm542, %v289, 0
    %v1360 = vsel %vm542, %v290, 0
    %v1363 = vsel %vm542, %v291, 0
    %v1366 = vsel %vm542, %v292, 0
    %v1369 = vsel %vm542, %v293, 0
    %v1372 = vsel %vm542, %v294, 0
    %v1375 = vsel %vm542, %v295, 0
    %v1378 = vsel %vm542, %v296, 0
    %v1381 = vsel %vm542, %v297, 0
    %v1384 = vsel %vm542, %v298, 0
    %v1387 = vsel %vm542, %v299, 0
    %v1390 = vsel %vm542, %v300, 0
    %v1393 = vsel %vm542, %v301, 0
    %v1396 = vsel %vm542, %v302, 0
    %v1399 = vsel %vm542, %v303, 0
    %v1402 = vsel %vm542, %v304, 0
    %v1405 = vsel %vm542, %v305, 0
    %v1408 = vsel %vm542, %v306, 0
    %v1411 = vsel %vm542, %v307, 0
    %v1414 = vsel %vm542, %v308, 0
    %v1417 = vsel %vm542, %v309, 0
    %v1420 = vsel %vm542, %v310, 0
    %v1423 = vsel %vm542, %v311, 0
    %v1426 = vsel %vm542, %v312, 0
    %v1429 = vsel %vm542, %v313, 0
    %v1432 = vsel %vm542, %v314, 0
    %v1435 = vsel %vm542, %v315, 0
    %v1438 = vsel %vm542, %v316, 0
    %v1441 = vsel %vm542, %v317, 0
    %v1444 = vsel %vm542, %v318, 0
    %v1447 = vsel %vm542, %v319, 0
    %v1450 = vsel %vm542, %v320, 0
    %v1453 = vsel %vm542, %v321, 0
    %v1456 = vsel %vm542, %v322, 0
    %v1459 = vsel %vm542, %v323, 0
    %v1462 = vsel %vm542, %v324, 0
    %v1465 = vsel %vm542, %v325, 0
    %v1468 = vsel %vm542, %v326, 0
    %v1471 = vsel %vm542, %v327, 0
    %v1474 = vsel %vm542, %v328, 0
    %v1477 = vsel %vm542, %v329, 0
    %v1480 = vsel %vm542, %v330, 0
    %v1483 = vsel %vm542, %v331, 0
    %v1486 = vsel %vm542, %v332, 0
    %v1489 = vsel %vm542, %v333, 0
    %v1492 = vsel %vm542, %v334, 0
    %v1495 = vsel %vm542, %v335, 0
    %v1498 = vsel %vm542, %v336, 0
    %v1501 = vsel %vm542, %v337, 0
    %v1504 = vsel %vm542, %v338, 0
    %v1507 = vsel %vm542, %v339, 0
    %v1510 = vsel %vm542, %v340, 0
    %v1513 = vsel %vm542, %v341, 0
    %v1516 = vsel %vm542, %v342, 0
    %v1519 = vsel %vm542, %v343, 0
    %v1522 = vsel %vm542, %v344, 0
    %v1525 = vsel %vm542, %v345, 0
    %v1528 = vsel %vm542, %v346, 0
    %v1531 = vsel %vm542, %v347, 0
    %v1534 = vsel %vm542, %v348, 0
    %v1537 = vsel %vm542, %v349, 0
    %v1540 = vsel %vm542, %v350, 0
    %v1543 = vsel %vm542, %v351, 0
    %v1546 = vsel %vm542, %v352, 0
    %v1549 = vsel %vm542, %v353, 0
    %v1552 = vsel %vm542, %v354, 0
    %v1555 = vsel %vm542, %v355, 0
    %v1558 = vsel %vm542, %v356, 0
    %v1561 = vsel %vm542, %v357, 0
    %v1564 = vsel %vm542, %v358, 0
    %v1567 = vsel %vm542, %v359, 0
    %v1570 = vsel %vm542, %v360, 0
    %v1573 = vsel %vm542, %v361, 0
    %v1576 = vsel %vm542, %v362, 0
    %v1579 = vsel %vm542, %v363, 0
    %v1582 = vsel %vm542, %v364, 0
    %v1585 = vsel %vm542, %v365, 0
    %v1588 = vsel %vm542, %v366, 0
    %v1591 = vsel %vm542, %v367, 0
    %v1594 = vsel %vm542, %v368, 0
    %v1597 = vsel %vm542, %v369, 0
    %v1600 = vsel %vm542, %v370, 0
    %v1603 = vsel %vm542, %v371, 0
    %v1606 = vsel %vm542, %v372, 0
    %v1609 = vsel %vm542, %v373, 0
    %v1612 = vsel %vm542, %v374, 0
    %v1615 = vsel %vm542, %v375, 0
    %v1618 = vsel %vm542, %v376, 0
    %v1621 = vsel %vm542, %v377, 0
    %v1624 = vsel %vm542, %v378, 0
    %v1627 = vsel %vm542, %v379, 0
    %v1630 = vsel %vm542, %v380, 0
    %v1633 = vsel %vm542, %v381, 0
    %v1636 = vsel %vm542, %v382, 0
    %v1639 = vsel %vm542, %v383, 0
    %v1642 = vsel %vm542, %v384, 0
    %v1645 = vsel %vm542, %v385, 0
    %v1648 = vsel %vm542, %v386, 0
    %v1651 = vsel %vm542, %v387, 0
    %v1654 = vsel %vm542, %v388, 0
    %v1657 = vsel %vm542, %v389, 0
    %v1660 = vsel %vm542, %v390, 0
    %v1663 = vsel %vm542, %v391, 0
    %v1666 = vsel %vm542, %v392, 0
    %v1669 = vsel %vm542, %v393, 0
    %v1672 = vsel %vm542, %v394, 0
    %v1675 = vsel %vm542, %v395, 0
    %v1678 = vsel %vm542, %v396, 0
    %v1681 = vsel %vm542, %v397, 0
    %v1684 = vsel %vm542, %v398, 0
    %v1687 = vsel %vm542, %v399, 0
    %v1690 = vsel %vm542, %v400, 0
    %v1693 = vsel %vm542, %v401, 0
    %v1696 = vsel %vm542, %v402, 0
    %v1699 = vsel %vm542, %v403, 0
    %v1702 = vsel %vm542, %v404, 0
    %v1705 = vsel %vm542, %v405, 0
    %v1708 = vsel %vm542, %v406, 0
    %v1711 = vsel %vm542, %v407, 0
    %v1714 = vsel %vm542, %v408, 0
    %v1717 = vsel %vm542, %v409, 0
    %v1720 = vsel %vm542, %v410, 0
    %v1723 = vsel %vm542, %v411, 0
    %v1726 = vsel %vm542, %v412, 0
    %v1729 = vsel %vm542, %v413, 0
    %v1732 = vsel %vm542, %v414, 0
    %v1735 = vsel %vm542, %v415, 0
    %v1738 = vsel %vm542, %v416, 0
    %v1741 = vsel %vm542, %v417, 0
    %v1744 = vsel %vm542, %v418, 0
    %v1747 = vsel %vm542, %v419, 0
    %v1750 = vsel %vm542, %v420, 0
    %v1753 = vsel %vm542, %v421, 0
    %v1756 = vsel %vm542, %v422, 0
    %v1759 = vsel %vm542, %v423, 0
    %v1762 = vsel %vm542, %v424, 0
    %v1765 = vsel %vm542, %v425, 0
    %v1768 = vsel %vm542, %v426, 0
    %v1771 = vsel %vm542, %v427, 0
    %v1774 = vsel %vm542, %v428, 0
    %v1777 = vsel %vm542, %v429, 0
    %v1780 = vsel %vm542, %v430, 0
    %v1783 = vsel %vm542, %v431, 0
    %v1786 = vsel %vm542, %v432, 0
    %v1789 = vsel %vm542, %v433, 0
    %v1792 = vsel %vm542, %v434, 0
    %v1795 = vsel %vm542, %v435, 0
    %v1798 = vsel %vm542, %v436, 0
    %v1801 = vsel %vm542, %v437, 0
    %v1804 = vsel %vm542, %v438, 0
    %v1807 = vsel %vm542, %v439, 0
    %v1810 = vsel %vm542, %v440, 0
    %v1813 = vsel %vm542, %v441, 0
    %v1816 = vsel %vm542, %v442, 0
    %v1819 = vsel %vm542, %v443, 0
    %v1822 = vsel %vm542, %v444, 0
    %v1825 = vsel %vm542, %v445, 0
    %v1828 = vsel %vm542, %v446, 0
    %v1831 = vsel %vm542, %v447, 0
    %v1834 = vsel %vm542, %v448, 0
    %v1837 = vsel %vm542, %v449, 0
    %v1840 = vsel %vm542, %v450, 0
    %v1843 = vsel %vm542, %v451, 0
    %v1846 = vsel %vm542, %v452, 0
    %v1849 = vsel %vm542, %v453, 0
    %v1852 = vsel %vm542, %v454, 0
    %v1855 = vsel %vm542, %v455, 0
    %v1858 = vsel %vm542, %v456, 0
    %v1861 = vsel %vm542, %v457, 0
    %v1864 = vsel %vm542, %v458, 0
    %v1867 = vsel %vm542, %v459, 0
    %v1870 = vsel %vm542, %v460, 0
    %v1873 = vsel %vm542, %v461, 0
    %v1876 = vsel %vm542, %v462, 0
    %v1879 = vsel %vm542, %v463, 0
    %v1882 = vsel %vm542, %v464, 0
    %v1885 = vsel %vm542, %v465, 0
    %v1888 = vsel %vm542, %v466, 0
    %v1891 = vsel %vm542, %v467, 0
    %v1894 = vsel %vm542, %v468, 0
    %v1897 = vsel %vm542, %v469, 0
    %v1900 = vsel %vm542, %v470, 0
    %v1903 = vsel %vm542, %v471, 0
    %v1906 = vsel %vm542, %v472, 0
    %v1909 = vsel %vm542, %v473, 0
    %v1912 = vsel %vm542, %v474, 0
    %v1915 = vsel %vm542, %v475, 0
    %v1918 = vsel %vm542, %v476, 0
    %v1921 = vsel %vm542, %v477, 0
    %v1924 = vsel %vm542, %v478, 0
    %v1927 = vsel %vm542, %v479, 0
    %v1930 = vsel %vm542, %v480, 0
    %v1933 = vsel %vm542, %v481, 0
    %v1936 = vsel %vm542, %v482, 0
    %v1939 = vsel %vm542, %v483, 0
    %v1942 = vsel %vm542, %v484, 0
    %v1945 = vsel %vm542, %v485, 0
    %v1948 = vsel %vm542, %v486, 0
    %v1951 = vsel %vm542, %v487, 0
    %v1954 = vsel %vm542, %v488, 0
    %v1957 = vsel %vm542, %v489, 0
    %v1960 = vsel %vm542, %v490, 0
    %v1963 = vsel %vm542, %v491, 0
    %v1966 = vsel %vm542, %v492, 0
    %v1969 = vsel %vm542, %v493, 0
    %v1972 = vsel %vm542, %v494, 0
    %v1975 = vsel %vm542, %v495, 0
    %v1978 = vsel %vm542, %v496, 0
    %v1981 = vsel %vm542, %v497, 0
    %v1984 = vsel %vm542, %v498, 0
    %v1987 = vsel %vm542, %v499, 0
    %v1990 = vsel %vm542, %v500, 0
    %v1993 = vsel %vm542, %v501, 0
    %v1996 = vsel %vm542, %v502, 0
    %v1999 = vsel %vm542, %v503, 0
    %v2002 = vsel %vm542, %v504, 0
    %v2005 = vsel %vm542, %v505, 0
    %v2008 = vsel %vm542, %v506, 0
    %v2011 = vsel %vm542, %v507, 0
    %v2014 = vsel %vm542, %v508, 0
    %v2017 = vsel %vm542, %v509, 0
    %v2020 = vsel %vm542, %v510, 0
    %v2023 = vsel %vm542, %v511, 0
    %v2026 = vsel %vm542, %v512, 0
    %v2029 = vsel %vm542, %v513, 0
    %v2032 = vsel %vm542, %v514, 0
    %v2035 = vsel %vm542, %v515, 0
    %v2038 = vsel %vm542, %v516, 0
    %v2041 = vsel %vm542, %v517, 0
    %v2044 = vsel %vm542, %v518, 0
    %v2047 = vsel %vm542, %v519, 0
    %v2050 = vsel %vm542, %v520, 0
    %v2053 = vsel %vm542, %v521, 0
    %v2056 = vsel %vm542, %v522, 0
    %v2059 = vsel %vm542, %v523, 0
    %v2062 = vsel %vm542, %v524, 0
    %v2065 = vsel %vm542, %v525, 0
    %v2068 = vsel %vm542, %v526, 0
    %v2071 = vsel %vm542, %v527, 0
    %v2074 = vsel %vm542, %v528, 0
    %v2077 = vsel %vm542, %v529, 0
    %vm2079 = vcmask 1043456
    %v2081 = vsel %vm2079, %v534, 0
    %2083 = vmatprep.subr.mxu0 0.0
    %2084 = vmatpush1.msra.mxu0 %v530
    %2085 = vmatprep.subr.mxu0 0.0
    %2086 = vmatpush1.msra.mxu0 %v531
    %2087 = vmatprep.subr.mxu0 0.0
    %2088 = vmatpush1.msra.mxu0 %v532
    %2089 = vmatprep.subr.mxu0 0.0
    %2090 = vmatpush1.msra.mxu0 %v533
    %2091 = vmatprep.subr.mxu0 0.0
    %2092 = vmatpush1.msra.mxu0 %v2081
    %2093 = vmatprep.subr.mxu0 0.0
    %2094 = vmatpush1.msra.mxu0 0.0
    %2095 = vmatprep.subr.mxu0 0.0
    %2096 = vmatpush1.msra.mxu0 0.0
    %2097 = vmatprep.subr.mxu0 0.0
    %2098 = vmatpush1.msra.mxu0 0.0
    %2099 = vmatprep.subr.mxu0 0.0
    %2100 = vmatpush1.msra.mxu0 0.0
    %2101 = vmatprep.subr.mxu0 0.0
    %2102 = vmatpush1.msra.mxu0 0.0
    %2103 = vmatprep.subr.mxu0 0.0
    %2104 = vmatpush1.msra.mxu0 0.0
    %2105 = vmatprep.subr.mxu0 0.0
    %2106 = vmatpush1.msra.mxu0 0.0
    %2107 = vmatprep.subr.mxu0 0.0
    %2108 = vmatpush1.msra.mxu0 0.0
    %2109 = vmatprep.subr.mxu0 0.0
    %2110 = vmatpush1.msra.mxu0 0.0
    %2111 = vmatprep.subr.mxu0 0.0
    %2112 = vmatpush1.msra.mxu0 0.0
    %2113 = vmatprep.subr.mxu0 0.0
    %2114 = vmatpush1.msra.mxu0 0.0
    %2115 = vmatprep.subr.mxu0 0.0
    %2116 = vmatpush1.msra.mxu0 0.0
    %2117 = vmatprep.subr.mxu0 0.0
    %2118 = vmatpush1.msra.mxu0 0.0
    %2119 = vmatprep.subr.mxu0 0.0
    %2120 = vmatpush1.msra.mxu0 0.0
    %2121 = vmatprep.subr.mxu0 0.0
    %2122 = vmatpush1.msra.mxu0 0.0
    %2123 = vmatprep.subr.mxu0 0.0
    %2124 = vmatpush1.msra.mxu0 0.0
    %2125 = vmatprep.subr.mxu0 0.0
    %2126 = vmatpush1.msra.mxu0 0.0
    %2127 = vmatprep.subr.mxu0 0.0
    %2128 = vmatpush1.msra.mxu0 0.0
    %2129 = vmatprep.subr.mxu0 0.0
    %2130 = vmatpush1.msra.mxu0 0.0
    %2131 = vmatprep.subr.mxu0 0.0
    %2132 = vmatpush1.msra.mxu0 0.0
    %2133 = vmatprep.subr.mxu0 0.0
    %2134 = vmatpush1.msra.mxu0 0.0
    %2135 = vmatprep.subr.mxu0 0.0
    %2136 = vmatpush1.msra.mxu0 0.0
    %2137 = vmatprep.subr.mxu0 0.0
    %2138 = vmatpush1.msra.mxu0 0.0
    %2139 = vmatprep.subr.mxu0 0.0
    %2140 = vmatpush1.msra.mxu0 0.0
    %2141 = vmatprep.subr.mxu0 0.0
    %2142 = vmatpush1.msra.mxu0 0.0
    %2143 = vmatprep.subr.mxu0 0.0
    %2144 = vmatpush1.msra.mxu0 0.0
    %2145 = vmatprep.subr.mxu0 0.0
    %2146 = vmatpush1.msra.mxu0 0.0
    %2147 = vmatprep.mubr.f32.mxu0 0.0
    %2148 = vmatmul.mubr.f32.gmra.mrb[0].mxu0 %v544
    %v2149 = vpop.f32.mrb[0].mxu0
    %v2150 = vadd.f32 %v540, %v2149
    %v2151 = vpop.f32.mrb[0].mxu0
    %2152 = vmatprep.mubr.f32.mxu0 0.0
    %2153 = vmatmul.mubr.f32.gmra.mrb[0].mxu0 %v547
    %v2154 = vpop.f32.mrb[0].mxu0
    %v2155 = vadd.f32 %v540, %v2154
    %v2156 = vpop.f32.mrb[0].mxu0
    %2157 = vmatprep.mubr.f32.mxu0 0.0
    %2158 = vmatmul.mubr.f32.gmra.mrb[0].mxu0 %v550
    %v2159 = vpop.f32.mrb[0].mxu0
    %v2160 = vadd.f32 %v540, %v2159
    %v2161 = vpop.f32.mrb[0].mxu0
    %2162 = vmatprep.mubr.f32.mxu0 0.0
    %2163 = vmatmul.mubr.f32.gmra.mrb[0].mxu0 %v553
    %v2164 = vpop.f32.mrb[0].mxu0
    %v2165 = vadd.f32 %v540, %v2164
    %v2166 = vpop.f32.mrb[0].mxu0
    %2167 = vmatprep.mubr.f32.mxu0 0.0
    %2168 = vmatmul.mubr.f32.gmra.mrb[0].mxu0 %v556
    %v2169 = vpop.f32.mrb[0].mxu0
    %v2170 = vadd.f32 %v540, %v2169
    %v2171 = vpop.f32.mrb[0].mxu0
    %2172 = vmatprep.mubr.f32.mxu0 0.0
    %2173 = vmatmul.mubr.f32.gmra.mrb[0].mxu0 %v559
    %v2174 = vpop.f32.mrb[0].mxu0
    %v2175 = vadd.f32 %v540, %v2174
    %v2176 = vpop.f32.mrb[0].mxu0
    %2177 = vmatprep.mubr.f32.mxu0 0.0
    %2178 = vmatmul.mubr.f32.gmra.mrb[0].mxu0 %v562
    %v2179 = vpop.f32.mrb[0].mxu0
    %v2180 = vadd.f32 %v540, %v2179
    %v2181 = vpop.f32.mrb[0].mxu0
    %2182 = vmatprep.mubr.f32.mxu0 0.0
    %2183 = vmatmul.mubr.f32.gmra.mrb[0].mxu0 %v565
    %v2184 = vpop.f32.mrb[0].mxu0
    %v2185 = vadd.f32 %v540, %v2184
    %v2186 = vpop.f32.mrb[0].mxu0
    %2187 = vmatprep.mubr.f32.mxu0 0.0
    %2188 = vmatmul.mubr.f32.gmra.mrb[0].mxu0 %v568
    %v2189 = vpop.f32.mrb[0].mxu0
    %v2190 = vadd.f32 %v540, %v2189
    %v2191 = vpop.f32.mrb[0].mxu0
    %2192 = vmatprep.mubr.f32.mxu0 0.0
    %2193 = vmatmul.mubr.f32.gmra.mrb[0].mxu0 %v571
    %v2194 = vpop.f32.mrb[0].mxu0
    %v2195 = vadd.f32 %v540, %v2194
    %v2196 = vpop.f32.mrb[0].mxu0
    %2197 = vmatprep.mubr.f32.mxu0 0.0
    %2198 = vmatmul.mubr.f32.gmra.mrb[0].mxu0 %v574
    %v2199 = vpop.f32.mrb[0].mxu0
    %v2200 = vadd.f32 %v540, %v2199
    %v2201 = vpop.f32.mrb[0].mxu0
    %2202 = vmatprep.mubr.f32.mxu0 0.0
    %2203 = vmatmul.mubr.f32.gmra.mrb[0].mxu0 %v577
    %v2204 = vpop.f32.mrb[0].mxu0
    %v2205 = vadd.f32 %v540, %v2204
    %v2206 = vpop.f32.mrb[0].mxu0
    %2207 = vmatprep.mubr.f32.mxu0 0.0
    %2208 = vmatmul.mubr.f32.gmra.mrb[0].mxu0 %v580
    %v2209 = vpop.f32.mrb[0].mxu0
    %v2210 = vadd.f32 %v540, %v2209
    %v2211 = vpop.f32.mrb[0].mxu0
    %2212 = vmatprep.mubr.f32.mxu0 0.0
    %2213 = vmatmul.mubr.f32.gmra.mrb[0].mxu0 %v583
    %v2214 = vpop.f32.mrb[0].mxu0
    %v2215 = vadd.f32 %v540, %v2214
    %v2216 = vpop.f32.mrb[0].mxu0
    %2217 = vmatprep.mubr.f32.mxu0 0.0
    %2218 = vmatmul.mubr.f32.gmra.mrb[0].mxu0 %v586
    %v2219 = vpop.f32.mrb[0].mxu0
    %v2220 = vadd.f32 %v540, %v2219
    %v2221 = vpop.f32.mrb[0].mxu0
    %2222 = vmatprep.mubr.f32.mxu0 0.0
    %2223 = vmatmul.mubr.f32.gmra.mrb[0].mxu0 %v589
    %v2224 = vpop.f32.mrb[0].mxu0
    %v2225 = vadd.f32 %v540, %v2224
    %v2226 = vpop.f32.mrb[0].mxu0
    %2227 = vmatprep.mubr.f32.mxu0 0.0
    %2228 = vmatmul.mubr.f32.gmra.mrb[0].mxu0 %v592
    %v2229 = vpop.f32.mrb[0].mxu0
    %v2230 = vadd.f32 %v540, %v2229
    %v2231 = vpop.f32.mrb[0].mxu0
    %2232 = vmatprep.mubr.f32.mxu0 0.0
    %2233 = vmatmul.mubr.f32.gmra.mrb[0].mxu0 %v595
    %v2234 = vpop.f32.mrb[0].mxu0
    %v2235 = vadd.f32 %v540, %v2234
    %v2236 = vpop.f32.mrb[0].mxu0
    %2237 = vmatprep.mubr.f32.mxu0 0.0
    %2238 = vmatmul.mubr.f32.gmra.mrb[0].mxu0 %v598
    %v2239 = vpop.f32.mrb[0].mxu0
    %v2240 = vadd.f32 %v540, %v2239
    %v2241 = vpop.f32.mrb[0].mxu0
    %2242 = vmatprep.mubr.f32.mxu0 0.0
    %2243 = vmatmul.mubr.f32.gmra.mrb[0].mxu0 %v601
    %v2244 = vpop.f32.mrb[0].mxu0
    %v2245 = vadd.f32 %v540, %v2244
    %v2246 = vpop.f32.mrb[0].mxu0
    %2247 = vmatprep.mubr.f32.mxu0 0.0
    %2248 = vmatmul.mubr.f32.gmra.mrb[0].mxu0 %v604
    %v2249 = vpop.f32.mrb[0].mxu0
    %v2250 = vadd.f32 %v540, %v2249
    %v2251 = vpop.f32.mrb[0].mxu0
    %2252 = vmatprep.mubr.f32.mxu0 0.0
    %2253 = vmatmul.mubr.f32.gmra.mrb[0].mxu0 %v607
    %v2254 = vpop.f32.mrb[0].mxu0
    %v2255 = vadd.f32 %v540, %v2254
    %v2256 = vpop.f32.mrb[0].mxu0
    %2257 = vmatprep.mubr.f32.mxu0 0.0
    %2258 = vmatmul.mubr.f32.gmra.mrb[0].mxu0 %v610
    %v2259 = vpop.f32.mrb[0].mxu0
    %v2260 = vadd.f32 %v540, %v2259
    %v2261 = vpop.f32.mrb[0].mxu0
    %2262 = vmatprep.mubr.f32.mxu0 0.0
    %2263 = vmatmul.mubr.f32.gmra.mrb[0].mxu0 %v613
    %v2264 = vpop.f32.mrb[0].mxu0
    %v2265 = vadd.f32 %v540, %v2264
    %v2266 = vpop.f32.mrb[0].mxu0
    %2267 = vmatprep.mubr.f32.mxu0 0.0
    %2268 = vmatmul.mubr.f32.gmra.mrb[0].mxu0 %v616
    %v2269 = vpop.f32.mrb[0].mxu0
    %v2270 = vadd.f32 %v540, %v2269
    %v2271 = vpop.f32.mrb[0].mxu0
    %2272 = vmatprep.mubr.f32.mxu0 0.0
    %2273 = vmatmul.mubr.f32.gmra.mrb[0].mxu0 %v619
    %v2274 = vpop.f32.mrb[0].mxu0
    %v2275 = vadd.f32 %v540, %v2274
    %v2276 = vpop.f32.mrb[0].mxu0
    %2277 = vmatprep.mubr.f32.mxu0 0.0
    %2278 = vmatmul.mubr.f32.gmra.mrb[0].mxu0 %v622
    %v2279 = vpop.f32.mrb[0].mxu0
    %v2280 = vadd.f32 %v540, %v2279
    %v2281 = vpop.f32.mrb[0].mxu0
    %2282 = vmatprep.mubr.f32.mxu0 0.0
    %2283 = vmatmul.mubr.f32.gmra.mrb[0].mxu0 %v625
    %v2284 = vpop.f32.mrb[0].mxu0
    %v2285 = vadd.f32 %v540, %v2284
    %v2286 = vpop.f32.mrb[0].mxu0
    %2287 = vmatprep.mubr.f32.mxu0 0.0
    %2288 = vmatmul.mubr.f32.gmra.mrb[0].mxu0 %v628
    %v2289 = vpop.f32.mrb[0].mxu0
    %v2290 = vadd.f32 %v540, %v2289
    %v2291 = vpop.f32.mrb[0].mxu0
    %2292 = vmatprep.mubr.f32.mxu0 0.0
    %2293 = vmatmul.mubr.f32.gmra.mrb[0].mxu0 %v631
    %v2294 = vpop.f32.mrb[0].mxu0
    %v2295 = vadd.f32 %v540, %v2294
    %v2296 = vpop.f32.mrb[0].mxu0
    %2297 = vmatprep.mubr.f32.mxu0 0.0
    %2298 = vmatmul.mubr.f32.gmra.mrb[0].mxu0 %v634
    %v2299 = vpop.f32.mrb[0].mxu0
    %v2300 = vadd.f32 %v540, %v2299
    %v2301 = vpop.f32.mrb[0].mxu0
    %2302 = vmatprep.mubr.f32.mxu0 0.0
    %2303 = vmatmul.mubr.f32.gmra.mrb[0].mxu0 %v637
    %v2304 = vpop.f32.mrb[0].mxu0
    %v2305 = vadd.f32 %v540, %v2304
    %v2306 = vpop.f32.mrb[0].mxu0
    %2307 = vmatprep.mubr.f32.mxu0 0.0
    %2308 = vmatmul.mubr.f32.gmra.mrb[0].mxu0 %v640
    %v2309 = vpop.f32.mrb[0].mxu0
    %v2310 = vadd.f32 %v540, %v2309
    %v2311 = vpop.f32.mrb[0].mxu0
    %2312 = vmatprep.mubr.f32.mxu0 0.0
    %2313 = vmatmul.mubr.f32.gmra.mrb[0].mxu0 %v643
    %v2314 = vpop.f32.mrb[0].mxu0
    %v2315 = vadd.f32 %v540, %v2314
    %v2316 = vpop.f32.mrb[0].mxu0
    %2317 = vmatprep.mubr.f32.mxu0 0.0
    %2318 = vmatmul.mubr.f32.gmra.mrb[0].mxu0 %v646
    %v2319 = vpop.f32.mrb[0].mxu0
    %v2320 = vadd.f32 %v540, %v2319
    %v2321 = vpop.f32.mrb[0].mxu0
    %2322 = vmatprep.mubr.f32.mxu0 0.0
    %2323 = vmatmul.mubr.f32.gmra.mrb[0].mxu0 %v649
    %v2324 = vpop.f32.mrb[0].mxu0
    %v2325 = vadd.f32 %v540, %v2324
    %v2326 = vpop.f32.mrb[0].mxu0
    %2327 = vmatprep.mubr.f32.mxu0 0.0
    %2328 = vmatmul.mubr.f32.gmra.mrb[0].mxu0 %v652
    %v2329 = vpop.f32.mrb[0].mxu0
    %v2330 = vadd.f32 %v540, %v2329
    %v2331 = vpop.f32.mrb[0].mxu0
    %2332 = vmatprep.mubr.f32.mxu0 0.0
    %2333 = vmatmul.mubr.f32.gmra.mrb[0].mxu0 %v655
    %v2334 = vpop.f32.mrb[0].mxu0
    %v2335 = vadd.f32 %v540, %v2334
    %v2336 = vpop.f32.mrb[0].mxu0
    %2337 = vmatprep.mubr.f32.mxu0 0.0
    %2338 = vmatmul.mubr.f32.gmra.mrb[0].mxu0 %v658
    %v2339 = vpop.f32.mrb[0].mxu0
    %v2340 = vadd.f32 %v540, %v2339
    %v2341 = vpop.f32.mrb[0].mxu0
    %2342 = vmatprep.mubr.f32.mxu0 0.0
    %2343 = vmatmul.mubr.f32.gmra.mrb[0].mxu0 %v661
    %v2344 = vpop.f32.mrb[0].mxu0
    %v2345 = vadd.f32 %v540, %v2344
    %v2346 = vpop.f32.mrb[0].mxu0
    %2347 = vmatprep.mubr.f32.mxu0 0.0
    %2348 = vmatmul.mubr.f32.gmra.mrb[0].mxu0 %v664
    %v2349 = vpop.f32.mrb[0].mxu0
    %v2350 = vadd.f32 %v540, %v2349
    %v2351 = vpop.f32.mrb[0].mxu0
    %2352 = vmatprep.mubr.f32.mxu0 0.0
    %2353 = vmatmul.mubr.f32.gmra.mrb[0].mxu0 %v667
    %v2354 = vpop.f32.mrb[0].mxu0
    %v2355 = vadd.f32 %v540, %v2354
    %v2356 = vpop.f32.mrb[0].mxu0
    %2357 = vmatprep.mubr.f32.mxu0 0.0
    %2358 = vmatmul.mubr.f32.gmra.mrb[0].mxu0 %v670
    %v2359 = vpop.f32.mrb[0].mxu0
    %v2360 = vadd.f32 %v540, %v2359
    %v2361 = vpop.f32.mrb[0].mxu0
    %2362 = vmatprep.mubr.f32.mxu0 0.0
    %2363 = vmatmul.mubr.f32.gmra.mrb[0].mxu0 %v673
    %v2364 = vpop.f32.mrb[0].mxu0
    %v2365 = vadd.f32 %v540, %v2364
    %v2366 = vpop.f32.mrb[0].mxu0
    %2367 = vmatprep.mubr.f32.mxu0 0.0
    %2368 = vmatmul.mubr.f32.gmra.mrb[0].mxu0 %v676
    %v2369 = vpop.f32.mrb[0].mxu0
    %v2370 = vadd.f32 %v540, %v2369
    %v2371 = vpop.f32.mrb[0].mxu0
    %2372 = vmatprep.mubr.f32.mxu0 0.0
    %2373 = vmatmul.mubr.f32.gmra.mrb[0].mxu0 %v679
    %v2374 = vpop.f32.mrb[0].mxu0
    %v2375 = vadd.f32 %v540, %v2374
    %v2376 = vpop.f32.mrb[0].mxu0
    %2377 = vmatprep.mubr.f32.mxu0 0.0
    %2378 = vmatmul.mubr.f32.gmra.mrb[0].mxu0 %v682
    %v2379 = vpop.f32.mrb[0].mxu0
    %v2380 = vadd.f32 %v540, %v2379
    %v2381 = vpop.f32.mrb[0].mxu0
    %2382 = vmatprep.mubr.f32.mxu0 0.0
    %2383 = vmatmul.mubr.f32.gmra.mrb[0].mxu0 %v685
    %v2384 = vpop.f32.mrb[0].mxu0
    %v2385 = vadd.f32 %v540, %v2384
    %v2386 = vpop.f32.mrb[0].mxu0
    %2387 = vmatprep.mubr.f32.mxu0 0.0
    %2388 = vmatmul.mubr.f32.gmra.mrb[0].mxu0 %v688
    %v2389 = vpop.f32.mrb[0].mxu0
    %v2390 = vadd.f32 %v540, %v2389
    %v2391 = vpop.f32.mrb[0].mxu0
    %2392 = vmatprep.mubr.f32.mxu0 0.0
    %2393 = vmatmul.mubr.f32.gmra.mrb[0].mxu0 %v691
    %v2394 = vpop.f32.mrb[0].mxu0
    %v2395 = vadd.f32 %v540, %v2394
    %v2396 = vpop.f32.mrb[0].mxu0
    %2397 = vmatprep.mubr.f32.mxu0 0.0
    %2398 = vmatmul.mubr.f32.gmra.mrb[0].mxu0 %v694
    %v2399 = vpop.f32.mrb[0].mxu0
    %v2400 = vadd.f32 %v540, %v2399
    %v2401 = vpop.f32.mrb[0].mxu0
    %2402 = vmatprep.mubr.f32.mxu0 0.0
    %2403 = vmatmul.mubr.f32.gmra.mrb[0].mxu0 %v697
    %v2404 = vpop.f32.mrb[0].mxu0
    %v2405 = vadd.f32 %v540, %v2404
    %v2406 = vpop.f32.mrb[0].mxu0
    %2407 = vmatprep.mubr.f32.mxu0 0.0
    %2408 = vmatmul.mubr.f32.gmra.mrb[0].mxu0 %v700
    %v2409 = vpop.f32.mrb[0].mxu0
    %v2410 = vadd.f32 %v540, %v2409
    %v2411 = vpop.f32.mrb[0].mxu0
    %2412 = vmatprep.mubr.f32.mxu0 0.0
    %2413 = vmatmul.mubr.f32.gmra.mrb[0].mxu0 %v703
    %v2414 = vpop.f32.mrb[0].mxu0
    %v2415 = vadd.f32 %v540, %v2414
    %v2416 = vpop.f32.mrb[0].mxu0
    %2417 = vmatprep.mubr.f32.mxu0 0.0
    %2418 = vmatmul.mubr.f32.gmra.mrb[0].mxu0 %v706
    %v2419 = vpop.f32.mrb[0].mxu0
    %v2420 = vadd.f32 %v540, %v2419
    %v2421 = vpop.f32.mrb[0].mxu0
    %2422 = vmatprep.mubr.f32.mxu0 0.0
    %2423 = vmatmul.mubr.f32.gmra.mrb[0].mxu0 %v709
    %v2424 = vpop.f32.mrb[0].mxu0
    %v2425 = vadd.f32 %v540, %v2424
    %v2426 = vpop.f32.mrb[0].mxu0
    %2427 = vmatprep.mubr.f32.mxu0 0.0
    %2428 = vmatmul.mubr.f32.gmra.mrb[0].mxu0 %v712
    %v2429 = vpop.f32.mrb[0].mxu0
    %v2430 = vadd.f32 %v540, %v2429
    %v2431 = vpop.f32.mrb[0].mxu0
    %2432 = vmatprep.mubr.f32.mxu0 0.0
    %2433 = vmatmul.mubr.f32.gmra.mrb[0].mxu0 %v715
    %v2434 = vpop.f32.mrb[0].mxu0
    %v2435 = vadd.f32 %v540, %v2434
    %v2436 = vpop.f32.mrb[0].mxu0
    %2437 = vmatprep.mubr.f32.mxu0 0.0
    %2438 = vmatmul.mubr.f32.gmra.mrb[0].mxu0 %v718
    %v2439 = vpop.f32.mrb[0].mxu0
    %v2440 = vadd.f32 %v540, %v2439
    %v2441 = vpop.f32.mrb[0].mxu0
    %2442 = vmatprep.mubr.f32.mxu0 0.0
    %2443 = vmatmul.mubr.f32.gmra.mrb[0].mxu0 %v721
    %v2444 = vpop.f32.mrb[0].mxu0
    %v2445 = vadd.f32 %v540, %v2444
    %v2446 = vpop.f32.mrb[0].mxu0
    %2447 = vmatprep.mubr.f32.mxu0 0.0
    %2448 = vmatmul.mubr.f32.gmra.mrb[0].mxu0 %v724
    %v2449 = vpop.f32.mrb[0].mxu0
    %v2450 = vadd.f32 %v540, %v2449
    %v2451 = vpop.f32.mrb[0].mxu0
    %2452 = vmatprep.mubr.f32.mxu0 0.0
    %2453 = vmatmul.mubr.f32.gmra.mrb[0].mxu0 %v727
    %v2454 = vpop.f32.mrb[0].mxu0
    %v2455 = vadd.f32 %v540, %v2454
    %v2456 = vpop.f32.mrb[0].mxu0
    %2457 = vmatprep.mubr.f32.mxu0 0.0
    %2458 = vmatmul.mubr.f32.gmra.mrb[0].mxu0 %v730
    %v2459 = vpop.f32.mrb[0].mxu0
    %v2460 = vadd.f32 %v540, %v2459
    %v2461 = vpop.f32.mrb[0].mxu0
    %2462 = vmatprep.mubr.f32.mxu0 0.0
    %2463 = vmatmul.mubr.f32.gmra.mrb[0].mxu0 %v733
    %v2464 = vpop.f32.mrb[0].mxu0
    %v2465 = vadd.f32 %v540, %v2464
    %v2466 = vpop.f32.mrb[0].mxu0
    %2467 = vmatprep.mubr.f32.mxu0 0.0
    %2468 = vmatmul.mubr.f32.gmra.mrb[0].mxu0 %v736
    %v2469 = vpop.f32.mrb[0].mxu0
    %v2470 = vadd.f32 %v540, %v2469
    %v2471 = vpop.f32.mrb[0].mxu0
    %2472 = vmatprep.mubr.f32.mxu0 0.0
    %2473 = vmatmul.mubr.f32.gmra.mrb[0].mxu0 %v739
    %v2474 = vpop.f32.mrb[0].mxu0
    %v2475 = vadd.f32 %v540, %v2474
    %v2476 = vpop.f32.mrb[0].mxu0
    %2477 = vmatprep.mubr.f32.mxu0 0.0
    %2478 = vmatmul.mubr.f32.gmra.mrb[0].mxu0 %v742
    %v2479 = vpop.f32.mrb[0].mxu0
    %v2480 = vadd.f32 %v540, %v2479
    %v2481 = vpop.f32.mrb[0].mxu0
    %2482 = vmatprep.mubr.f32.mxu0 0.0
    %2483 = vmatmul.mubr.f32.gmra.mrb[0].mxu0 %v745
    %v2484 = vpop.f32.mrb[0].mxu0
    %v2485 = vadd.f32 %v540, %v2484
    %v2486 = vpop.f32.mrb[0].mxu0
    %2487 = vmatprep.mubr.f32.mxu0 0.0
    %2488 = vmatmul.mubr.f32.gmra.mrb[0].mxu0 %v748
    %v2489 = vpop.f32.mrb[0].mxu0
    %v2490 = vadd.f32 %v540, %v2489
    %v2491 = vpop.f32.mrb[0].mxu0
    %2492 = vmatprep.mubr.f32.mxu0 0.0
    %2493 = vmatmul.mubr.f32.gmra.mrb[0].mxu0 %v751
    %v2494 = vpop.f32.mrb[0].mxu0
    %v2495 = vadd.f32 %v540, %v2494
    %v2496 = vpop.f32.mrb[0].mxu0
    %2497 = vmatprep.mubr.f32.mxu0 0.0
    %2498 = vmatmul.mubr.f32.gmra.mrb[0].mxu0 %v754
    %v2499 = vpop.f32.mrb[0].mxu0
    %v2500 = vadd.f32 %v540, %v2499
    %v2501 = vpop.f32.mrb[0].mxu0
    %2502 = vmatprep.mubr.f32.mxu0 0.0
    %2503 = vmatmul.mubr.f32.gmra.mrb[0].mxu0 %v757
    %v2504 = vpop.f32.mrb[0].mxu0
    %v2505 = vadd.f32 %v540, %v2504
    %v2506 = vpop.f32.mrb[0].mxu0
    %2507 = vmatprep.mubr.f32.mxu0 0.0
    %2508 = vmatmul.mubr.f32.gmra.mrb[0].mxu0 %v760
    %v2509 = vpop.f32.mrb[0].mxu0
    %v2510 = vadd.f32 %v540, %v2509
    %v2511 = vpop.f32.mrb[0].mxu0
    %2512 = vmatprep.mubr.f32.mxu0 0.0
    %2513 = vmatmul.mubr.f32.gmra.mrb[0].mxu0 %v763
    %v2514 = vpop.f32.mrb[0].mxu0
    %v2515 = vadd.f32 %v540, %v2514
    %v2516 = vpop.f32.mrb[0].mxu0
    %2517 = vmatprep.mubr.f32.mxu0 0.0
    %2518 = vmatmul.mubr.f32.gmra.mrb[0].mxu0 %v766
    %v2519 = vpop.f32.mrb[0].mxu0
    %v2520 = vadd.f32 %v540, %v2519
    %v2521 = vpop.f32.mrb[0].mxu0
    %2522 = vmatprep.mubr.f32.mxu0 0.0
    %2523 = vmatmul.mubr.f32.gmra.mrb[0].mxu0 %v769
    %v2524 = vpop.f32.mrb[0].mxu0
    %v2525 = vadd.f32 %v540, %v2524
    %v2526 = vpop.f32.mrb[0].mxu0
    %2527 = vmatprep.mubr.f32.mxu0 0.0
    %2528 = vmatmul.mubr.f32.gmra.mrb[0].mxu0 %v772
    %v2529 = vpop.f32.mrb[0].mxu0
    %v2530 = vadd.f32 %v540, %v2529
    %v2531 = vpop.f32.mrb[0].mxu0
    %2532 = vmatprep.mubr.f32.mxu0 0.0
    %2533 = vmatmul.mubr.f32.gmra.mrb[0].mxu0 %v775
    %v2534 = vpop.f32.mrb[0].mxu0
    %v2535 = vadd.f32 %v540, %v2534
    %v2536 = vpop.f32.mrb[0].mxu0
    %2537 = vmatprep.mubr.f32.mxu0 0.0
    %2538 = vmatmul.mubr.f32.gmra.mrb[0].mxu0 %v778
    %v2539 = vpop.f32.mrb[0].mxu0
    %v2540 = vadd.f32 %v540, %v2539
    %v2541 = vpop.f32.mrb[0].mxu0
    %2542 = vmatprep.mubr.f32.mxu0 0.0
    %2543 = vmatmul.mubr.f32.gmra.mrb[0].mxu0 %v781
    %v2544 = vpop.f32.mrb[0].mxu0
    %v2545 = vadd.f32 %v540, %v2544
    %v2546 = vpop.f32.mrb[0].mxu0
    %2547 = vmatprep.mubr.f32.mxu0 0.0
    %2548 = vmatmul.mubr.f32.gmra.mrb[0].mxu0 %v784
    %v2549 = vpop.f32.mrb[0].mxu0
    %v2550 = vadd.f32 %v540, %v2549
    %v2551 = vpop.f32.mrb[0].mxu0
    %2552 = vmatprep.mubr.f32.mxu0 0.0
    %2553 = vmatmul.mubr.f32.gmra.mrb[0].mxu0 %v787
    %v2554 = vpop.f32.mrb[0].mxu0
    %v2555 = vadd.f32 %v540, %v2554
    %v2556 = vpop.f32.mrb[0].mxu0
    %2557 = vmatprep.mubr.f32.mxu0 0.0
    %2558 = vmatmul.mubr.f32.gmra.mrb[0].mxu0 %v790
    %v2559 = vpop.f32.mrb[0].mxu0
    %v2560 = vadd.f32 %v540, %v2559
    %v2561 = vpop.f32.mrb[0].mxu0
    %2562 = vmatprep.mubr.f32.mxu0 0.0
    %2563 = vmatmul.mubr.f32.gmra.mrb[0].mxu0 %v793
    %v2564 = vpop.f32.mrb[0].mxu0
    %v2565 = vadd.f32 %v540, %v2564
    %v2566 = vpop.f32.mrb[0].mxu0
    %2567 = vmatprep.mubr.f32.mxu0 0.0
    %2568 = vmatmul.mubr.f32.gmra.mrb[0].mxu0 %v796
    %v2569 = vpop.f32.mrb[0].mxu0
    %v2570 = vadd.f32 %v540, %v2569
    %v2571 = vpop.f32.mrb[0].mxu0
    %2572 = vmatprep.mubr.f32.mxu0 0.0
    %2573 = vmatmul.mubr.f32.gmra.mrb[0].mxu0 %v799
    %v2574 = vpop.f32.mrb[0].mxu0
    %v2575 = vadd.f32 %v540, %v2574
    %v2576 = vpop.f32.mrb[0].mxu0
    %2577 = vmatprep.mubr.f32.mxu0 0.0
    %2578 = vmatmul.mubr.f32.gmra.mrb[0].mxu0 %v802
    %v2579 = vpop.f32.mrb[0].mxu0
    %v2580 = vadd.f32 %v540, %v2579
    %v2581 = vpop.f32.mrb[0].mxu0
    %2582 = vmatprep.mubr.f32.mxu0 0.0
    %2583 = vmatmul.mubr.f32.gmra.mrb[0].mxu0 %v805
    %v2584 = vpop.f32.mrb[0].mxu0
    %v2585 = vadd.f32 %v540, %v2584
    %v2586 = vpop.f32.mrb[0].mxu0
    %2587 = vmatprep.mubr.f32.mxu0 0.0
    %2588 = vmatmul.mubr.f32.gmra.mrb[0].mxu0 %v808
    %v2589 = vpop.f32.mrb[0].mxu0
    %v2590 = vadd.f32 %v540, %v2589
    %v2591 = vpop.f32.mrb[0].mxu0
    %2592 = vmatprep.mubr.f32.mxu0 0.0
    %2593 = vmatmul.mubr.f32.gmra.mrb[0].mxu0 %v811
    %v2594 = vpop.f32.mrb[0].mxu0
    %v2595 = vadd.f32 %v540, %v2594
    %v2596 = vpop.f32.mrb[0].mxu0
    %2597 = vmatprep.mubr.f32.mxu0 0.0
    %2598 = vmatmul.mubr.f32.gmra.mrb[0].mxu0 %v814
    %v2599 = vpop.f32.mrb[0].mxu0
    %v2600 = vadd.f32 %v540, %v2599
    %v2601 = vpop.f32.mrb[0].mxu0
    %2602 = vmatprep.mubr.f32.mxu0 0.0
    %2603 = vmatmul.mubr.f32.gmra.mrb[0].mxu0 %v817
    %v2604 = vpop.f32.mrb[0].mxu0
    %v2605 = vadd.f32 %v540, %v2604
    %v2606 = vpop.f32.mrb[0].mxu0
    %2607 = vmatprep.mubr.f32.mxu0 0.0
    %2608 = vmatmul.mubr.f32.gmra.mrb[0].mxu0 %v820
    %v2609 = vpop.f32.mrb[0].mxu0
    %v2610 = vadd.f32 %v540, %v2609
    %v2611 = vpop.f32.mrb[0].mxu0
    %2612 = vmatprep.mubr.f32.mxu0 0.0
    %2613 = vmatmul.mubr.f32.gmra.mrb[0].mxu0 %v823
    %v2614 = vpop.f32.mrb[0].mxu0
    %v2615 = vadd.f32 %v540, %v2614
    %v2616 = vpop.f32.mrb[0].mxu0
    %2617 = vmatprep.mubr.f32.mxu0 0.0
    %2618 = vmatmul.mubr.f32.gmra.mrb[0].mxu0 %v826
    %v2619 = vpop.f32.mrb[0].mxu0
    %v2620 = vadd.f32 %v540, %v2619
    %v2621 = vpop.f32.mrb[0].mxu0
    %2622 = vmatprep.mubr.f32.mxu0 0.0
    %2623 = vmatmul.mubr.f32.gmra.mrb[0].mxu0 %v829
    %v2624 = vpop.f32.mrb[0].mxu0
    %v2625 = vadd.f32 %v540, %v2624
    %v2626 = vpop.f32.mrb[0].mxu0
    %2627 = vmatprep.mubr.f32.mxu0 0.0
    %2628 = vmatmul.mubr.f32.gmra.mrb[0].mxu0 %v832
    %v2629 = vpop.f32.mrb[0].mxu0
    %v2630 = vadd.f32 %v540, %v2629
    %v2631 = vpop.f32.mrb[0].mxu0
    %2632 = vmatprep.mubr.f32.mxu0 0.0
    %2633 = vmatmul.mubr.f32.gmra.mrb[0].mxu0 %v835
    %v2634 = vpop.f32.mrb[0].mxu0
    %v2635 = vadd.f32 %v540, %v2634
    %v2636 = vpop.f32.mrb[0].mxu0
    %2637 = vmatprep.mubr.f32.mxu0 0.0
    %2638 = vmatmul.mubr.f32.gmra.mrb[0].mxu0 %v838
    %v2639 = vpop.f32.mrb[0].mxu0
    %v2640 = vadd.f32 %v540, %v2639
    %v2641 = vpop.f32.mrb[0].mxu0
    %2642 = vmatprep.mubr.f32.mxu0 0.0
    %2643 = vmatmul.mubr.f32.gmra.mrb[0].mxu0 %v841
    %v2644 = vpop.f32.mrb[0].mxu0
    %v2645 = vadd.f32 %v540, %v2644
    %v2646 = vpop.f32.mrb[0].mxu0
    %2647 = vmatprep.mubr.f32.mxu0 0.0
    %2648 = vmatmul.mubr.f32.gmra.mrb[0].mxu0 %v844
    %v2649 = vpop.f32.mrb[0].mxu0
    %v2650 = vadd.f32 %v540, %v2649
    %v2651 = vpop.f32.mrb[0].mxu0
    %2652 = vmatprep.mubr.f32.mxu0 0.0
    %2653 = vmatmul.mubr.f32.gmra.mrb[0].mxu0 %v847
    %v2654 = vpop.f32.mrb[0].mxu0
    %v2655 = vadd.f32 %v540, %v2654
    %v2656 = vpop.f32.mrb[0].mxu0
    %2657 = vmatprep.mubr.f32.mxu0 0.0
    %2658 = vmatmul.mubr.f32.gmra.mrb[0].mxu0 %v850
    %v2659 = vpop.f32.mrb[0].mxu0
    %v2660 = vadd.f32 %v540, %v2659
    %v2661 = vpop.f32.mrb[0].mxu0
    %2662 = vmatprep.mubr.f32.mxu0 0.0
    %2663 = vmatmul.mubr.f32.gmra.mrb[0].mxu0 %v853
    %v2664 = vpop.f32.mrb[0].mxu0
    %v2665 = vadd.f32 %v540, %v2664
    %v2666 = vpop.f32.mrb[0].mxu0
    %2667 = vmatprep.mubr.f32.mxu0 0.0
    %2668 = vmatmul.mubr.f32.gmra.mrb[0].mxu0 %v856
    %v2669 = vpop.f32.mrb[0].mxu0
    %v2670 = vadd.f32 %v540, %v2669
    %v2671 = vpop.f32.mrb[0].mxu0
    %2672 = vmatprep.mubr.f32.mxu0 0.0
    %2673 = vmatmul.mubr.f32.gmra.mrb[0].mxu0 %v859
    %v2674 = vpop.f32.mrb[0].mxu0
    %v2675 = vadd.f32 %v540, %v2674
    %v2676 = vpop.f32.mrb[0].mxu0
    %2677 = vmatprep.mubr.f32.mxu0 0.0
    %2678 = vmatmul.mubr.f32.gmra.mrb[0].mxu0 %v862
    %v2679 = vpop.f32.mrb[0].mxu0
    %v2680 = vadd.f32 %v540, %v2679
    %v2681 = vpop.f32.mrb[0].mxu0
    %2682 = vmatprep.mubr.f32.mxu0 0.0
    %2683 = vmatmul.mubr.f32.gmra.mrb[0].mxu0 %v865
    %v2684 = vpop.f32.mrb[0].mxu0
    %v2685 = vadd.f32 %v540, %v2684
    %v2686 = vpop.f32.mrb[0].mxu0
    %2687 = vmatprep.mubr.f32.mxu0 0.0
    %2688 = vmatmul.mubr.f32.gmra.mrb[0].mxu0 %v868
    %v2689 = vpop.f32.mrb[0].mxu0
    %v2690 = vadd.f32 %v540, %v2689
    %v2691 = vpop.f32.mrb[0].mxu0
    %2692 = vmatprep.mubr.f32.mxu0 0.0
    %2693 = vmatmul.mubr.f32.gmra.mrb[0].mxu0 %v871
    %v2694 = vpop.f32.mrb[0].mxu0
    %v2695 = vadd.f32 %v540, %v2694
    %v2696 = vpop.f32.mrb[0].mxu0
    %2697 = vmatprep.mubr.f32.mxu0 0.0
    %2698 = vmatmul.mubr.f32.gmra.mrb[0].mxu0 %v874
    %v2699 = vpop.f32.mrb[0].mxu0
    %v2700 = vadd.f32 %v540, %v2699
    %v2701 = vpop.f32.mrb[0].mxu0
    %2702 = vmatprep.mubr.f32.mxu0 0.0
    %2703 = vmatmul.mubr.f32.gmra.mrb[0].mxu0 %v877
    %v2704 = vpop.f32.mrb[0].mxu0
    %v2705 = vadd.f32 %v540, %v2704
    %v2706 = vpop.f32.mrb[0].mxu0
    %2707 = vmatprep.mubr.f32.mxu0 0.0
    %2708 = vmatmul.mubr.f32.gmra.mrb[0].mxu0 %v880
    %v2709 = vpop.f32.mrb[0].mxu0
    %v2710 = vadd.f32 %v540, %v2709
    %v2711 = vpop.f32.mrb[0].mxu0
    %2712 = vmatprep.mubr.f32.mxu0 0.0
    %2713 = vmatmul.mubr.f32.gmra.mrb[0].mxu0 %v883
    %v2714 = vpop.f32.mrb[0].mxu0
    %v2715 = vadd.f32 %v540, %v2714
    %v2716 = vpop.f32.mrb[0].mxu0
    %2717 = vmatprep.mubr.f32.mxu0 0.0
    %2718 = vmatmul.mubr.f32.gmra.mrb[0].mxu0 %v886
    %v2719 = vpop.f32.mrb[0].mxu0
    %v2720 = vadd.f32 %v540, %v2719
    %v2721 = vpop.f32.mrb[0].mxu0
    %2722 = vmatprep.mubr.f32.mxu0 0.0
    %2723 = vmatmul.mubr.f32.gmra.mrb[0].mxu0 %v889
    %v2724 = vpop.f32.mrb[0].mxu0
    %v2725 = vadd.f32 %v540, %v2724
    %v2726 = vpop.f32.mrb[0].mxu0
    %2727 = vmatprep.mubr.f32.mxu0 0.0
    %2728 = vmatmul.mubr.f32.gmra.mrb[0].mxu0 %v892
    %v2729 = vpop.f32.mrb[0].mxu0
    %v2730 = vadd.f32 %v540, %v2729
    %v2731 = vpop.f32.mrb[0].mxu0
    %2732 = vmatprep.mubr.f32.mxu0 0.0
    %2733 = vmatmul.mubr.f32.gmra.mrb[0].mxu0 %v895
    %v2734 = vpop.f32.mrb[0].mxu0
    %v2735 = vadd.f32 %v540, %v2734
    %v2736 = vpop.f32.mrb[0].mxu0
    %2737 = vmatprep.mubr.f32.mxu0 0.0
    %2738 = vmatmul.mubr.f32.gmra.mrb[0].mxu0 %v898
    %v2739 = vpop.f32.mrb[0].mxu0
    %v2740 = vadd.f32 %v540, %v2739
    %v2741 = vpop.f32.mrb[0].mxu0
    %2742 = vmatprep.mubr.f32.mxu0 0.0
    %2743 = vmatmul.mubr.f32.gmra.mrb[0].mxu0 %v901
    %v2744 = vpop.f32.mrb[0].mxu0
    %v2745 = vadd.f32 %v540, %v2744
    %v2746 = vpop.f32.mrb[0].mxu0
    %2747 = vmatprep.mubr.f32.mxu0 0.0
    %2748 = vmatmul.mubr.f32.gmra.mrb[0].mxu0 %v904
    %v2749 = vpop.f32.mrb[0].mxu0
    %v2750 = vadd.f32 %v540, %v2749
    %v2751 = vpop.f32.mrb[0].mxu0
    %2752 = vmatprep.mubr.f32.mxu0 0.0
    %2753 = vmatmul.mubr.f32.gmra.mrb[0].mxu0 %v907
    %v2754 = vpop.f32.mrb[0].mxu0
    %v2755 = vadd.f32 %v540, %v2754
    %v2756 = vpop.f32.mrb[0].mxu0
    %2757 = vmatprep.mubr.f32.mxu0 0.0
    %2758 = vmatmul.mubr.f32.gmra.mrb[0].mxu0 %v910
    %v2759 = vpop.f32.mrb[0].mxu0
    %v2760 = vadd.f32 %v540, %v2759
    %v2761 = vpop.f32.mrb[0].mxu0
    %2762 = vmatprep.mubr.f32.mxu0 0.0
    %2763 = vmatmul.mubr.f32.gmra.mrb[0].mxu0 %v913
    %v2764 = vpop.f32.mrb[0].mxu0
    %v2765 = vadd.f32 %v540, %v2764
    %v2766 = vpop.f32.mrb[0].mxu0
    %2767 = vmatprep.mubr.f32.mxu0 0.0
    %2768 = vmatmul.mubr.f32.gmra.mrb[0].mxu0 %v916
    %v2769 = vpop.f32.mrb[0].mxu0
    %v2770 = vadd.f32 %v540, %v2769
    %v2771 = vpop.f32.mrb[0].mxu0
    %2772 = vmatprep.mubr.f32.mxu0 0.0
    %2773 = vmatmul.mubr.f32.gmra.mrb[0].mxu0 %v919
    %v2774 = vpop.f32.mrb[0].mxu0
    %v2775 = vadd.f32 %v540, %v2774
    %v2776 = vpop.f32.mrb[0].mxu0
    %2777 = vmatprep.mubr.f32.mxu0 0.0
    %2778 = vmatmul.mubr.f32.gmra.mrb[0].mxu0 %v922
    %v2779 = vpop.f32.mrb[0].mxu0
    %v2780 = vadd.f32 %v540, %v2779
    %v2781 = vpop.f32.mrb[0].mxu0
    %2782 = vmatprep.mubr.f32.mxu0 0.0
    %2783 = vmatmul.mubr.f32.gmra.mrb[0].mxu0 %v925
    %v2784 = vpop.f32.mrb[0].mxu0
    %v2785 = vadd.f32 %v540, %v2784
    %v2786 = vpop.f32.mrb[0].mxu0
    %2787 = vmatprep.mubr.f32.mxu0 0.0
    %2788 = vmatmul.mubr.f32.gmra.mrb[0].mxu0 %v928
    %v2789 = vpop.f32.mrb[0].mxu0
    %v2790 = vadd.f32 %v540, %v2789
    %v2791 = vpop.f32.mrb[0].mxu0
    %2792 = vmatprep.mubr.f32.mxu0 0.0
    %2793 = vmatmul.mubr.f32.gmra.mrb[0].mxu0 %v931
    %v2794 = vpop.f32.mrb[0].mxu0
    %v2795 = vadd.f32 %v540, %v2794
    %v2796 = vpop.f32.mrb[0].mxu0
    %2797 = vmatprep.mubr.f32.mxu0 0.0
    %2798 = vmatmul.mubr.f32.gmra.mrb[0].mxu0 %v934
    %v2799 = vpop.f32.mrb[0].mxu0
    %v2800 = vadd.f32 %v540, %v2799
    %v2801 = vpop.f32.mrb[0].mxu0
    %2802 = vmatprep.mubr.f32.mxu0 0.0
    %2803 = vmatmul.mubr.f32.gmra.mrb[0].mxu0 %v937
    %v2804 = vpop.f32.mrb[0].mxu0
    %v2805 = vadd.f32 %v540, %v2804
    %v2806 = vpop.f32.mrb[0].mxu0
    %2807 = vmatprep.mubr.f32.mxu0 0.0
    %2808 = vmatmul.mubr.f32.gmra.mrb[0].mxu0 %v940
    %v2809 = vpop.f32.mrb[0].mxu0
    %v2810 = vadd.f32 %v540, %v2809
    %v2811 = vpop.f32.mrb[0].mxu0
    %2812 = vmatprep.mubr.f32.mxu0 0.0
    %2813 = vmatmul.mubr.f32.gmra.mrb[0].mxu0 %v943
    %v2814 = vpop.f32.mrb[0].mxu0
    %v2815 = vadd.f32 %v540, %v2814
    %v2816 = vpop.f32.mrb[0].mxu0
    %2817 = vmatprep.mubr.f32.mxu0 0.0
    %2818 = vmatmul.mubr.f32.gmra.mrb[0].mxu0 %v946
    %v2819 = vpop.f32.mrb[0].mxu0
    %v2820 = vadd.f32 %v540, %v2819
    %v2821 = vpop.f32.mrb[0].mxu0
    %2822 = vmatprep.mubr.f32.mxu0 0.0
    %2823 = vmatmul.mubr.f32.gmra.mrb[0].mxu0 %v949
    %v2824 = vpop.f32.mrb[0].mxu0
    %v2825 = vadd.f32 %v540, %v2824
    %v2826 = vpop.f32.mrb[0].mxu0
    %2827 = vmatprep.mubr.f32.mxu0 0.0
    %2828 = vmatmul.mubr.f32.gmra.mrb[0].mxu0 %v952
    %v2829 = vpop.f32.mrb[0].mxu0
    %v2830 = vadd.f32 %v540, %v2829
    %v2831 = vpop.f32.mrb[0].mxu0
    %2832 = vmatprep.mubr.f32.mxu0 0.0
    %2833 = vmatmul.mubr.f32.gmra.mrb[0].mxu0 %v955
    %v2834 = vpop.f32.mrb[0].mxu0
    %v2835 = vadd.f32 %v540, %v2834
    %v2836 = vpop.f32.mrb[0].mxu0
    %2837 = vmatprep.mubr.f32.mxu0 0.0
    %2838 = vmatmul.mubr.f32.gmra.mrb[0].mxu0 %v958
    %v2839 = vpop.f32.mrb[0].mxu0
    %v2840 = vadd.f32 %v540, %v2839
    %v2841 = vpop.f32.mrb[0].mxu0
    %2842 = vmatprep.mubr.f32.mxu0 0.0
    %2843 = vmatmul.mubr.f32.gmra.mrb[0].mxu0 %v961
    %v2844 = vpop.f32.mrb[0].mxu0
    %v2845 = vadd.f32 %v540, %v2844
    %v2846 = vpop.f32.mrb[0].mxu0
    %2847 = vmatprep.mubr.f32.mxu0 0.0
    %2848 = vmatmul.mubr.f32.gmra.mrb[0].mxu0 %v964
    %v2849 = vpop.f32.mrb[0].mxu0
    %v2850 = vadd.f32 %v540, %v2849
    %v2851 = vpop.f32.mrb[0].mxu0
    %2852 = vmatprep.mubr.f32.mxu0 0.0
    %2853 = vmatmul.mubr.f32.gmra.mrb[0].mxu0 %v967
    %v2854 = vpop.f32.mrb[0].mxu0
    %v2855 = vadd.f32 %v540, %v2854
    %v2856 = vpop.f32.mrb[0].mxu0
    %2857 = vmatprep.mubr.f32.mxu0 0.0
    %2858 = vmatmul.mubr.f32.gmra.mrb[0].mxu0 %v970
    %v2859 = vpop.f32.mrb[0].mxu0
    %v2860 = vadd.f32 %v540, %v2859
    %v2861 = vpop.f32.mrb[0].mxu0
    %2862 = vmatprep.mubr.f32.mxu0 0.0
    %2863 = vmatmul.mubr.f32.gmra.mrb[0].mxu0 %v973
    %v2864 = vpop.f32.mrb[0].mxu0
    %v2865 = vadd.f32 %v540, %v2864
    %v2866 = vpop.f32.mrb[0].mxu0
    %2867 = vmatprep.mubr.f32.mxu0 0.0
    %2868 = vmatmul.mubr.f32.gmra.mrb[0].mxu0 %v976
    %v2869 = vpop.f32.mrb[0].mxu0
    %v2870 = vadd.f32 %v540, %v2869
    %v2871 = vpop.f32.mrb[0].mxu0
    %2872 = vmatprep.mubr.f32.mxu0 0.0
    %2873 = vmatmul.mubr.f32.gmra.mrb[0].mxu0 %v979
    %v2874 = vpop.f32.mrb[0].mxu0
    %v2875 = vadd.f32 %v540, %v2874
    %v2876 = vpop.f32.mrb[0].mxu0
    %2877 = vmatprep.mubr.f32.mxu0 0.0
    %2878 = vmatmul.mubr.f32.gmra.mrb[0].mxu0 %v982
    %v2879 = vpop.f32.mrb[0].mxu0
    %v2880 = vadd.f32 %v540, %v2879
    %v2881 = vpop.f32.mrb[0].mxu0
    %2882 = vmatprep.mubr.f32.mxu0 0.0
    %2883 = vmatmul.mubr.f32.gmra.mrb[0].mxu0 %v985
    %v2884 = vpop.f32.mrb[0].mxu0
    %v2885 = vadd.f32 %v540, %v2884
    %v2886 = vpop.f32.mrb[0].mxu0
    %2887 = vmatprep.mubr.f32.mxu0 0.0
    %2888 = vmatmul.mubr.f32.gmra.mrb[0].mxu0 %v988
    %v2889 = vpop.f32.mrb[0].mxu0
    %v2890 = vadd.f32 %v540, %v2889
    %v2891 = vpop.f32.mrb[0].mxu0
    %2892 = vmatprep.mubr.f32.mxu0 0.0
    %2893 = vmatmul.mubr.f32.gmra.mrb[0].mxu0 %v991
    %v2894 = vpop.f32.mrb[0].mxu0
    %v2895 = vadd.f32 %v540, %v2894
    %v2896 = vpop.f32.mrb[0].mxu0
    %2897 = vmatprep.mubr.f32.mxu0 0.0
    %2898 = vmatmul.mubr.f32.gmra.mrb[0].mxu0 %v994
    %v2899 = vpop.f32.mrb[0].mxu0
    %v2900 = vadd.f32 %v540, %v2899
    %v2901 = vpop.f32.mrb[0].mxu0
    %2902 = vmatprep.mubr.f32.mxu0 0.0
    %2903 = vmatmul.mubr.f32.gmra.mrb[0].mxu0 %v997
    %v2904 = vpop.f32.mrb[0].mxu0
    %v2905 = vadd.f32 %v540, %v2904
    %v2906 = vpop.f32.mrb[0].mxu0
    %2907 = vmatprep.mubr.f32.mxu0 0.0
    %2908 = vmatmul.mubr.f32.gmra.mrb[0].mxu0 %v1000
    %v2909 = vpop.f32.mrb[0].mxu0
    %v2910 = vadd.f32 %v540, %v2909
    %v2911 = vpop.f32.mrb[0].mxu0
    %2912 = vmatprep.mubr.f32.mxu0 0.0
    %2913 = vmatmul.mubr.f32.gmra.mrb[0].mxu0 %v1003
    %v2914 = vpop.f32.mrb[0].mxu0
    %v2915 = vadd.f32 %v540, %v2914
    %v2916 = vpop.f32.mrb[0].mxu0
    %2917 = vmatprep.mubr.f32.mxu0 0.0
    %2918 = vmatmul.mubr.f32.gmra.mrb[0].mxu0 %v1006
    %v2919 = vpop.f32.mrb[0].mxu0
    %v2920 = vadd.f32 %v540, %v2919
    %v2921 = vpop.f32.mrb[0].mxu0
    %2922 = vmatprep.mubr.f32.mxu0 0.0
    %2923 = vmatmul.mubr.f32.gmra.mrb[0].mxu0 %v1009
    %v2924 = vpop.f32.mrb[0].mxu0
    %v2925 = vadd.f32 %v540, %v2924
    %v2926 = vpop.f32.mrb[0].mxu0
    %2927 = vmatprep.mubr.f32.mxu0 0.0
    %2928 = vmatmul.mubr.f32.gmra.mrb[0].mxu0 %v1012
    %v2929 = vpop.f32.mrb[0].mxu0
    %v2930 = vadd.f32 %v540, %v2929
    %v2931 = vpop.f32.mrb[0].mxu0
    %2932 = vmatprep.mubr.f32.mxu0 0.0
    %2933 = vmatmul.mubr.f32.gmra.mrb[0].mxu0 %v1015
    %v2934 = vpop.f32.mrb[0].mxu0
    %v2935 = vadd.f32 %v540, %v2934
    %v2936 = vpop.f32.mrb[0].mxu0
    %2937 = vmatprep.mubr.f32.mxu0 0.0
    %2938 = vmatmul.mubr.f32.gmra.mrb[0].mxu0 %v1018
    %v2939 = vpop.f32.mrb[0].mxu0
    %v2940 = vadd.f32 %v540, %v2939
    %v2941 = vpop.f32.mrb[0].mxu0
    %2942 = vmatprep.mubr.f32.mxu0 0.0
    %2943 = vmatmul.mubr.f32.gmra.mrb[0].mxu0 %v1021
    %v2944 = vpop.f32.mrb[0].mxu0
    %v2945 = vadd.f32 %v540, %v2944
    %v2946 = vpop.f32.mrb[0].mxu0
    %2947 = vmatprep.mubr.f32.mxu0 0.0
    %2948 = vmatmul.mubr.f32.gmra.mrb[0].mxu0 %v1024
    %v2949 = vpop.f32.mrb[0].mxu0
    %v2950 = vadd.f32 %v540, %v2949
    %v2951 = vpop.f32.mrb[0].mxu0
    %2952 = vmatprep.mubr.f32.mxu0 0.0
    %2953 = vmatmul.mubr.f32.gmra.mrb[0].mxu0 %v1027
    %v2954 = vpop.f32.mrb[0].mxu0
    %v2955 = vadd.f32 %v540, %v2954
    %v2956 = vpop.f32.mrb[0].mxu0
    %2957 = vmatprep.mubr.f32.mxu0 0.0
    %2958 = vmatmul.mubr.f32.gmra.mrb[0].mxu0 %v1030
    %v2959 = vpop.f32.mrb[0].mxu0
    %v2960 = vadd.f32 %v540, %v2959
    %v2961 = vpop.f32.mrb[0].mxu0
    %2962 = vmatprep.mubr.f32.mxu0 0.0
    %2963 = vmatmul.mubr.f32.gmra.mrb[0].mxu0 %v1033
    %v2964 = vpop.f32.mrb[0].mxu0
    %v2965 = vadd.f32 %v540, %v2964
    %v2966 = vpop.f32.mrb[0].mxu0
    %2967 = vmatprep.mubr.f32.mxu0 0.0
    %2968 = vmatmul.mubr.f32.gmra.mrb[0].mxu0 %v1036
    %v2969 = vpop.f32.mrb[0].mxu0
    %v2970 = vadd.f32 %v540, %v2969
    %v2971 = vpop.f32.mrb[0].mxu0
    %2972 = vmatprep.mubr.f32.mxu0 0.0
    %2973 = vmatmul.mubr.f32.gmra.mrb[0].mxu0 %v1039
    %v2974 = vpop.f32.mrb[0].mxu0
    %v2975 = vadd.f32 %v540, %v2974
    %v2976 = vpop.f32.mrb[0].mxu0
    %2977 = vmatprep.mubr.f32.mxu0 0.0
    %2978 = vmatmul.mubr.f32.gmra.mrb[0].mxu0 %v1042
    %v2979 = vpop.f32.mrb[0].mxu0
    %v2980 = vadd.f32 %v540, %v2979
    %v2981 = vpop.f32.mrb[0].mxu0
    %2982 = vmatprep.mubr.f32.mxu0 0.0
    %2983 = vmatmul.mubr.f32.gmra.mrb[0].mxu0 %v1045
    %v2984 = vpop.f32.mrb[0].mxu0
    %v2985 = vadd.f32 %v540, %v2984
    %v2986 = vpop.f32.mrb[0].mxu0
    %2987 = vmatprep.mubr.f32.mxu0 0.0
    %2988 = vmatmul.mubr.f32.gmra.mrb[0].mxu0 %v1048
    %v2989 = vpop.f32.mrb[0].mxu0
    %v2990 = vadd.f32 %v540, %v2989
    %v2991 = vpop.f32.mrb[0].mxu0
    %2992 = vmatprep.mubr.f32.mxu0 0.0
    %2993 = vmatmul.mubr.f32.gmra.mrb[0].mxu0 %v1051
    %v2994 = vpop.f32.mrb[0].mxu0
    %v2995 = vadd.f32 %v540, %v2994
    %v2996 = vpop.f32.mrb[0].mxu0
    %2997 = vmatprep.mubr.f32.mxu0 0.0
    %2998 = vmatmul.mubr.f32.gmra.mrb[0].mxu0 %v1054
    %v2999 = vpop.f32.mrb[0].mxu0
    %v3000 = vadd.f32 %v540, %v2999
    %v3001 = vpop.f32.mrb[0].mxu0
    %3002 = vmatprep.mubr.f32.mxu0 0.0
    %3003 = vmatmul.mubr.f32.gmra.mrb[0].mxu0 %v1057
    %v3004 = vpop.f32.mrb[0].mxu0
    %v3005 = vadd.f32 %v540, %v3004
    %v3006 = vpop.f32.mrb[0].mxu0
    %3007 = vmatprep.mubr.f32.mxu0 0.0
    %3008 = vmatmul.mubr.f32.gmra.mrb[0].mxu0 %v1060
    %v3009 = vpop.f32.mrb[0].mxu0
    %v3010 = vadd.f32 %v540, %v3009
    %v3011 = vpop.f32.mrb[0].mxu0
    %3012 = vmatprep.mubr.f32.mxu0 0.0
    %3013 = vmatmul.mubr.f32.gmra.mrb[0].mxu0 %v1063
    %v3014 = vpop.f32.mrb[0].mxu0
    %v3015 = vadd.f32 %v540, %v3014
    %v3016 = vpop.f32.mrb[0].mxu0
    %3017 = vmatprep.mubr.f32.mxu0 0.0
    %3018 = vmatmul.mubr.f32.gmra.mrb[0].mxu0 %v1066
    %v3019 = vpop.f32.mrb[0].mxu0
    %v3020 = vadd.f32 %v540, %v3019
    %v3021 = vpop.f32.mrb[0].mxu0
    %3022 = vmatprep.mubr.f32.mxu0 0.0
    %3023 = vmatmul.mubr.f32.gmra.mrb[0].mxu0 %v1069
    %v3024 = vpop.f32.mrb[0].mxu0
    %v3025 = vadd.f32 %v540, %v3024
    %v3026 = vpop.f32.mrb[0].mxu0
    %3027 = vmatprep.mubr.f32.mxu0 0.0
    %3028 = vmatmul.mubr.f32.gmra.mrb[0].mxu0 %v1072
    %v3029 = vpop.f32.mrb[0].mxu0
    %v3030 = vadd.f32 %v540, %v3029
    %v3031 = vpop.f32.mrb[0].mxu0
    %3032 = vmatprep.mubr.f32.mxu0 0.0
    %3033 = vmatmul.mubr.f32.gmra.mrb[0].mxu0 %v1075
    %v3034 = vpop.f32.mrb[0].mxu0
    %v3035 = vadd.f32 %v540, %v3034
    %v3036 = vpop.f32.mrb[0].mxu0
    %3037 = vmatprep.mubr.f32.mxu0 0.0
    %3038 = vmatmul.mubr.f32.gmra.mrb[0].mxu0 %v1078
    %v3039 = vpop.f32.mrb[0].mxu0
    %v3040 = vadd.f32 %v540, %v3039
    %v3041 = vpop.f32.mrb[0].mxu0
    %3042 = vmatprep.mubr.f32.mxu0 0.0
    %3043 = vmatmul.mubr.f32.gmra.mrb[0].mxu0 %v1081
    %v3044 = vpop.f32.mrb[0].mxu0
    %v3045 = vadd.f32 %v540, %v3044
    %v3046 = vpop.f32.mrb[0].mxu0
    %3047 = vmatprep.mubr.f32.mxu0 0.0
    %3048 = vmatmul.mubr.f32.gmra.mrb[0].mxu0 %v1084
    %v3049 = vpop.f32.mrb[0].mxu0
    %v3050 = vadd.f32 %v540, %v3049
    %v3051 = vpop.f32.mrb[0].mxu0
    %3052 = vmatprep.mubr.f32.mxu0 0.0
    %3053 = vmatmul.mubr.f32.gmra.mrb[0].mxu0 %v1087
    %v3054 = vpop.f32.mrb[0].mxu0
    %v3055 = vadd.f32 %v540, %v3054
    %v3056 = vpop.f32.mrb[0].mxu0
    %3057 = vmatprep.mubr.f32.mxu0 0.0
    %3058 = vmatmul.mubr.f32.gmra.mrb[0].mxu0 %v1090
    %v3059 = vpop.f32.mrb[0].mxu0
    %v3060 = vadd.f32 %v540, %v3059
    %v3061 = vpop.f32.mrb[0].mxu0
    %3062 = vmatprep.mubr.f32.mxu0 0.0
    %3063 = vmatmul.mubr.f32.gmra.mrb[0].mxu0 %v1093
    %v3064 = vpop.f32.mrb[0].mxu0
    %v3065 = vadd.f32 %v540, %v3064
    %v3066 = vpop.f32.mrb[0].mxu0
    %3067 = vmatprep.mubr.f32.mxu0 0.0
    %3068 = vmatmul.mubr.f32.gmra.mrb[0].mxu0 %v1096
    %v3069 = vpop.f32.mrb[0].mxu0
    %v3070 = vadd.f32 %v540, %v3069
    %v3071 = vpop.f32.mrb[0].mxu0
    %3072 = vmatprep.mubr.f32.mxu0 0.0
    %3073 = vmatmul.mubr.f32.gmra.mrb[0].mxu0 %v1099
    %v3074 = vpop.f32.mrb[0].mxu0
    %v3075 = vadd.f32 %v540, %v3074
    %v3076 = vpop.f32.mrb[0].mxu0
    %3077 = vmatprep.mubr.f32.mxu0 0.0
    %3078 = vmatmul.mubr.f32.gmra.mrb[0].mxu0 %v1102
    %v3079 = vpop.f32.mrb[0].mxu0
    %v3080 = vadd.f32 %v540, %v3079
    %v3081 = vpop.f32.mrb[0].mxu0
    %3082 = vmatprep.mubr.f32.mxu0 0.0
    %3083 = vmatmul.mubr.f32.gmra.mrb[0].mxu0 %v1105
    %v3084 = vpop.f32.mrb[0].mxu0
    %v3085 = vadd.f32 %v540, %v3084
    %v3086 = vpop.f32.mrb[0].mxu0
    %3087 = vmatprep.mubr.f32.mxu0 0.0
    %3088 = vmatmul.mubr.f32.gmra.mrb[0].mxu0 %v1108
    %v3089 = vpop.f32.mrb[0].mxu0
    %v3090 = vadd.f32 %v540, %v3089
    %v3091 = vpop.f32.mrb[0].mxu0
    %3092 = vmatprep.mubr.f32.mxu0 0.0
    %3093 = vmatmul.mubr.f32.gmra.mrb[0].mxu0 %v1111
    %v3094 = vpop.f32.mrb[0].mxu0
    %v3095 = vadd.f32 %v540, %v3094
    %v3096 = vpop.f32.mrb[0].mxu0
    %3097 = vmatprep.mubr.f32.mxu0 0.0
    %3098 = vmatmul.mubr.f32.gmra.mrb[0].mxu0 %v1114
    %v3099 = vpop.f32.mrb[0].mxu0
    %v3100 = vadd.f32 %v540, %v3099
    %v3101 = vpop.f32.mrb[0].mxu0
    %3102 = vmatprep.mubr.f32.mxu0 0.0
    %3103 = vmatmul.mubr.f32.gmra.mrb[0].mxu0 %v1117
    %v3104 = vpop.f32.mrb[0].mxu0
    %v3105 = vadd.f32 %v540, %v3104
    %v3106 = vpop.f32.mrb[0].mxu0
    %3107 = vmatprep.mubr.f32.mxu0 0.0
    %3108 = vmatmul.mubr.f32.gmra.mrb[0].mxu0 %v1120
    %v3109 = vpop.f32.mrb[0].mxu0
    %v3110 = vadd.f32 %v540, %v3109
    %v3111 = vpop.f32.mrb[0].mxu0
    %3112 = vmatprep.mubr.f32.mxu0 0.0
    %3113 = vmatmul.mubr.f32.gmra.mrb[0].mxu0 %v1123
    %v3114 = vpop.f32.mrb[0].mxu0
    %v3115 = vadd.f32 %v540, %v3114
    %v3116 = vpop.f32.mrb[0].mxu0
    %3117 = vmatprep.mubr.f32.mxu0 0.0
    %3118 = vmatmul.mubr.f32.gmra.mrb[0].mxu0 %v1126
    %v3119 = vpop.f32.mrb[0].mxu0
    %v3120 = vadd.f32 %v540, %v3119
    %v3121 = vpop.f32.mrb[0].mxu0
    %3122 = vmatprep.mubr.f32.mxu0 0.0
    %3123 = vmatmul.mubr.f32.gmra.mrb[0].mxu0 %v1129
    %v3124 = vpop.f32.mrb[0].mxu0
    %v3125 = vadd.f32 %v540, %v3124
    %v3126 = vpop.f32.mrb[0].mxu0
    %3127 = vmatprep.mubr.f32.mxu0 0.0
    %3128 = vmatmul.mubr.f32.gmra.mrb[0].mxu0 %v1132
    %v3129 = vpop.f32.mrb[0].mxu0
    %v3130 = vadd.f32 %v540, %v3129
    %v3131 = vpop.f32.mrb[0].mxu0
    %3132 = vmatprep.mubr.f32.mxu0 0.0
    %3133 = vmatmul.mubr.f32.gmra.mrb[0].mxu0 %v1135
    %v3134 = vpop.f32.mrb[0].mxu0
    %v3135 = vadd.f32 %v540, %v3134
    %v3136 = vpop.f32.mrb[0].mxu0
    %3137 = vmatprep.mubr.f32.mxu0 0.0
    %3138 = vmatmul.mubr.f32.gmra.mrb[0].mxu0 %v1138
    %v3139 = vpop.f32.mrb[0].mxu0
    %v3140 = vadd.f32 %v540, %v3139
    %v3141 = vpop.f32.mrb[0].mxu0
    %3142 = vmatprep.mubr.f32.mxu0 0.0
    %3143 = vmatmul.mubr.f32.gmra.mrb[0].mxu0 %v1141
    %v3144 = vpop.f32.mrb[0].mxu0
    %v3145 = vadd.f32 %v540, %v3144
    %v3146 = vpop.f32.mrb[0].mxu0
    %3147 = vmatprep.mubr.f32.mxu0 0.0
    %3148 = vmatmul.mubr.f32.gmra.mrb[0].mxu0 %v1144
    %v3149 = vpop.f32.mrb[0].mxu0
    %v3150 = vadd.f32 %v540, %v3149
    %v3151 = vpop.f32.mrb[0].mxu0
    %3152 = vmatprep.mubr.f32.mxu0 0.0
    %3153 = vmatmul.mubr.f32.gmra.mrb[0].mxu0 %v1147
    %v3154 = vpop.f32.mrb[0].mxu0
    %v3155 = vadd.f32 %v540, %v3154
    %v3156 = vpop.f32.mrb[0].mxu0
    %3157 = vmatprep.mubr.f32.mxu0 0.0
    %3158 = vmatmul.mubr.f32.gmra.mrb[0].mxu0 %v1150
    %v3159 = vpop.f32.mrb[0].mxu0
    %v3160 = vadd.f32 %v540, %v3159
    %v3161 = vpop.f32.mrb[0].mxu0
    %3162 = vmatprep.mubr.f32.mxu0 0.0
    %3163 = vmatmul.mubr.f32.gmra.mrb[0].mxu0 %v1153
    %v3164 = vpop.f32.mrb[0].mxu0
    %v3165 = vadd.f32 %v540, %v3164
    %v3166 = vpop.f32.mrb[0].mxu0
    %3167 = vmatprep.mubr.f32.mxu0 0.0
    %3168 = vmatmul.mubr.f32.gmra.mrb[0].mxu0 %v1156
    %v3169 = vpop.f32.mrb[0].mxu0
    %v3170 = vadd.f32 %v540, %v3169
    %v3171 = vpop.f32.mrb[0].mxu0
    %3172 = vmatprep.mubr.f32.mxu0 0.0
    %3173 = vmatmul.mubr.f32.gmra.mrb[0].mxu0 %v1159
    %v3174 = vpop.f32.mrb[0].mxu0
    %v3175 = vadd.f32 %v540, %v3174
    %v3176 = vpop.f32.mrb[0].mxu0
    %3177 = vmatprep.mubr.f32.mxu0 0.0
    %3178 = vmatmul.mubr.f32.gmra.mrb[0].mxu0 %v1162
    %v3179 = vpop.f32.mrb[0].mxu0
    %v3180 = vadd.f32 %v540, %v3179
    %v3181 = vpop.f32.mrb[0].mxu0
    %3182 = vmatprep.mubr.f32.mxu0 0.0
    %3183 = vmatmul.mubr.f32.gmra.mrb[0].mxu0 %v1165
    %v3184 = vpop.f32.mrb[0].mxu0
    %v3185 = vadd.f32 %v540, %v3184
    %v3186 = vpop.f32.mrb[0].mxu0
    %3187 = vmatprep.mubr.f32.mxu0 0.0
    %3188 = vmatmul.mubr.f32.gmra.mrb[0].mxu0 %v1168
    %v3189 = vpop.f32.mrb[0].mxu0
    %v3190 = vadd.f32 %v540, %v3189
    %v3191 = vpop.f32.mrb[0].mxu0
    %3192 = vmatprep.mubr.f32.mxu0 0.0
    %3193 = vmatmul.mubr.f32.gmra.mrb[0].mxu0 %v1171
    %v3194 = vpop.f32.mrb[0].mxu0
    %v3195 = vadd.f32 %v540, %v3194
    %v3196 = vpop.f32.mrb[0].mxu0
    %3197 = vmatprep.mubr.f32.mxu0 0.0
    %3198 = vmatmul.mubr.f32.gmra.mrb[0].mxu0 %v1174
    %v3199 = vpop.f32.mrb[0].mxu0
    %v3200 = vadd.f32 %v540, %v3199
    %v3201 = vpop.f32.mrb[0].mxu0
    %3202 = vmatprep.mubr.f32.mxu0 0.0
    %3203 = vmatmul.mubr.f32.gmra.mrb[0].mxu0 %v1177
    %v3204 = vpop.f32.mrb[0].mxu0
    %v3205 = vadd.f32 %v540, %v3204
    %v3206 = vpop.f32.mrb[0].mxu0
    %3207 = vmatprep.mubr.f32.mxu0 0.0
    %3208 = vmatmul.mubr.f32.gmra.mrb[0].mxu0 %v1180
    %v3209 = vpop.f32.mrb[0].mxu0
    %v3210 = vadd.f32 %v540, %v3209
    %v3211 = vpop.f32.mrb[0].mxu0
    %3212 = vmatprep.mubr.f32.mxu0 0.0
    %3213 = vmatmul.mubr.f32.gmra.mrb[0].mxu0 %v1183
    %v3214 = vpop.f32.mrb[0].mxu0
    %v3215 = vadd.f32 %v540, %v3214
    %v3216 = vpop.f32.mrb[0].mxu0
    %3217 = vmatprep.mubr.f32.mxu0 0.0
    %3218 = vmatmul.mubr.f32.gmra.mrb[0].mxu0 %v1186
    %v3219 = vpop.f32.mrb[0].mxu0
    %v3220 = vadd.f32 %v540, %v3219
    %v3221 = vpop.f32.mrb[0].mxu0
    %3222 = vmatprep.mubr.f32.mxu0 0.0
    %3223 = vmatmul.mubr.f32.gmra.mrb[0].mxu0 %v1189
    %v3224 = vpop.f32.mrb[0].mxu0
    %v3225 = vadd.f32 %v540, %v3224
    %v3226 = vpop.f32.mrb[0].mxu0
    %3227 = vmatprep.mubr.f32.mxu0 0.0
    %3228 = vmatmul.mubr.f32.gmra.mrb[0].mxu0 %v1192
    %v3229 = vpop.f32.mrb[0].mxu0
    %v3230 = vadd.f32 %v540, %v3229
    %v3231 = vpop.f32.mrb[0].mxu0
    %3232 = vmatprep.mubr.f32.mxu0 0.0
    %3233 = vmatmul.mubr.f32.gmra.mrb[0].mxu0 %v1195
    %v3234 = vpop.f32.mrb[0].mxu0
    %v3235 = vadd.f32 %v540, %v3234
    %v3236 = vpop.f32.mrb[0].mxu0
    %3237 = vmatprep.mubr.f32.mxu0 0.0
    %3238 = vmatmul.mubr.f32.gmra.mrb[0].mxu0 %v1198
    %v3239 = vpop.f32.mrb[0].mxu0
    %v3240 = vadd.f32 %v540, %v3239
    %v3241 = vpop.f32.mrb[0].mxu0
    %3242 = vmatprep.mubr.f32.mxu0 0.0
    %3243 = vmatmul.mubr.f32.gmra.mrb[0].mxu0 %v1201
    %v3244 = vpop.f32.mrb[0].mxu0
    %v3245 = vadd.f32 %v540, %v3244
    %v3246 = vpop.f32.mrb[0].mxu0
    %3247 = vmatprep.mubr.f32.mxu0 0.0
    %3248 = vmatmul.mubr.f32.gmra.mrb[0].mxu0 %v1204
    %v3249 = vpop.f32.mrb[0].mxu0
    %v3250 = vadd.f32 %v540, %v3249
    %v3251 = vpop.f32.mrb[0].mxu0
    %3252 = vmatprep.mubr.f32.mxu0 0.0
    %3253 = vmatmul.mubr.f32.gmra.mrb[0].mxu0 %v1207
    %v3254 = vpop.f32.mrb[0].mxu0
    %v3255 = vadd.f32 %v540, %v3254
    %v3256 = vpop.f32.mrb[0].mxu0
    %3257 = vmatprep.mubr.f32.mxu0 0.0
    %3258 = vmatmul.mubr.f32.gmra.mrb[0].mxu0 %v1210
    %v3259 = vpop.f32.mrb[0].mxu0
    %v3260 = vadd.f32 %v540, %v3259
    %v3261 = vpop.f32.mrb[0].mxu0
    %3262 = vmatprep.mubr.f32.mxu0 0.0
    %3263 = vmatmul.mubr.f32.gmra.mrb[0].mxu0 %v1213
    %v3264 = vpop.f32.mrb[0].mxu0
    %v3265 = vadd.f32 %v540, %v3264
    %v3266 = vpop.f32.mrb[0].mxu0
    %3267 = vmatprep.mubr.f32.mxu0 0.0
    %3268 = vmatmul.mubr.f32.gmra.mrb[0].mxu0 %v1216
    %v3269 = vpop.f32.mrb[0].mxu0
    %v3270 = vadd.f32 %v540, %v3269
    %v3271 = vpop.f32.mrb[0].mxu0
    %3272 = vmatprep.mubr.f32.mxu0 0.0
    %3273 = vmatmul.mubr.f32.gmra.mrb[0].mxu0 %v1219
    %v3274 = vpop.f32.mrb[0].mxu0
    %v3275 = vadd.f32 %v540, %v3274
    %v3276 = vpop.f32.mrb[0].mxu0
    %3277 = vmatprep.mubr.f32.mxu0 0.0
    %3278 = vmatmul.mubr.f32.gmra.mrb[0].mxu0 %v1222
    %v3279 = vpop.f32.mrb[0].mxu0
    %v3280 = vadd.f32 %v540, %v3279
    %v3281 = vpop.f32.mrb[0].mxu0
    %3282 = vmatprep.mubr.f32.mxu0 0.0
    %3283 = vmatmul.mubr.f32.gmra.mrb[0].mxu0 %v1225
    %v3284 = vpop.f32.mrb[0].mxu0
    %v3285 = vadd.f32 %v540, %v3284
    %v3286 = vpop.f32.mrb[0].mxu0
    %3287 = vmatprep.mubr.f32.mxu0 0.0
    %3288 = vmatmul.mubr.f32.gmra.mrb[0].mxu0 %v1228
    %v3289 = vpop.f32.mrb[0].mxu0
    %v3290 = vadd.f32 %v540, %v3289
    %v3291 = vpop.f32.mrb[0].mxu0
    %3292 = vmatprep.mubr.f32.mxu0 0.0
    %3293 = vmatmul.mubr.f32.gmra.mrb[0].mxu0 %v1231
    %v3294 = vpop.f32.mrb[0].mxu0
    %v3295 = vadd.f32 %v540, %v3294
    %v3296 = vpop.f32.mrb[0].mxu0
    %3297 = vmatprep.mubr.f32.mxu0 0.0
    %3298 = vmatmul.mubr.f32.gmra.mrb[0].mxu0 %v1234
    %v3299 = vpop.f32.mrb[0].mxu0
    %v3300 = vadd.f32 %v540, %v3299
    %v3301 = vpop.f32.mrb[0].mxu0
    %3302 = vmatprep.mubr.f32.mxu0 0.0
    %3303 = vmatmul.mubr.f32.gmra.mrb[0].mxu0 %v1237
    %v3304 = vpop.f32.mrb[0].mxu0
    %v3305 = vadd.f32 %v540, %v3304
    %v3306 = vpop.f32.mrb[0].mxu0
    %3307 = vmatprep.mubr.f32.mxu0 0.0
    %3308 = vmatmul.mubr.f32.gmra.mrb[0].mxu0 %v1240
    %v3309 = vpop.f32.mrb[0].mxu0
    %v3310 = vadd.f32 %v540, %v3309
    %v3311 = vpop.f32.mrb[0].mxu0
    %3312 = vmatprep.mubr.f32.mxu0 0.0
    %3313 = vmatmul.mubr.f32.gmra.mrb[0].mxu0 %v1243
    %v3314 = vpop.f32.mrb[0].mxu0
    %v3315 = vadd.f32 %v540, %v3314
    %v3316 = vpop.f32.mrb[0].mxu0
    %3317 = vmatprep.mubr.f32.mxu0 0.0
    %3318 = vmatmul.mubr.f32.gmra.mrb[0].mxu0 %v1246
    %v3319 = vpop.f32.mrb[0].mxu0
    %v3320 = vadd.f32 %v540, %v3319
    %v3321 = vpop.f32.mrb[0].mxu0
    %3322 = vmatprep.mubr.f32.mxu0 0.0
    %3323 = vmatmul.mubr.f32.gmra.mrb[0].mxu0 %v1249
    %v3324 = vpop.f32.mrb[0].mxu0
    %v3325 = vadd.f32 %v540, %v3324
    %v3326 = vpop.f32.mrb[0].mxu0
    %3327 = vmatprep.mubr.f32.mxu0 0.0
    %3328 = vmatmul.mubr.f32.gmra.mrb[0].mxu0 %v1252
    %v3329 = vpop.f32.mrb[0].mxu0
    %v3330 = vadd.f32 %v540, %v3329
    %v3331 = vpop.f32.mrb[0].mxu0
    %3332 = vmatprep.mubr.f32.mxu0 0.0
    %3333 = vmatmul.mubr.f32.gmra.mrb[0].mxu0 %v1255
    %v3334 = vpop.f32.mrb[0].mxu0
    %v3335 = vadd.f32 %v540, %v3334
    %v3336 = vpop.f32.mrb[0].mxu0
    %3337 = vmatprep.mubr.f32.mxu0 0.0
    %3338 = vmatmul.mubr.f32.gmra.mrb[0].mxu0 %v1258
    %v3339 = vpop.f32.mrb[0].mxu0
    %v3340 = vadd.f32 %v540, %v3339
    %v3341 = vpop.f32.mrb[0].mxu0
    %3342 = vmatprep.mubr.f32.mxu0 0.0
    %3343 = vmatmul.mubr.f32.gmra.mrb[0].mxu0 %v1261
    %v3344 = vpop.f32.mrb[0].mxu0
    %v3345 = vadd.f32 %v540, %v3344
    %v3346 = vpop.f32.mrb[0].mxu0
    %3347 = vmatprep.mubr.f32.mxu0 0.0
    %3348 = vmatmul.mubr.f32.gmra.mrb[0].mxu0 %v1264
    %v3349 = vpop.f32.mrb[0].mxu0
    %v3350 = vadd.f32 %v540, %v3349
    %v3351 = vpop.f32.mrb[0].mxu0
    %3352 = vmatprep.mubr.f32.mxu0 0.0
    %3353 = vmatmul.mubr.f32.gmra.mrb[0].mxu0 %v1267
    %v3354 = vpop.f32.mrb[0].mxu0
    %v3355 = vadd.f32 %v540, %v3354
    %v3356 = vpop.f32.mrb[0].mxu0
    %3357 = vmatprep.mubr.f32.mxu0 0.0
    %3358 = vmatmul.mubr.f32.gmra.mrb[0].mxu0 %v1270
    %v3359 = vpop.f32.mrb[0].mxu0
    %v3360 = vadd.f32 %v540, %v3359
    %v3361 = vpop.f32.mrb[0].mxu0
    %3362 = vmatprep.mubr.f32.mxu0 0.0
    %3363 = vmatmul.mubr.f32.gmra.mrb[0].mxu0 %v1273
    %v3364 = vpop.f32.mrb[0].mxu0
    %v3365 = vadd.f32 %v540, %v3364
    %v3366 = vpop.f32.mrb[0].mxu0
    %3367 = vmatprep.mubr.f32.mxu0 0.0
    %3368 = vmatmul.mubr.f32.gmra.mrb[0].mxu0 %v1276
    %v3369 = vpop.f32.mrb[0].mxu0
    %v3370 = vadd.f32 %v540, %v3369
    %v3371 = vpop.f32.mrb[0].mxu0
    %3372 = vmatprep.mubr.f32.mxu0 0.0
    %3373 = vmatmul.mubr.f32.gmra.mrb[0].mxu0 %v1279
    %v3374 = vpop.f32.mrb[0].mxu0
    %v3375 = vadd.f32 %v540, %v3374
    %v3376 = vpop.f32.mrb[0].mxu0
    %3377 = vmatprep.mubr.f32.mxu0 0.0
    %3378 = vmatmul.mubr.f32.gmra.mrb[0].mxu0 %v1282
    %v3379 = vpop.f32.mrb[0].mxu0
    %v3380 = vadd.f32 %v540, %v3379
    %v3381 = vpop.f32.mrb[0].mxu0
    %3382 = vmatprep.mubr.f32.mxu0 0.0
    %3383 = vmatmul.mubr.f32.gmra.mrb[0].mxu0 %v1285
    %v3384 = vpop.f32.mrb[0].mxu0
    %v3385 = vadd.f32 %v540, %v3384
    %v3386 = vpop.f32.mrb[0].mxu0
    %3387 = vmatprep.mubr.f32.mxu0 0.0
    %3388 = vmatmul.mubr.f32.gmra.mrb[0].mxu0 %v1288
    %v3389 = vpop.f32.mrb[0].mxu0
    %v3390 = vadd.f32 %v540, %v3389
    %v3391 = vpop.f32.mrb[0].mxu0
    %3392 = vmatprep.mubr.f32.mxu0 0.0
    %3393 = vmatmul.mubr.f32.gmra.mrb[0].mxu0 %v1291
    %v3394 = vpop.f32.mrb[0].mxu0
    %v3395 = vadd.f32 %v540, %v3394
    %v3396 = vpop.f32.mrb[0].mxu0
    %3397 = vmatprep.mubr.f32.mxu0 0.0
    %3398 = vmatmul.mubr.f32.gmra.mrb[0].mxu0 %v1294
    %v3399 = vpop.f32.mrb[0].mxu0
    %v3400 = vadd.f32 %v540, %v3399
    %v3401 = vpop.f32.mrb[0].mxu0
    %3402 = vmatprep.mubr.f32.mxu0 0.0
    %3403 = vmatmul.mubr.f32.gmra.mrb[0].mxu0 %v1297
    %v3404 = vpop.f32.mrb[0].mxu0
    %v3405 = vadd.f32 %v540, %v3404
    %v3406 = vpop.f32.mrb[0].mxu0
    %3407 = vmatprep.mubr.f32.mxu0 0.0
    %3408 = vmatmul.mubr.f32.gmra.mrb[0].mxu0 %v1300
    %v3409 = vpop.f32.mrb[0].mxu0
    %v3410 = vadd.f32 %v540, %v3409
    %v3411 = vpop.f32.mrb[0].mxu0
    %3412 = vmatprep.mubr.f32.mxu0 0.0
    %3413 = vmatmul.mubr.f32.gmra.mrb[0].mxu0 %v1303
    %v3414 = vpop.f32.mrb[0].mxu0
    %v3415 = vadd.f32 %v540, %v3414
    %v3416 = vpop.f32.mrb[0].mxu0
    %3417 = vmatprep.mubr.f32.mxu0 0.0
    %3418 = vmatmul.mubr.f32.gmra.mrb[0].mxu0 %v1306
    %v3419 = vpop.f32.mrb[0].mxu0
    %v3420 = vadd.f32 %v540, %v3419
    %v3421 = vpop.f32.mrb[0].mxu0
    %3422 = vmatprep.mubr.f32.mxu0 0.0
    %3423 = vmatmul.mubr.f32.gmra.mrb[0].mxu0 %v1309
    %v3424 = vpop.f32.mrb[0].mxu0
    %v3425 = vadd.f32 %v540, %v3424
    %v3426 = vpop.f32.mrb[0].mxu0
    %3427 = vmatprep.mubr.f32.mxu0 0.0
    %3428 = vmatmul.mubr.f32.gmra.mrb[0].mxu0 %v1312
    %v3429 = vpop.f32.mrb[0].mxu0
    %v3430 = vadd.f32 %v540, %v3429
    %v3431 = vpop.f32.mrb[0].mxu0
    %3432 = vmatprep.mubr.f32.mxu0 0.0
    %3433 = vmatmul.mubr.f32.gmra.mrb[0].mxu0 %v1315
    %v3434 = vpop.f32.mrb[0].mxu0
    %v3435 = vadd.f32 %v540, %v3434
    %v3436 = vpop.f32.mrb[0].mxu0
    %3437 = vmatprep.mubr.f32.mxu0 0.0
    %3438 = vmatmul.mubr.f32.gmra.mrb[0].mxu0 %v1318
    %v3439 = vpop.f32.mrb[0].mxu0
    %v3440 = vadd.f32 %v540, %v3439
    %v3441 = vpop.f32.mrb[0].mxu0
    %3442 = vmatprep.mubr.f32.mxu0 0.0
    %3443 = vmatmul.mubr.f32.gmra.mrb[0].mxu0 %v1321
    %v3444 = vpop.f32.mrb[0].mxu0
    %v3445 = vadd.f32 %v540, %v3444
    %v3446 = vpop.f32.mrb[0].mxu0
    %3447 = vmatprep.mubr.f32.mxu0 0.0
    %3448 = vmatmul.mubr.f32.gmra.mrb[0].mxu0 %v1324
    %v3449 = vpop.f32.mrb[0].mxu0
    %v3450 = vadd.f32 %v540, %v3449
    %v3451 = vpop.f32.mrb[0].mxu0
    %3452 = vmatprep.mubr.f32.mxu0 0.0
    %3453 = vmatmul.mubr.f32.gmra.mrb[0].mxu0 %v1327
    %v3454 = vpop.f32.mrb[0].mxu0
    %v3455 = vadd.f32 %v540, %v3454
    %v3456 = vpop.f32.mrb[0].mxu0
    %3457 = vmatprep.mubr.f32.mxu0 0.0
    %3458 = vmatmul.mubr.f32.gmra.mrb[0].mxu0 %v1330
    %v3459 = vpop.f32.mrb[0].mxu0
    %v3460 = vadd.f32 %v540, %v3459
    %v3461 = vpop.f32.mrb[0].mxu0
    %3462 = vmatprep.mubr.f32.mxu0 0.0
    %3463 = vmatmul.mubr.f32.gmra.mrb[0].mxu0 %v1333
    %v3464 = vpop.f32.mrb[0].mxu0
    %v3465 = vadd.f32 %v540, %v3464
    %v3466 = vpop.f32.mrb[0].mxu0
    %3467 = vmatprep.mubr.f32.mxu0 0.0
    %3468 = vmatmul.mubr.f32.gmra.mrb[0].mxu0 %v1336
    %v3469 = vpop.f32.mrb[0].mxu0
    %v3470 = vadd.f32 %v540, %v3469
    %v3471 = vpop.f32.mrb[0].mxu0
    %3472 = vmatprep.mubr.f32.mxu0 0.0
    %3473 = vmatmul.mubr.f32.gmra.mrb[0].mxu0 %v1339
    %v3474 = vpop.f32.mrb[0].mxu0
    %v3475 = vadd.f32 %v540, %v3474
    %v3476 = vpop.f32.mrb[0].mxu0
    %3477 = vmatprep.mubr.f32.mxu0 0.0
    %3478 = vmatmul.mubr.f32.gmra.mrb[0].mxu0 %v1342
    %v3479 = vpop.f32.mrb[0].mxu0
    %v3480 = vadd.f32 %v540, %v3479
    %v3481 = vpop.f32.mrb[0].mxu0
    %3482 = vmatprep.mubr.f32.mxu0 0.0
    %3483 = vmatmul.mubr.f32.gmra.mrb[0].mxu0 %v1345
    %v3484 = vpop.f32.mrb[0].mxu0
    %v3485 = vadd.f32 %v540, %v3484
    %v3486 = vpop.f32.mrb[0].mxu0
    %3487 = vmatprep.mubr.f32.mxu0 0.0
    %3488 = vmatmul.mubr.f32.gmra.mrb[0].mxu0 %v1348
    %v3489 = vpop.f32.mrb[0].mxu0
    %v3490 = vadd.f32 %v540, %v3489
    %v3491 = vpop.f32.mrb[0].mxu0
    %3492 = vmatprep.mubr.f32.mxu0 0.0
    %3493 = vmatmul.mubr.f32.gmra.mrb[0].mxu0 %v1351
    %v3494 = vpop.f32.mrb[0].mxu0
    %v3495 = vadd.f32 %v540, %v3494
    %v3496 = vpop.f32.mrb[0].mxu0
    %3497 = vmatprep.mubr.f32.mxu0 0.0
    %3498 = vmatmul.mubr.f32.gmra.mrb[0].mxu0 %v1354
    %v3499 = vpop.f32.mrb[0].mxu0
    %v3500 = vadd.f32 %v540, %v3499
    %v3501 = vpop.f32.mrb[0].mxu0
    %3502 = vmatprep.mubr.f32.mxu0 0.0
    %3503 = vmatmul.mubr.f32.gmra.mrb[0].mxu0 %v1357
    %v3504 = vpop.f32.mrb[0].mxu0
    %v3505 = vadd.f32 %v540, %v3504
    %v3506 = vpop.f32.mrb[0].mxu0
    %3507 = vmatprep.mubr.f32.mxu0 0.0
    %3508 = vmatmul.mubr.f32.gmra.mrb[0].mxu0 %v1360
    %v3509 = vpop.f32.mrb[0].mxu0
    %v3510 = vadd.f32 %v540, %v3509
    %v3511 = vpop.f32.mrb[0].mxu0
    %3512 = vmatprep.mubr.f32.mxu0 0.0
    %3513 = vmatmul.mubr.f32.gmra.mrb[0].mxu0 %v1363
    %v3514 = vpop.f32.mrb[0].mxu0
    %v3515 = vadd.f32 %v540, %v3514
    %v3516 = vpop.f32.mrb[0].mxu0
    %3517 = vmatprep.mubr.f32.mxu0 0.0
    %3518 = vmatmul.mubr.f32.gmra.mrb[0].mxu0 %v1366
    %v3519 = vpop.f32.mrb[0].mxu0
    %v3520 = vadd.f32 %v540, %v3519
    %v3521 = vpop.f32.mrb[0].mxu0
    %3522 = vmatprep.mubr.f32.mxu0 0.0
    %3523 = vmatmul.mubr.f32.gmra.mrb[0].mxu0 %v1369
    %v3524 = vpop.f32.mrb[0].mxu0
    %v3525 = vadd.f32 %v540, %v3524
    %v3526 = vpop.f32.mrb[0].mxu0
    %3527 = vmatprep.mubr.f32.mxu0 0.0
    %3528 = vmatmul.mubr.f32.gmra.mrb[0].mxu0 %v1372
    %v3529 = vpop.f32.mrb[0].mxu0
    %v3530 = vadd.f32 %v540, %v3529
    %v3531 = vpop.f32.mrb[0].mxu0
    %3532 = vmatprep.mubr.f32.mxu0 0.0
    %3533 = vmatmul.mubr.f32.gmra.mrb[0].mxu0 %v1375
    %v3534 = vpop.f32.mrb[0].mxu0
    %v3535 = vadd.f32 %v540, %v3534
    %v3536 = vpop.f32.mrb[0].mxu0
    %3537 = vmatprep.mubr.f32.mxu0 0.0
    %3538 = vmatmul.mubr.f32.gmra.mrb[0].mxu0 %v1378
    %v3539 = vpop.f32.mrb[0].mxu0
    %v3540 = vadd.f32 %v540, %v3539
    %v3541 = vpop.f32.mrb[0].mxu0
    %3542 = vmatprep.mubr.f32.mxu0 0.0
    %3543 = vmatmul.mubr.f32.gmra.mrb[0].mxu0 %v1381
    %v3544 = vpop.f32.mrb[0].mxu0
    %v3545 = vadd.f32 %v540, %v3544
    %v3546 = vpop.f32.mrb[0].mxu0
    %3547 = vmatprep.mubr.f32.mxu0 0.0
    %3548 = vmatmul.mubr.f32.gmra.mrb[0].mxu0 %v1384
    %v3549 = vpop.f32.mrb[0].mxu0
    %v3550 = vadd.f32 %v540, %v3549
    %v3551 = vpop.f32.mrb[0].mxu0
    %3552 = vmatprep.mubr.f32.mxu0 0.0
    %3553 = vmatmul.mubr.f32.gmra.mrb[0].mxu0 %v1387
    %v3554 = vpop.f32.mrb[0].mxu0
    %v3555 = vadd.f32 %v540, %v3554
    %v3556 = vpop.f32.mrb[0].mxu0
    %3557 = vmatprep.mubr.f32.mxu0 0.0
    %3558 = vmatmul.mubr.f32.gmra.mrb[0].mxu0 %v1390
    %v3559 = vpop.f32.mrb[0].mxu0
    %v3560 = vadd.f32 %v540, %v3559
    %v3561 = vpop.f32.mrb[0].mxu0
    %3562 = vmatprep.mubr.f32.mxu0 0.0
    %3563 = vmatmul.mubr.f32.gmra.mrb[0].mxu0 %v1393
    %v3564 = vpop.f32.mrb[0].mxu0
    %v3565 = vadd.f32 %v540, %v3564
    %v3566 = vpop.f32.mrb[0].mxu0
    %3567 = vmatprep.mubr.f32.mxu0 0.0
    %3568 = vmatmul.mubr.f32.gmra.mrb[0].mxu0 %v1396
    %v3569 = vpop.f32.mrb[0].mxu0
    %v3570 = vadd.f32 %v540, %v3569
    %v3571 = vpop.f32.mrb[0].mxu0
    %3572 = vmatprep.mubr.f32.mxu0 0.0
    %3573 = vmatmul.mubr.f32.gmra.mrb[0].mxu0 %v1399
    %v3574 = vpop.f32.mrb[0].mxu0
    %v3575 = vadd.f32 %v540, %v3574
    %v3576 = vpop.f32.mrb[0].mxu0
    %3577 = vmatprep.mubr.f32.mxu0 0.0
    %3578 = vmatmul.mubr.f32.gmra.mrb[0].mxu0 %v1402
    %v3579 = vpop.f32.mrb[0].mxu0
    %v3580 = vadd.f32 %v540, %v3579
    %v3581 = vpop.f32.mrb[0].mxu0
    %3582 = vmatprep.mubr.f32.mxu0 0.0
    %3583 = vmatmul.mubr.f32.gmra.mrb[0].mxu0 %v1405
    %v3584 = vpop.f32.mrb[0].mxu0
    %v3585 = vadd.f32 %v540, %v3584
    %v3586 = vpop.f32.mrb[0].mxu0
    %3587 = vmatprep.mubr.f32.mxu0 0.0
    %3588 = vmatmul.mubr.f32.gmra.mrb[0].mxu0 %v1408
    %v3589 = vpop.f32.mrb[0].mxu0
    %v3590 = vadd.f32 %v540, %v3589
    %v3591 = vpop.f32.mrb[0].mxu0
    %3592 = vmatprep.mubr.f32.mxu0 0.0
    %3593 = vmatmul.mubr.f32.gmra.mrb[0].mxu0 %v1411
    %v3594 = vpop.f32.mrb[0].mxu0
    %v3595 = vadd.f32 %v540, %v3594
    %v3596 = vpop.f32.mrb[0].mxu0
    %3597 = vmatprep.mubr.f32.mxu0 0.0
    %3598 = vmatmul.mubr.f32.gmra.mrb[0].mxu0 %v1414
    %v3599 = vpop.f32.mrb[0].mxu0
    %v3600 = vadd.f32 %v540, %v3599
    %v3601 = vpop.f32.mrb[0].mxu0
    %3602 = vmatprep.mubr.f32.mxu0 0.0
    %3603 = vmatmul.mubr.f32.gmra.mrb[0].mxu0 %v1417
    %v3604 = vpop.f32.mrb[0].mxu0
    %v3605 = vadd.f32 %v540, %v3604
    %v3606 = vpop.f32.mrb[0].mxu0
    %3607 = vmatprep.mubr.f32.mxu0 0.0
    %3608 = vmatmul.mubr.f32.gmra.mrb[0].mxu0 %v1420
    %v3609 = vpop.f32.mrb[0].mxu0
    %v3610 = vadd.f32 %v540, %v3609
    %v3611 = vpop.f32.mrb[0].mxu0
    %3612 = vmatprep.mubr.f32.mxu0 0.0
    %3613 = vmatmul.mubr.f32.gmra.mrb[0].mxu0 %v1423
    %v3614 = vpop.f32.mrb[0].mxu0
    %v3615 = vadd.f32 %v540, %v3614
    %v3616 = vpop.f32.mrb[0].mxu0
    %3617 = vmatprep.mubr.f32.mxu0 0.0
    %3618 = vmatmul.mubr.f32.gmra.mrb[0].mxu0 %v1426
    %v3619 = vpop.f32.mrb[0].mxu0
    %v3620 = vadd.f32 %v540, %v3619
    %v3621 = vpop.f32.mrb[0].mxu0
    %3622 = vmatprep.mubr.f32.mxu0 0.0
    %3623 = vmatmul.mubr.f32.gmra.mrb[0].mxu0 %v1429
    %v3624 = vpop.f32.mrb[0].mxu0
    %v3625 = vadd.f32 %v540, %v3624
    %v3626 = vpop.f32.mrb[0].mxu0
    %3627 = vmatprep.mubr.f32.mxu0 0.0
    %3628 = vmatmul.mubr.f32.gmra.mrb[0].mxu0 %v1432
    %v3629 = vpop.f32.mrb[0].mxu0
    %v3630 = vadd.f32 %v540, %v3629
    %v3631 = vpop.f32.mrb[0].mxu0
    %3632 = vmatprep.mubr.f32.mxu0 0.0
    %3633 = vmatmul.mubr.f32.gmra.mrb[0].mxu0 %v1435
    %v3634 = vpop.f32.mrb[0].mxu0
    %v3635 = vadd.f32 %v540, %v3634
    %v3636 = vpop.f32.mrb[0].mxu0
    %3637 = vmatprep.mubr.f32.mxu0 0.0
    %3638 = vmatmul.mubr.f32.gmra.mrb[0].mxu0 %v1438
    %v3639 = vpop.f32.mrb[0].mxu0
    %v3640 = vadd.f32 %v540, %v3639
    %v3641 = vpop.f32.mrb[0].mxu0
    %3642 = vmatprep.mubr.f32.mxu0 0.0
    %3643 = vmatmul.mubr.f32.gmra.mrb[0].mxu0 %v1441
    %v3644 = vpop.f32.mrb[0].mxu0
    %v3645 = vadd.f32 %v540, %v3644
    %v3646 = vpop.f32.mrb[0].mxu0
    %3647 = vmatprep.mubr.f32.mxu0 0.0
    %3648 = vmatmul.mubr.f32.gmra.mrb[0].mxu0 %v1444
    %v3649 = vpop.f32.mrb[0].mxu0
    %v3650 = vadd.f32 %v540, %v3649
    %v3651 = vpop.f32.mrb[0].mxu0
    %3652 = vmatprep.mubr.f32.mxu0 0.0
    %3653 = vmatmul.mubr.f32.gmra.mrb[0].mxu0 %v1447
    %v3654 = vpop.f32.mrb[0].mxu0
    %v3655 = vadd.f32 %v540, %v3654
    %v3656 = vpop.f32.mrb[0].mxu0
    %3657 = vmatprep.mubr.f32.mxu0 0.0
    %3658 = vmatmul.mubr.f32.gmra.mrb[0].mxu0 %v1450
    %v3659 = vpop.f32.mrb[0].mxu0
    %v3660 = vadd.f32 %v540, %v3659
    %v3661 = vpop.f32.mrb[0].mxu0
    %3662 = vmatprep.mubr.f32.mxu0 0.0
    %3663 = vmatmul.mubr.f32.gmra.mrb[0].mxu0 %v1453
    %v3664 = vpop.f32.mrb[0].mxu0
    %v3665 = vadd.f32 %v540, %v3664
    %v3666 = vpop.f32.mrb[0].mxu0
    %3667 = vmatprep.mubr.f32.mxu0 0.0
    %3668 = vmatmul.mubr.f32.gmra.mrb[0].mxu0 %v1456
    %v3669 = vpop.f32.mrb[0].mxu0
    %v3670 = vadd.f32 %v540, %v3669
    %v3671 = vpop.f32.mrb[0].mxu0
    %3672 = vmatprep.mubr.f32.mxu0 0.0
    %3673 = vmatmul.mubr.f32.gmra.mrb[0].mxu0 %v1459
    %v3674 = vpop.f32.mrb[0].mxu0
    %v3675 = vadd.f32 %v540, %v3674
    %v3676 = vpop.f32.mrb[0].mxu0
    %3677 = vmatprep.mubr.f32.mxu0 0.0
    %3678 = vmatmul.mubr.f32.gmra.mrb[0].mxu0 %v1462
    %v3679 = vpop.f32.mrb[0].mxu0
    %v3680 = vadd.f32 %v540, %v3679
    %v3681 = vpop.f32.mrb[0].mxu0
    %3682 = vmatprep.mubr.f32.mxu0 0.0
    %3683 = vmatmul.mubr.f32.gmra.mrb[0].mxu0 %v1465
    %v3684 = vpop.f32.mrb[0].mxu0
    %v3685 = vadd.f32 %v540, %v3684
    %v3686 = vpop.f32.mrb[0].mxu0
    %3687 = vmatprep.mubr.f32.mxu0 0.0
    %3688 = vmatmul.mubr.f32.gmra.mrb[0].mxu0 %v1468
    %v3689 = vpop.f32.mrb[0].mxu0
    %v3690 = vadd.f32 %v540, %v3689
    %v3691 = vpop.f32.mrb[0].mxu0
    %3692 = vmatprep.mubr.f32.mxu0 0.0
    %3693 = vmatmul.mubr.f32.gmra.mrb[0].mxu0 %v1471
    %v3694 = vpop.f32.mrb[0].mxu0
    %v3695 = vadd.f32 %v540, %v3694
    %v3696 = vpop.f32.mrb[0].mxu0
    %3697 = vmatprep.mubr.f32.mxu0 0.0
    %3698 = vmatmul.mubr.f32.gmra.mrb[0].mxu0 %v1474
    %v3699 = vpop.f32.mrb[0].mxu0
    %v3700 = vadd.f32 %v540, %v3699
    %v3701 = vpop.f32.mrb[0].mxu0
    %3702 = vmatprep.mubr.f32.mxu0 0.0
    %3703 = vmatmul.mubr.f32.gmra.mrb[0].mxu0 %v1477
    %v3704 = vpop.f32.mrb[0].mxu0
    %v3705 = vadd.f32 %v540, %v3704
    %v3706 = vpop.f32.mrb[0].mxu0
    %3707 = vmatprep.mubr.f32.mxu0 0.0
    %3708 = vmatmul.mubr.f32.gmra.mrb[0].mxu0 %v1480
    %v3709 = vpop.f32.mrb[0].mxu0
    %v3710 = vadd.f32 %v540, %v3709
    %v3711 = vpop.f32.mrb[0].mxu0
    %3712 = vmatprep.mubr.f32.mxu0 0.0
    %3713 = vmatmul.mubr.f32.gmra.mrb[0].mxu0 %v1483
    %v3714 = vpop.f32.mrb[0].mxu0
    %v3715 = vadd.f32 %v540, %v3714
    %v3716 = vpop.f32.mrb[0].mxu0
    %3717 = vmatprep.mubr.f32.mxu0 0.0
    %3718 = vmatmul.mubr.f32.gmra.mrb[0].mxu0 %v1486
    %v3719 = vpop.f32.mrb[0].mxu0
    %v3720 = vadd.f32 %v540, %v3719
    %v3721 = vpop.f32.mrb[0].mxu0
    %3722 = vmatprep.mubr.f32.mxu0 0.0
    %3723 = vmatmul.mubr.f32.gmra.mrb[0].mxu0 %v1489
    %v3724 = vpop.f32.mrb[0].mxu0
    %v3725 = vadd.f32 %v540, %v3724
    %v3726 = vpop.f32.mrb[0].mxu0
    %3727 = vmatprep.mubr.f32.mxu0 0.0
    %3728 = vmatmul.mubr.f32.gmra.mrb[0].mxu0 %v1492
    %v3729 = vpop.f32.mrb[0].mxu0
    %v3730 = vadd.f32 %v540, %v3729
    %v3731 = vpop.f32.mrb[0].mxu0
    %3732 = vmatprep.mubr.f32.mxu0 0.0
    %3733 = vmatmul.mubr.f32.gmra.mrb[0].mxu0 %v1495
    %v3734 = vpop.f32.mrb[0].mxu0
    %v3735 = vadd.f32 %v540, %v3734
    %v3736 = vpop.f32.mrb[0].mxu0
    %3737 = vmatprep.mubr.f32.mxu0 0.0
    %3738 = vmatmul.mubr.f32.gmra.mrb[0].mxu0 %v1498
    %v3739 = vpop.f32.mrb[0].mxu0
    %v3740 = vadd.f32 %v540, %v3739
    %v3741 = vpop.f32.mrb[0].mxu0
    %3742 = vmatprep.mubr.f32.mxu0 0.0
    %3743 = vmatmul.mubr.f32.gmra.mrb[0].mxu0 %v1501
    %v3744 = vpop.f32.mrb[0].mxu0
    %v3745 = vadd.f32 %v540, %v3744
    %v3746 = vpop.f32.mrb[0].mxu0
    %3747 = vmatprep.mubr.f32.mxu0 0.0
    %3748 = vmatmul.mubr.f32.gmra.mrb[0].mxu0 %v1504
    %v3749 = vpop.f32.mrb[0].mxu0
    %v3750 = vadd.f32 %v540, %v3749
    %v3751 = vpop.f32.mrb[0].mxu0
    %3752 = vmatprep.mubr.f32.mxu0 0.0
    %3753 = vmatmul.mubr.f32.gmra.mrb[0].mxu0 %v1507
    %v3754 = vpop.f32.mrb[0].mxu0
    %v3755 = vadd.f32 %v540, %v3754
    %v3756 = vpop.f32.mrb[0].mxu0
    %3757 = vmatprep.mubr.f32.mxu0 0.0
    %3758 = vmatmul.mubr.f32.gmra.mrb[0].mxu0 %v1510
    %v3759 = vpop.f32.mrb[0].mxu0
    %v3760 = vadd.f32 %v540, %v3759
    %v3761 = vpop.f32.mrb[0].mxu0
    %3762 = vmatprep.mubr.f32.mxu0 0.0
    %3763 = vmatmul.mubr.f32.gmra.mrb[0].mxu0 %v1513
    %v3764 = vpop.f32.mrb[0].mxu0
    %v3765 = vadd.f32 %v540, %v3764
    %v3766 = vpop.f32.mrb[0].mxu0
    %3767 = vmatprep.mubr.f32.mxu0 0.0
    %3768 = vmatmul.mubr.f32.gmra.mrb[0].mxu0 %v1516
    %v3769 = vpop.f32.mrb[0].mxu0
    %v3770 = vadd.f32 %v540, %v3769
    %v3771 = vpop.f32.mrb[0].mxu0
    %3772 = vmatprep.mubr.f32.mxu0 0.0
    %3773 = vmatmul.mubr.f32.gmra.mrb[0].mxu0 %v1519
    %v3774 = vpop.f32.mrb[0].mxu0
    %v3775 = vadd.f32 %v540, %v3774
    %v3776 = vpop.f32.mrb[0].mxu0
    %3777 = vmatprep.mubr.f32.mxu0 0.0
    %3778 = vmatmul.mubr.f32.gmra.mrb[0].mxu0 %v1522
    %v3779 = vpop.f32.mrb[0].mxu0
    %v3780 = vadd.f32 %v540, %v3779
    %v3781 = vpop.f32.mrb[0].mxu0
    %3782 = vmatprep.mubr.f32.mxu0 0.0
    %3783 = vmatmul.mubr.f32.gmra.mrb[0].mxu0 %v1525
    %v3784 = vpop.f32.mrb[0].mxu0
    %v3785 = vadd.f32 %v540, %v3784
    %v3786 = vpop.f32.mrb[0].mxu0
    %3787 = vmatprep.mubr.f32.mxu0 0.0
    %3788 = vmatmul.mubr.f32.gmra.mrb[0].mxu0 %v1528
    %v3789 = vpop.f32.mrb[0].mxu0
    %v3790 = vadd.f32 %v540, %v3789
    %v3791 = vpop.f32.mrb[0].mxu0
    %3792 = vmatprep.mubr.f32.mxu0 0.0
    %3793 = vmatmul.mubr.f32.gmra.mrb[0].mxu0 %v1531
    %v3794 = vpop.f32.mrb[0].mxu0
    %v3795 = vadd.f32 %v540, %v3794
    %v3796 = vpop.f32.mrb[0].mxu0
    %3797 = vmatprep.mubr.f32.mxu0 0.0
    %3798 = vmatmul.mubr.f32.gmra.mrb[0].mxu0 %v1534
    %v3799 = vpop.f32.mrb[0].mxu0
    %v3800 = vadd.f32 %v540, %v3799
    %v3801 = vpop.f32.mrb[0].mxu0
    %3802 = vmatprep.mubr.f32.mxu0 0.0
    %3803 = vmatmul.mubr.f32.gmra.mrb[0].mxu0 %v1537
    %v3804 = vpop.f32.mrb[0].mxu0
    %v3805 = vadd.f32 %v540, %v3804
    %v3806 = vpop.f32.mrb[0].mxu0
    %3807 = vmatprep.mubr.f32.mxu0 0.0
    %3808 = vmatmul.mubr.f32.gmra.mrb[0].mxu0 %v1540
    %v3809 = vpop.f32.mrb[0].mxu0
    %v3810 = vadd.f32 %v540, %v3809
    %v3811 = vpop.f32.mrb[0].mxu0
    %3812 = vmatprep.mubr.f32.mxu0 0.0
    %3813 = vmatmul.mubr.f32.gmra.mrb[0].mxu0 %v1543
    %v3814 = vpop.f32.mrb[0].mxu0
    %v3815 = vadd.f32 %v540, %v3814
    %v3816 = vpop.f32.mrb[0].mxu0
    %3817 = vmatprep.mubr.f32.mxu0 0.0
    %3818 = vmatmul.mubr.f32.gmra.mrb[0].mxu0 %v1546
    %v3819 = vpop.f32.mrb[0].mxu0
    %v3820 = vadd.f32 %v540, %v3819
    %v3821 = vpop.f32.mrb[0].mxu0
    %3822 = vmatprep.mubr.f32.mxu0 0.0
    %3823 = vmatmul.mubr.f32.gmra.mrb[0].mxu0 %v1549
    %v3824 = vpop.f32.mrb[0].mxu0
    %v3825 = vadd.f32 %v540, %v3824
    %v3826 = vpop.f32.mrb[0].mxu0
    %3827 = vmatprep.mubr.f32.mxu0 0.0
    %3828 = vmatmul.mubr.f32.gmra.mrb[0].mxu0 %v1552
    %v3829 = vpop.f32.mrb[0].mxu0
    %v3830 = vadd.f32 %v540, %v3829
    %v3831 = vpop.f32.mrb[0].mxu0
    %3832 = vmatprep.mubr.f32.mxu0 0.0
    %3833 = vmatmul.mubr.f32.gmra.mrb[0].mxu0 %v1555
    %v3834 = vpop.f32.mrb[0].mxu0
    %v3835 = vadd.f32 %v540, %v3834
    %v3836 = vpop.f32.mrb[0].mxu0
    %3837 = vmatprep.mubr.f32.mxu0 0.0
    %3838 = vmatmul.mubr.f32.gmra.mrb[0].mxu0 %v1558
    %v3839 = vpop.f32.mrb[0].mxu0
    %v3840 = vadd.f32 %v540, %v3839
    %v3841 = vpop.f32.mrb[0].mxu0
    %3842 = vmatprep.mubr.f32.mxu0 0.0
    %3843 = vmatmul.mubr.f32.gmra.mrb[0].mxu0 %v1561
    %v3844 = vpop.f32.mrb[0].mxu0
    %v3845 = vadd.f32 %v540, %v3844
    %v3846 = vpop.f32.mrb[0].mxu0
    %3847 = vmatprep.mubr.f32.mxu0 0.0
    %3848 = vmatmul.mubr.f32.gmra.mrb[0].mxu0 %v1564
    %v3849 = vpop.f32.mrb[0].mxu0
    %v3850 = vadd.f32 %v540, %v3849
    %v3851 = vpop.f32.mrb[0].mxu0
    %3852 = vmatprep.mubr.f32.mxu0 0.0
    %3853 = vmatmul.mubr.f32.gmra.mrb[0].mxu0 %v1567
    %v3854 = vpop.f32.mrb[0].mxu0
    %v3855 = vadd.f32 %v540, %v3854
    %v3856 = vpop.f32.mrb[0].mxu0
    %3857 = vmatprep.mubr.f32.mxu0 0.0
    %3858 = vmatmul.mubr.f32.gmra.mrb[0].mxu0 %v1570
    %v3859 = vpop.f32.mrb[0].mxu0
    %v3860 = vadd.f32 %v540, %v3859
    %v3861 = vpop.f32.mrb[0].mxu0
    %3862 = vmatprep.mubr.f32.mxu0 0.0
    %3863 = vmatmul.mubr.f32.gmra.mrb[0].mxu0 %v1573
    %v3864 = vpop.f32.mrb[0].mxu0
    %v3865 = vadd.f32 %v540, %v3864
    %v3866 = vpop.f32.mrb[0].mxu0
    %3867 = vmatprep.mubr.f32.mxu0 0.0
    %3868 = vmatmul.mubr.f32.gmra.mrb[0].mxu0 %v1576
    %v3869 = vpop.f32.mrb[0].mxu0
    %v3870 = vadd.f32 %v540, %v3869
    %v3871 = vpop.f32.mrb[0].mxu0
    %3872 = vmatprep.mubr.f32.mxu0 0.0
    %3873 = vmatmul.mubr.f32.gmra.mrb[0].mxu0 %v1579
    %v3874 = vpop.f32.mrb[0].mxu0
    %v3875 = vadd.f32 %v540, %v3874
    %v3876 = vpop.f32.mrb[0].mxu0
    %3877 = vmatprep.mubr.f32.mxu0 0.0
    %3878 = vmatmul.mubr.f32.gmra.mrb[0].mxu0 %v1582
    %v3879 = vpop.f32.mrb[0].mxu0
    %v3880 = vadd.f32 %v540, %v3879
    %v3881 = vpop.f32.mrb[0].mxu0
    %3882 = vmatprep.mubr.f32.mxu0 0.0
    %3883 = vmatmul.mubr.f32.gmra.mrb[0].mxu0 %v1585
    %v3884 = vpop.f32.mrb[0].mxu0
    %v3885 = vadd.f32 %v540, %v3884
    %v3886 = vpop.f32.mrb[0].mxu0
    %3887 = vmatprep.mubr.f32.mxu0 0.0
    %3888 = vmatmul.mubr.f32.gmra.mrb[0].mxu0 %v1588
    %v3889 = vpop.f32.mrb[0].mxu0
    %v3890 = vadd.f32 %v540, %v3889
    %v3891 = vpop.f32.mrb[0].mxu0
    %3892 = vmatprep.mubr.f32.mxu0 0.0
    %3893 = vmatmul.mubr.f32.gmra.mrb[0].mxu0 %v1591
    %v3894 = vpop.f32.mrb[0].mxu0
    %v3895 = vadd.f32 %v540, %v3894
    %v3896 = vpop.f32.mrb[0].mxu0
    %3897 = vmatprep.mubr.f32.mxu0 0.0
    %3898 = vmatmul.mubr.f32.gmra.mrb[0].mxu0 %v1594
    %v3899 = vpop.f32.mrb[0].mxu0
    %v3900 = vadd.f32 %v540, %v3899
    %v3901 = vpop.f32.mrb[0].mxu0
    %3902 = vmatprep.mubr.f32.mxu0 0.0
    %3903 = vmatmul.mubr.f32.gmra.mrb[0].mxu0 %v1597
    %v3904 = vpop.f32.mrb[0].mxu0
    %v3905 = vadd.f32 %v540, %v3904
    %v3906 = vpop.f32.mrb[0].mxu0
    %3907 = vmatprep.mubr.f32.mxu0 0.0
    %3908 = vmatmul.mubr.f32.gmra.mrb[0].mxu0 %v1600
    %v3909 = vpop.f32.mrb[0].mxu0
    %v3910 = vadd.f32 %v540, %v3909
    %v3911 = vpop.f32.mrb[0].mxu0
    %3912 = vmatprep.mubr.f32.mxu0 0.0
    %3913 = vmatmul.mubr.f32.gmra.mrb[0].mxu0 %v1603
    %v3914 = vpop.f32.mrb[0].mxu0
    %v3915 = vadd.f32 %v540, %v3914
    %v3916 = vpop.f32.mrb[0].mxu0
    %3917 = vmatprep.mubr.f32.mxu0 0.0
    %3918 = vmatmul.mubr.f32.gmra.mrb[0].mxu0 %v1606
    %v3919 = vpop.f32.mrb[0].mxu0
    %v3920 = vadd.f32 %v540, %v3919
    %v3921 = vpop.f32.mrb[0].mxu0
    %3922 = vmatprep.mubr.f32.mxu0 0.0
    %3923 = vmatmul.mubr.f32.gmra.mrb[0].mxu0 %v1609
    %v3924 = vpop.f32.mrb[0].mxu0
    %v3925 = vadd.f32 %v540, %v3924
    %v3926 = vpop.f32.mrb[0].mxu0
    %3927 = vmatprep.mubr.f32.mxu0 0.0
    %3928 = vmatmul.mubr.f32.gmra.mrb[0].mxu0 %v1612
    %v3929 = vpop.f32.mrb[0].mxu0
    %v3930 = vadd.f32 %v540, %v3929
    %v3931 = vpop.f32.mrb[0].mxu0
    %3932 = vmatprep.mubr.f32.mxu0 0.0
    %3933 = vmatmul.mubr.f32.gmra.mrb[0].mxu0 %v1615
    %v3934 = vpop.f32.mrb[0].mxu0
    %v3935 = vadd.f32 %v540, %v3934
    %v3936 = vpop.f32.mrb[0].mxu0
    %3937 = vmatprep.mubr.f32.mxu0 0.0
    %3938 = vmatmul.mubr.f32.gmra.mrb[0].mxu0 %v1618
    %v3939 = vpop.f32.mrb[0].mxu0
    %v3940 = vadd.f32 %v540, %v3939
    %v3941 = vpop.f32.mrb[0].mxu0
    %3942 = vmatprep.mubr.f32.mxu0 0.0
    %3943 = vmatmul.mubr.f32.gmra.mrb[0].mxu0 %v1621
    %v3944 = vpop.f32.mrb[0].mxu0
    %v3945 = vadd.f32 %v540, %v3944
    %v3946 = vpop.f32.mrb[0].mxu0
    %3947 = vmatprep.mubr.f32.mxu0 0.0
    %3948 = vmatmul.mubr.f32.gmra.mrb[0].mxu0 %v1624
    %v3949 = vpop.f32.mrb[0].mxu0
    %v3950 = vadd.f32 %v540, %v3949
    %v3951 = vpop.f32.mrb[0].mxu0
    %3952 = vmatprep.mubr.f32.mxu0 0.0
    %3953 = vmatmul.mubr.f32.gmra.mrb[0].mxu0 %v1627
    %v3954 = vpop.f32.mrb[0].mxu0
    %v3955 = vadd.f32 %v540, %v3954
    %v3956 = vpop.f32.mrb[0].mxu0
    %3957 = vmatprep.mubr.f32.mxu0 0.0
    %3958 = vmatmul.mubr.f32.gmra.mrb[0].mxu0 %v1630
    %v3959 = vpop.f32.mrb[0].mxu0
    %v3960 = vadd.f32 %v540, %v3959
    %v3961 = vpop.f32.mrb[0].mxu0
    %3962 = vmatprep.mubr.f32.mxu0 0.0
    %3963 = vmatmul.mubr.f32.gmra.mrb[0].mxu0 %v1633
    %v3964 = vpop.f32.mrb[0].mxu0
    %v3965 = vadd.f32 %v540, %v3964
    %v3966 = vpop.f32.mrb[0].mxu0
    %3967 = vmatprep.mubr.f32.mxu0 0.0
    %3968 = vmatmul.mubr.f32.gmra.mrb[0].mxu0 %v1636
    %v3969 = vpop.f32.mrb[0].mxu0
    %v3970 = vadd.f32 %v540, %v3969
    %v3971 = vpop.f32.mrb[0].mxu0
    %3972 = vmatprep.mubr.f32.mxu0 0.0
    %3973 = vmatmul.mubr.f32.gmra.mrb[0].mxu0 %v1639
    %v3974 = vpop.f32.mrb[0].mxu0
    %v3975 = vadd.f32 %v540, %v3974
    %v3976 = vpop.f32.mrb[0].mxu0
    %3977 = vmatprep.mubr.f32.mxu0 0.0
    %3978 = vmatmul.mubr.f32.gmra.mrb[0].mxu0 %v1642
    %v3979 = vpop.f32.mrb[0].mxu0
    %v3980 = vadd.f32 %v540, %v3979
    %v3981 = vpop.f32.mrb[0].mxu0
    %3982 = vmatprep.mubr.f32.mxu0 0.0
    %3983 = vmatmul.mubr.f32.gmra.mrb[0].mxu0 %v1645
    %v3984 = vpop.f32.mrb[0].mxu0
    %v3985 = vadd.f32 %v540, %v3984
    %v3986 = vpop.f32.mrb[0].mxu0
    %3987 = vmatprep.mubr.f32.mxu0 0.0
    %3988 = vmatmul.mubr.f32.gmra.mrb[0].mxu0 %v1648
    %v3989 = vpop.f32.mrb[0].mxu0
    %v3990 = vadd.f32 %v540, %v3989
    %v3991 = vpop.f32.mrb[0].mxu0
    %3992 = vmatprep.mubr.f32.mxu0 0.0
    %3993 = vmatmul.mubr.f32.gmra.mrb[0].mxu0 %v1651
    %v3994 = vpop.f32.mrb[0].mxu0
    %v3995 = vadd.f32 %v540, %v3994
    %v3996 = vpop.f32.mrb[0].mxu0
    %3997 = vmatprep.mubr.f32.mxu0 0.0
    %3998 = vmatmul.mubr.f32.gmra.mrb[0].mxu0 %v1654
    %v3999 = vpop.f32.mrb[0].mxu0
    %v4000 = vadd.f32 %v540, %v3999
    %v4001 = vpop.f32.mrb[0].mxu0
    %4002 = vmatprep.mubr.f32.mxu0 0.0
    %4003 = vmatmul.mubr.f32.gmra.mrb[0].mxu0 %v1657
    %v4004 = vpop.f32.mrb[0].mxu0
    %v4005 = vadd.f32 %v540, %v4004
    %v4006 = vpop.f32.mrb[0].mxu0
    %4007 = vmatprep.mubr.f32.mxu0 0.0
    %4008 = vmatmul.mubr.f32.gmra.mrb[0].mxu0 %v1660
    %v4009 = vpop.f32.mrb[0].mxu0
    %v4010 = vadd.f32 %v540, %v4009
    %v4011 = vpop.f32.mrb[0].mxu0
    %4012 = vmatprep.mubr.f32.mxu0 0.0
    %4013 = vmatmul.mubr.f32.gmra.mrb[0].mxu0 %v1663
    %v4014 = vpop.f32.mrb[0].mxu0
    %v4015 = vadd.f32 %v540, %v4014
    %v4016 = vpop.f32.mrb[0].mxu0
    %4017 = vmatprep.mubr.f32.mxu0 0.0
    %4018 = vmatmul.mubr.f32.gmra.mrb[0].mxu0 %v1666
    %v4019 = vpop.f32.mrb[0].mxu0
    %v4020 = vadd.f32 %v540, %v4019
    %v4021 = vpop.f32.mrb[0].mxu0
    %4022 = vmatprep.mubr.f32.mxu0 0.0
    %4023 = vmatmul.mubr.f32.gmra.mrb[0].mxu0 %v1669
    %v4024 = vpop.f32.mrb[0].mxu0
    %v4025 = vadd.f32 %v540, %v4024
    %v4026 = vpop.f32.mrb[0].mxu0
    %4027 = vmatprep.mubr.f32.mxu0 0.0
    %4028 = vmatmul.mubr.f32.gmra.mrb[0].mxu0 %v1672
    %v4029 = vpop.f32.mrb[0].mxu0
    %v4030 = vadd.f32 %v540, %v4029
    %v4031 = vpop.f32.mrb[0].mxu0
    %4032 = vmatprep.mubr.f32.mxu0 0.0
    %4033 = vmatmul.mubr.f32.gmra.mrb[0].mxu0 %v1675
    %v4034 = vpop.f32.mrb[0].mxu0
    %v4035 = vadd.f32 %v540, %v4034
    %v4036 = vpop.f32.mrb[0].mxu0
    %4037 = vmatprep.mubr.f32.mxu0 0.0
    %4038 = vmatmul.mubr.f32.gmra.mrb[0].mxu0 %v1678
    %v4039 = vpop.f32.mrb[0].mxu0
    %v4040 = vadd.f32 %v540, %v4039
    %v4041 = vpop.f32.mrb[0].mxu0
    %4042 = vmatprep.mubr.f32.mxu0 0.0
    %4043 = vmatmul.mubr.f32.gmra.mrb[0].mxu0 %v1681
    %v4044 = vpop.f32.mrb[0].mxu0
    %v4045 = vadd.f32 %v540, %v4044
    %v4046 = vpop.f32.mrb[0].mxu0
    %4047 = vmatprep.mubr.f32.mxu0 0.0
    %4048 = vmatmul.mubr.f32.gmra.mrb[0].mxu0 %v1684
    %v4049 = vpop.f32.mrb[0].mxu0
    %v4050 = vadd.f32 %v540, %v4049
    %v4051 = vpop.f32.mrb[0].mxu0
    %4052 = vmatprep.mubr.f32.mxu0 0.0
    %4053 = vmatmul.mubr.f32.gmra.mrb[0].mxu0 %v1687
    %v4054 = vpop.f32.mrb[0].mxu0
    %v4055 = vadd.f32 %v540, %v4054
    %v4056 = vpop.f32.mrb[0].mxu0
    %4057 = vmatprep.mubr.f32.mxu0 0.0
    %4058 = vmatmul.mubr.f32.gmra.mrb[0].mxu0 %v1690
    %v4059 = vpop.f32.mrb[0].mxu0
    %v4060 = vadd.f32 %v540, %v4059
    %v4061 = vpop.f32.mrb[0].mxu0
    %4062 = vmatprep.mubr.f32.mxu0 0.0
    %4063 = vmatmul.mubr.f32.gmra.mrb[0].mxu0 %v1693
    %v4064 = vpop.f32.mrb[0].mxu0
    %v4065 = vadd.f32 %v540, %v4064
    %v4066 = vpop.f32.mrb[0].mxu0
    %4067 = vmatprep.mubr.f32.mxu0 0.0
    %4068 = vmatmul.mubr.f32.gmra.mrb[0].mxu0 %v1696
    %v4069 = vpop.f32.mrb[0].mxu0
    %v4070 = vadd.f32 %v540, %v4069
    %v4071 = vpop.f32.mrb[0].mxu0
    %4072 = vmatprep.mubr.f32.mxu0 0.0
    %4073 = vmatmul.mubr.f32.gmra.mrb[0].mxu0 %v1699
    %v4074 = vpop.f32.mrb[0].mxu0
    %v4075 = vadd.f32 %v540, %v4074
    %v4076 = vpop.f32.mrb[0].mxu0
    %4077 = vmatprep.mubr.f32.mxu0 0.0
    %4078 = vmatmul.mubr.f32.gmra.mrb[0].mxu0 %v1702
    %v4079 = vpop.f32.mrb[0].mxu0
    %v4080 = vadd.f32 %v540, %v4079
    %v4081 = vpop.f32.mrb[0].mxu0
    %4082 = vmatprep.mubr.f32.mxu0 0.0
    %4083 = vmatmul.mubr.f32.gmra.mrb[0].mxu0 %v1705
    %v4084 = vpop.f32.mrb[0].mxu0
    %v4085 = vadd.f32 %v540, %v4084
    %v4086 = vpop.f32.mrb[0].mxu0
    %4087 = vmatprep.mubr.f32.mxu0 0.0
    %4088 = vmatmul.mubr.f32.gmra.mrb[0].mxu0 %v1708
    %v4089 = vpop.f32.mrb[0].mxu0
    %v4090 = vadd.f32 %v540, %v4089
    %v4091 = vpop.f32.mrb[0].mxu0
    %4092 = vmatprep.mubr.f32.mxu0 0.0
    %4093 = vmatmul.mubr.f32.gmra.mrb[0].mxu0 %v1711
    %v4094 = vpop.f32.mrb[0].mxu0
    %v4095 = vadd.f32 %v540, %v4094
    %v4096 = vpop.f32.mrb[0].mxu0
    %4097 = vmatprep.mubr.f32.mxu0 0.0
    %4098 = vmatmul.mubr.f32.gmra.mrb[0].mxu0 %v1714
    %v4099 = vpop.f32.mrb[0].mxu0
    %v4100 = vadd.f32 %v540, %v4099
    %v4101 = vpop.f32.mrb[0].mxu0
    %4102 = vmatprep.mubr.f32.mxu0 0.0
    %4103 = vmatmul.mubr.f32.gmra.mrb[0].mxu0 %v1717
    %v4104 = vpop.f32.mrb[0].mxu0
    %v4105 = vadd.f32 %v540, %v4104
    %v4106 = vpop.f32.mrb[0].mxu0
    %4107 = vmatprep.mubr.f32.mxu0 0.0
    %4108 = vmatmul.mubr.f32.gmra.mrb[0].mxu0 %v1720
    %v4109 = vpop.f32.mrb[0].mxu0
    %v4110 = vadd.f32 %v540, %v4109
    %v4111 = vpop.f32.mrb[0].mxu0
    %4112 = vmatprep.mubr.f32.mxu0 0.0
    %4113 = vmatmul.mubr.f32.gmra.mrb[0].mxu0 %v1723
    %v4114 = vpop.f32.mrb[0].mxu0
    %v4115 = vadd.f32 %v540, %v4114
    %v4116 = vpop.f32.mrb[0].mxu0
    %4117 = vmatprep.mubr.f32.mxu0 0.0
    %4118 = vmatmul.mubr.f32.gmra.mrb[0].mxu0 %v1726
    %v4119 = vpop.f32.mrb[0].mxu0
    %v4120 = vadd.f32 %v540, %v4119
    %v4121 = vpop.f32.mrb[0].mxu0
    %4122 = vmatprep.mubr.f32.mxu0 0.0
    %4123 = vmatmul.mubr.f32.gmra.mrb[0].mxu0 %v1729
    %v4124 = vpop.f32.mrb[0].mxu0
    %v4125 = vadd.f32 %v540, %v4124
    %v4126 = vpop.f32.mrb[0].mxu0
    %4127 = vmatprep.mubr.f32.mxu0 0.0
    %4128 = vmatmul.mubr.f32.gmra.mrb[0].mxu0 %v1732
    %v4129 = vpop.f32.mrb[0].mxu0
    %v4130 = vadd.f32 %v540, %v4129
    %v4131 = vpop.f32.mrb[0].mxu0
    %4132 = vmatprep.mubr.f32.mxu0 0.0
    %4133 = vmatmul.mubr.f32.gmra.mrb[0].mxu0 %v1735
    %v4134 = vpop.f32.mrb[0].mxu0
    %v4135 = vadd.f32 %v540, %v4134
    %v4136 = vpop.f32.mrb[0].mxu0
    %4137 = vmatprep.mubr.f32.mxu0 0.0
    %4138 = vmatmul.mubr.f32.gmra.mrb[0].mxu0 %v1738
    %v4139 = vpop.f32.mrb[0].mxu0
    %v4140 = vadd.f32 %v540, %v4139
    %v4141 = vpop.f32.mrb[0].mxu0
    %4142 = vmatprep.mubr.f32.mxu0 0.0
    %4143 = vmatmul.mubr.f32.gmra.mrb[0].mxu0 %v1741
    %v4144 = vpop.f32.mrb[0].mxu0
    %v4145 = vadd.f32 %v540, %v4144
    %v4146 = vpop.f32.mrb[0].mxu0
    %4147 = vmatprep.mubr.f32.mxu0 0.0
    %4148 = vmatmul.mubr.f32.gmra.mrb[0].mxu0 %v1744
    %v4149 = vpop.f32.mrb[0].mxu0
    %v4150 = vadd.f32 %v540, %v4149
    %v4151 = vpop.f32.mrb[0].mxu0
    %4152 = vmatprep.mubr.f32.mxu0 0.0
    %4153 = vmatmul.mubr.f32.gmra.mrb[0].mxu0 %v1747
    %v4154 = vpop.f32.mrb[0].mxu0
    %v4155 = vadd.f32 %v540, %v4154
    %v4156 = vpop.f32.mrb[0].mxu0
    %4157 = vmatprep.mubr.f32.mxu0 0.0
    %4158 = vmatmul.mubr.f32.gmra.mrb[0].mxu0 %v1750
    %v4159 = vpop.f32.mrb[0].mxu0
    %v4160 = vadd.f32 %v540, %v4159
    %v4161 = vpop.f32.mrb[0].mxu0
    %4162 = vmatprep.mubr.f32.mxu0 0.0
    %4163 = vmatmul.mubr.f32.gmra.mrb[0].mxu0 %v1753
    %v4164 = vpop.f32.mrb[0].mxu0
    %v4165 = vadd.f32 %v540, %v4164
    %v4166 = vpop.f32.mrb[0].mxu0
    %4167 = vmatprep.mubr.f32.mxu0 0.0
    %4168 = vmatmul.mubr.f32.gmra.mrb[0].mxu0 %v1756
    %v4169 = vpop.f32.mrb[0].mxu0
    %v4170 = vadd.f32 %v540, %v4169
    %v4171 = vpop.f32.mrb[0].mxu0
    %4172 = vmatprep.mubr.f32.mxu0 0.0
    %4173 = vmatmul.mubr.f32.gmra.mrb[0].mxu0 %v1759
    %v4174 = vpop.f32.mrb[0].mxu0
    %v4175 = vadd.f32 %v540, %v4174
    %v4176 = vpop.f32.mrb[0].mxu0
    %4177 = vmatprep.mubr.f32.mxu0 0.0
    %4178 = vmatmul.mubr.f32.gmra.mrb[0].mxu0 %v1762
    %v4179 = vpop.f32.mrb[0].mxu0
    %v4180 = vadd.f32 %v540, %v4179
    %v4181 = vpop.f32.mrb[0].mxu0
    %4182 = vmatprep.mubr.f32.mxu0 0.0
    %4183 = vmatmul.mubr.f32.gmra.mrb[0].mxu0 %v1765
    %v4184 = vpop.f32.mrb[0].mxu0
    %v4185 = vadd.f32 %v540, %v4184
    %v4186 = vpop.f32.mrb[0].mxu0
    %4187 = vmatprep.mubr.f32.mxu0 0.0
    %4188 = vmatmul.mubr.f32.gmra.mrb[0].mxu0 %v1768
    %v4189 = vpop.f32.mrb[0].mxu0
    %v4190 = vadd.f32 %v540, %v4189
    %v4191 = vpop.f32.mrb[0].mxu0
    %4192 = vmatprep.mubr.f32.mxu0 0.0
    %4193 = vmatmul.mubr.f32.gmra.mrb[0].mxu0 %v1771
    %v4194 = vpop.f32.mrb[0].mxu0
    %v4195 = vadd.f32 %v540, %v4194
    %v4196 = vpop.f32.mrb[0].mxu0
    %4197 = vmatprep.mubr.f32.mxu0 0.0
    %4198 = vmatmul.mubr.f32.gmra.mrb[0].mxu0 %v1774
    %v4199 = vpop.f32.mrb[0].mxu0
    %v4200 = vadd.f32 %v540, %v4199
    %v4201 = vpop.f32.mrb[0].mxu0
    %4202 = vmatprep.mubr.f32.mxu0 0.0
    %4203 = vmatmul.mubr.f32.gmra.mrb[0].mxu0 %v1777
    %v4204 = vpop.f32.mrb[0].mxu0
    %v4205 = vadd.f32 %v540, %v4204
    %v4206 = vpop.f32.mrb[0].mxu0
    %4207 = vmatprep.mubr.f32.mxu0 0.0
    %4208 = vmatmul.mubr.f32.gmra.mrb[0].mxu0 %v1780
    %v4209 = vpop.f32.mrb[0].mxu0
    %v4210 = vadd.f32 %v540, %v4209
    %v4211 = vpop.f32.mrb[0].mxu0
    %4212 = vmatprep.mubr.f32.mxu0 0.0
    %4213 = vmatmul.mubr.f32.gmra.mrb[0].mxu0 %v1783
    %v4214 = vpop.f32.mrb[0].mxu0
    %v4215 = vadd.f32 %v540, %v4214
    %v4216 = vpop.f32.mrb[0].mxu0
    %4217 = vmatprep.mubr.f32.mxu0 0.0
    %4218 = vmatmul.mubr.f32.gmra.mrb[0].mxu0 %v1786
    %v4219 = vpop.f32.mrb[0].mxu0
    %v4220 = vadd.f32 %v540, %v4219
    %v4221 = vpop.f32.mrb[0].mxu0
    %4222 = vmatprep.mubr.f32.mxu0 0.0
    %4223 = vmatmul.mubr.f32.gmra.mrb[0].mxu0 %v1789
    %v4224 = vpop.f32.mrb[0].mxu0
    %v4225 = vadd.f32 %v540, %v4224
    %v4226 = vpop.f32.mrb[0].mxu0
    %4227 = vmatprep.mubr.f32.mxu0 0.0
    %4228 = vmatmul.mubr.f32.gmra.mrb[0].mxu0 %v1792
    %v4229 = vpop.f32.mrb[0].mxu0
    %v4230 = vadd.f32 %v540, %v4229
    %v4231 = vpop.f32.mrb[0].mxu0
    %4232 = vmatprep.mubr.f32.mxu0 0.0
    %4233 = vmatmul.mubr.f32.gmra.mrb[0].mxu0 %v1795
    %v4234 = vpop.f32.mrb[0].mxu0
    %v4235 = vadd.f32 %v540, %v4234
    %v4236 = vpop.f32.mrb[0].mxu0
    %4237 = vmatprep.mubr.f32.mxu0 0.0
    %4238 = vmatmul.mubr.f32.gmra.mrb[0].mxu0 %v1798
    %v4239 = vpop.f32.mrb[0].mxu0
    %v4240 = vadd.f32 %v540, %v4239
    %v4241 = vpop.f32.mrb[0].mxu0
    %4242 = vmatprep.mubr.f32.mxu0 0.0
    %4243 = vmatmul.mubr.f32.gmra.mrb[0].mxu0 %v1801
    %v4244 = vpop.f32.mrb[0].mxu0
    %v4245 = vadd.f32 %v540, %v4244
    %v4246 = vpop.f32.mrb[0].mxu0
    %4247 = vmatprep.mubr.f32.mxu0 0.0
    %4248 = vmatmul.mubr.f32.gmra.mrb[0].mxu0 %v1804
    %v4249 = vpop.f32.mrb[0].mxu0
    %v4250 = vadd.f32 %v540, %v4249
    %v4251 = vpop.f32.mrb[0].mxu0
    %4252 = vmatprep.mubr.f32.mxu0 0.0
    %4253 = vmatmul.mubr.f32.gmra.mrb[0].mxu0 %v1807
    %v4254 = vpop.f32.mrb[0].mxu0
    %v4255 = vadd.f32 %v540, %v4254
    %v4256 = vpop.f32.mrb[0].mxu0
    %4257 = vmatprep.mubr.f32.mxu0 0.0
    %4258 = vmatmul.mubr.f32.gmra.mrb[0].mxu0 %v1810
    %v4259 = vpop.f32.mrb[0].mxu0
    %v4260 = vadd.f32 %v540, %v4259
    %v4261 = vpop.f32.mrb[0].mxu0
    %4262 = vmatprep.mubr.f32.mxu0 0.0
    %4263 = vmatmul.mubr.f32.gmra.mrb[0].mxu0 %v1813
    %v4264 = vpop.f32.mrb[0].mxu0
    %v4265 = vadd.f32 %v540, %v4264
    %v4266 = vpop.f32.mrb[0].mxu0
    %4267 = vmatprep.mubr.f32.mxu0 0.0
    %4268 = vmatmul.mubr.f32.gmra.mrb[0].mxu0 %v1816
    %v4269 = vpop.f32.mrb[0].mxu0
    %v4270 = vadd.f32 %v540, %v4269
    %v4271 = vpop.f32.mrb[0].mxu0
    %4272 = vmatprep.mubr.f32.mxu0 0.0
    %4273 = vmatmul.mubr.f32.gmra.mrb[0].mxu0 %v1819
    %v4274 = vpop.f32.mrb[0].mxu0
    %v4275 = vadd.f32 %v540, %v4274
    %v4276 = vpop.f32.mrb[0].mxu0
    %4277 = vmatprep.mubr.f32.mxu0 0.0
    %4278 = vmatmul.mubr.f32.gmra.mrb[0].mxu0 %v1822
    %v4279 = vpop.f32.mrb[0].mxu0
    %v4280 = vadd.f32 %v540, %v4279
    %v4281 = vpop.f32.mrb[0].mxu0
    %4282 = vmatprep.mubr.f32.mxu0 0.0
    %4283 = vmatmul.mubr.f32.gmra.mrb[0].mxu0 %v1825
    %v4284 = vpop.f32.mrb[0].mxu0
    %v4285 = vadd.f32 %v540, %v4284
    %v4286 = vpop.f32.mrb[0].mxu0
    %4287 = vmatprep.mubr.f32.mxu0 0.0
    %4288 = vmatmul.mubr.f32.gmra.mrb[0].mxu0 %v1828
    %v4289 = vpop.f32.mrb[0].mxu0
    %v4290 = vadd.f32 %v540, %v4289
    %v4291 = vpop.f32.mrb[0].mxu0
    %4292 = vmatprep.mubr.f32.mxu0 0.0
    %4293 = vmatmul.mubr.f32.gmra.mrb[0].mxu0 %v1831
    %v4294 = vpop.f32.mrb[0].mxu0
    %v4295 = vadd.f32 %v540, %v4294
    %v4296 = vpop.f32.mrb[0].mxu0
    %4297 = vmatprep.mubr.f32.mxu0 0.0
    %4298 = vmatmul.mubr.f32.gmra.mrb[0].mxu0 %v1834
    %v4299 = vpop.f32.mrb[0].mxu0
    %v4300 = vadd.f32 %v540, %v4299
    %v4301 = vpop.f32.mrb[0].mxu0
    %4302 = vmatprep.mubr.f32.mxu0 0.0
    %4303 = vmatmul.mubr.f32.gmra.mrb[0].mxu0 %v1837
    %v4304 = vpop.f32.mrb[0].mxu0
    %v4305 = vadd.f32 %v540, %v4304
    %v4306 = vpop.f32.mrb[0].mxu0
    %4307 = vmatprep.mubr.f32.mxu0 0.0
    %4308 = vmatmul.mubr.f32.gmra.mrb[0].mxu0 %v1840
    %v4309 = vpop.f32.mrb[0].mxu0
    %v4310 = vadd.f32 %v540, %v4309
    %v4311 = vpop.f32.mrb[0].mxu0
    %4312 = vmatprep.mubr.f32.mxu0 0.0
    %4313 = vmatmul.mubr.f32.gmra.mrb[0].mxu0 %v1843
    %v4314 = vpop.f32.mrb[0].mxu0
    %v4315 = vadd.f32 %v540, %v4314
    %v4316 = vpop.f32.mrb[0].mxu0
    %4317 = vmatprep.mubr.f32.mxu0 0.0
    %4318 = vmatmul.mubr.f32.gmra.mrb[0].mxu0 %v1846
    %v4319 = vpop.f32.mrb[0].mxu0
    %v4320 = vadd.f32 %v540, %v4319
    %v4321 = vpop.f32.mrb[0].mxu0
    %4322 = vmatprep.mubr.f32.mxu0 0.0
    %4323 = vmatmul.mubr.f32.gmra.mrb[0].mxu0 %v1849
    %v4324 = vpop.f32.mrb[0].mxu0
    %v4325 = vadd.f32 %v540, %v4324
    %v4326 = vpop.f32.mrb[0].mxu0
    %4327 = vmatprep.mubr.f32.mxu0 0.0
    %4328 = vmatmul.mubr.f32.gmra.mrb[0].mxu0 %v1852
    %v4329 = vpop.f32.mrb[0].mxu0
    %v4330 = vadd.f32 %v540, %v4329
    %v4331 = vpop.f32.mrb[0].mxu0
    %4332 = vmatprep.mubr.f32.mxu0 0.0
    %4333 = vmatmul.mubr.f32.gmra.mrb[0].mxu0 %v1855
    %v4334 = vpop.f32.mrb[0].mxu0
    %v4335 = vadd.f32 %v540, %v4334
    %v4336 = vpop.f32.mrb[0].mxu0
    %4337 = vmatprep.mubr.f32.mxu0 0.0
    %4338 = vmatmul.mubr.f32.gmra.mrb[0].mxu0 %v1858
    %v4339 = vpop.f32.mrb[0].mxu0
    %v4340 = vadd.f32 %v540, %v4339
    %v4341 = vpop.f32.mrb[0].mxu0
    %4342 = vmatprep.mubr.f32.mxu0 0.0
    %4343 = vmatmul.mubr.f32.gmra.mrb[0].mxu0 %v1861
    %v4344 = vpop.f32.mrb[0].mxu0
    %v4345 = vadd.f32 %v540, %v4344
    %v4346 = vpop.f32.mrb[0].mxu0
    %4347 = vmatprep.mubr.f32.mxu0 0.0
    %4348 = vmatmul.mubr.f32.gmra.mrb[0].mxu0 %v1864
    %v4349 = vpop.f32.mrb[0].mxu0
    %v4350 = vadd.f32 %v540, %v4349
    %v4351 = vpop.f32.mrb[0].mxu0
    %4352 = vmatprep.mubr.f32.mxu0 0.0
    %4353 = vmatmul.mubr.f32.gmra.mrb[0].mxu0 %v1867
    %v4354 = vpop.f32.mrb[0].mxu0
    %v4355 = vadd.f32 %v540, %v4354
    %v4356 = vpop.f32.mrb[0].mxu0
    %4357 = vmatprep.mubr.f32.mxu0 0.0
    %4358 = vmatmul.mubr.f32.gmra.mrb[0].mxu0 %v1870
    %v4359 = vpop.f32.mrb[0].mxu0
    %v4360 = vadd.f32 %v540, %v4359
    %v4361 = vpop.f32.mrb[0].mxu0
    %4362 = vmatprep.mubr.f32.mxu0 0.0
    %4363 = vmatmul.mubr.f32.gmra.mrb[0].mxu0 %v1873
    %v4364 = vpop.f32.mrb[0].mxu0
    %v4365 = vadd.f32 %v540, %v4364
    %v4366 = vpop.f32.mrb[0].mxu0
    %4367 = vmatprep.mubr.f32.mxu0 0.0
    %4368 = vmatmul.mubr.f32.gmra.mrb[0].mxu0 %v1876
    %v4369 = vpop.f32.mrb[0].mxu0
    %v4370 = vadd.f32 %v540, %v4369
    %v4371 = vpop.f32.mrb[0].mxu0
    %4372 = vmatprep.mubr.f32.mxu0 0.0
    %4373 = vmatmul.mubr.f32.gmra.mrb[0].mxu0 %v1879
    %v4374 = vpop.f32.mrb[0].mxu0
    %v4375 = vadd.f32 %v540, %v4374
    %v4376 = vpop.f32.mrb[0].mxu0
    %4377 = vmatprep.mubr.f32.mxu0 0.0
    %4378 = vmatmul.mubr.f32.gmra.mrb[0].mxu0 %v1882
    %v4379 = vpop.f32.mrb[0].mxu0
    %v4380 = vadd.f32 %v540, %v4379
    %v4381 = vpop.f32.mrb[0].mxu0
    %4382 = vmatprep.mubr.f32.mxu0 0.0
    %4383 = vmatmul.mubr.f32.gmra.mrb[0].mxu0 %v1885
    %v4384 = vpop.f32.mrb[0].mxu0
    %v4385 = vadd.f32 %v540, %v4384
    %v4386 = vpop.f32.mrb[0].mxu0
    %4387 = vmatprep.mubr.f32.mxu0 0.0
    %4388 = vmatmul.mubr.f32.gmra.mrb[0].mxu0 %v1888
    %v4389 = vpop.f32.mrb[0].mxu0
    %v4390 = vadd.f32 %v540, %v4389
    %v4391 = vpop.f32.mrb[0].mxu0
    %4392 = vmatprep.mubr.f32.mxu0 0.0
    %4393 = vmatmul.mubr.f32.gmra.mrb[0].mxu0 %v1891
    %v4394 = vpop.f32.mrb[0].mxu0
    %v4395 = vadd.f32 %v540, %v4394
    %v4396 = vpop.f32.mrb[0].mxu0
    %4397 = vmatprep.mubr.f32.mxu0 0.0
    %4398 = vmatmul.mubr.f32.gmra.mrb[0].mxu0 %v1894
    %v4399 = vpop.f32.mrb[0].mxu0
    %v4400 = vadd.f32 %v540, %v4399
    %v4401 = vpop.f32.mrb[0].mxu0
    %4402 = vmatprep.mubr.f32.mxu0 0.0
    %4403 = vmatmul.mubr.f32.gmra.mrb[0].mxu0 %v1897
    %v4404 = vpop.f32.mrb[0].mxu0
    %v4405 = vadd.f32 %v540, %v4404
    %v4406 = vpop.f32.mrb[0].mxu0
    %4407 = vmatprep.mubr.f32.mxu0 0.0
    %4408 = vmatmul.mubr.f32.gmra.mrb[0].mxu0 %v1900
    %v4409 = vpop.f32.mrb[0].mxu0
    %v4410 = vadd.f32 %v540, %v4409
    %v4411 = vpop.f32.mrb[0].mxu0
    %4412 = vmatprep.mubr.f32.mxu0 0.0
    %4413 = vmatmul.mubr.f32.gmra.mrb[0].mxu0 %v1903
    %v4414 = vpop.f32.mrb[0].mxu0
    %v4415 = vadd.f32 %v540, %v4414
    %v4416 = vpop.f32.mrb[0].mxu0
    %4417 = vmatprep.mubr.f32.mxu0 0.0
    %4418 = vmatmul.mubr.f32.gmra.mrb[0].mxu0 %v1906
    %v4419 = vpop.f32.mrb[0].mxu0
    %v4420 = vadd.f32 %v540, %v4419
    %v4421 = vpop.f32.mrb[0].mxu0
    %4422 = vmatprep.mubr.f32.mxu0 0.0
    %4423 = vmatmul.mubr.f32.gmra.mrb[0].mxu0 %v1909
    %v4424 = vpop.f32.mrb[0].mxu0
    %v4425 = vadd.f32 %v540, %v4424
    %v4426 = vpop.f32.mrb[0].mxu0
    %4427 = vmatprep.mubr.f32.mxu0 0.0
    %4428 = vmatmul.mubr.f32.gmra.mrb[0].mxu0 %v1912
    %v4429 = vpop.f32.mrb[0].mxu0
    %v4430 = vadd.f32 %v540, %v4429
    %v4431 = vpop.f32.mrb[0].mxu0
    %4432 = vmatprep.mubr.f32.mxu0 0.0
    %4433 = vmatmul.mubr.f32.gmra.mrb[0].mxu0 %v1915
    %v4434 = vpop.f32.mrb[0].mxu0
    %v4435 = vadd.f32 %v540, %v4434
    %v4436 = vpop.f32.mrb[0].mxu0
    %4437 = vmatprep.mubr.f32.mxu0 0.0
    %4438 = vmatmul.mubr.f32.gmra.mrb[0].mxu0 %v1918
    %v4439 = vpop.f32.mrb[0].mxu0
    %v4440 = vadd.f32 %v540, %v4439
    %v4441 = vpop.f32.mrb[0].mxu0
    %4442 = vmatprep.mubr.f32.mxu0 0.0
    %4443 = vmatmul.mubr.f32.gmra.mrb[0].mxu0 %v1921
    %v4444 = vpop.f32.mrb[0].mxu0
    %v4445 = vadd.f32 %v540, %v4444
    %v4446 = vpop.f32.mrb[0].mxu0
    %4447 = vmatprep.mubr.f32.mxu0 0.0
    %4448 = vmatmul.mubr.f32.gmra.mrb[0].mxu0 %v1924
    %v4449 = vpop.f32.mrb[0].mxu0
    %v4450 = vadd.f32 %v540, %v4449
    %v4451 = vpop.f32.mrb[0].mxu0
    %4452 = vmatprep.mubr.f32.mxu0 0.0
    %4453 = vmatmul.mubr.f32.gmra.mrb[0].mxu0 %v1927
    %v4454 = vpop.f32.mrb[0].mxu0
    %v4455 = vadd.f32 %v540, %v4454
    %v4456 = vpop.f32.mrb[0].mxu0
    %4457 = vmatprep.mubr.f32.mxu0 0.0
    %4458 = vmatmul.mubr.f32.gmra.mrb[0].mxu0 %v1930
    %v4459 = vpop.f32.mrb[0].mxu0
    %v4460 = vadd.f32 %v540, %v4459
    %v4461 = vpop.f32.mrb[0].mxu0
    %4462 = vmatprep.mubr.f32.mxu0 0.0
    %4463 = vmatmul.mubr.f32.gmra.mrb[0].mxu0 %v1933
    %v4464 = vpop.f32.mrb[0].mxu0
    %v4465 = vadd.f32 %v540, %v4464
    %v4466 = vpop.f32.mrb[0].mxu0
    %4467 = vmatprep.mubr.f32.mxu0 0.0
    %4468 = vmatmul.mubr.f32.gmra.mrb[0].mxu0 %v1936
    %v4469 = vpop.f32.mrb[0].mxu0
    %v4470 = vadd.f32 %v540, %v4469
    %v4471 = vpop.f32.mrb[0].mxu0
    %4472 = vmatprep.mubr.f32.mxu0 0.0
    %4473 = vmatmul.mubr.f32.gmra.mrb[0].mxu0 %v1939
    %v4474 = vpop.f32.mrb[0].mxu0
    %v4475 = vadd.f32 %v540, %v4474
    %v4476 = vpop.f32.mrb[0].mxu0
    %4477 = vmatprep.mubr.f32.mxu0 0.0
    %4478 = vmatmul.mubr.f32.gmra.mrb[0].mxu0 %v1942
    %v4479 = vpop.f32.mrb[0].mxu0
    %v4480 = vadd.f32 %v540, %v4479
    %v4481 = vpop.f32.mrb[0].mxu0
    %4482 = vmatprep.mubr.f32.mxu0 0.0
    %4483 = vmatmul.mubr.f32.gmra.mrb[0].mxu0 %v1945
    %v4484 = vpop.f32.mrb[0].mxu0
    %v4485 = vadd.f32 %v540, %v4484
    %v4486 = vpop.f32.mrb[0].mxu0
    %4487 = vmatprep.mubr.f32.mxu0 0.0
    %4488 = vmatmul.mubr.f32.gmra.mrb[0].mxu0 %v1948
    %v4489 = vpop.f32.mrb[0].mxu0
    %v4490 = vadd.f32 %v540, %v4489
    %v4491 = vpop.f32.mrb[0].mxu0
    %4492 = vmatprep.mubr.f32.mxu0 0.0
    %4493 = vmatmul.mubr.f32.gmra.mrb[0].mxu0 %v1951
    %v4494 = vpop.f32.mrb[0].mxu0
    %v4495 = vadd.f32 %v540, %v4494
    %v4496 = vpop.f32.mrb[0].mxu0
    %4497 = vmatprep.mubr.f32.mxu0 0.0
    %4498 = vmatmul.mubr.f32.gmra.mrb[0].mxu0 %v1954
    %v4499 = vpop.f32.mrb[0].mxu0
    %v4500 = vadd.f32 %v540, %v4499
    %v4501 = vpop.f32.mrb[0].mxu0
    %4502 = vmatprep.mubr.f32.mxu0 0.0
    %4503 = vmatmul.mubr.f32.gmra.mrb[0].mxu0 %v1957
    %v4504 = vpop.f32.mrb[0].mxu0
    %v4505 = vadd.f32 %v540, %v4504
    %v4506 = vpop.f32.mrb[0].mxu0
    %4507 = vmatprep.mubr.f32.mxu0 0.0
    %4508 = vmatmul.mubr.f32.gmra.mrb[0].mxu0 %v1960
    %v4509 = vpop.f32.mrb[0].mxu0
    %v4510 = vadd.f32 %v540, %v4509
    %v4511 = vpop.f32.mrb[0].mxu0
    %4512 = vmatprep.mubr.f32.mxu0 0.0
    %4513 = vmatmul.mubr.f32.gmra.mrb[0].mxu0 %v1963
    %v4514 = vpop.f32.mrb[0].mxu0
    %v4515 = vadd.f32 %v540, %v4514
    %v4516 = vpop.f32.mrb[0].mxu0
    %4517 = vmatprep.mubr.f32.mxu0 0.0
    %4518 = vmatmul.mubr.f32.gmra.mrb[0].mxu0 %v1966
    %v4519 = vpop.f32.mrb[0].mxu0
    %v4520 = vadd.f32 %v540, %v4519
    %v4521 = vpop.f32.mrb[0].mxu0
    %4522 = vmatprep.mubr.f32.mxu0 0.0
    %4523 = vmatmul.mubr.f32.gmra.mrb[0].mxu0 %v1969
    %v4524 = vpop.f32.mrb[0].mxu0
    %v4525 = vadd.f32 %v540, %v4524
    %v4526 = vpop.f32.mrb[0].mxu0
    %4527 = vmatprep.mubr.f32.mxu0 0.0
    %4528 = vmatmul.mubr.f32.gmra.mrb[0].mxu0 %v1972
    %v4529 = vpop.f32.mrb[0].mxu0
    %v4530 = vadd.f32 %v540, %v4529
    %v4531 = vpop.f32.mrb[0].mxu0
    %4532 = vmatprep.mubr.f32.mxu0 0.0
    %4533 = vmatmul.mubr.f32.gmra.mrb[0].mxu0 %v1975
    %v4534 = vpop.f32.mrb[0].mxu0
    %v4535 = vadd.f32 %v540, %v4534
    %v4536 = vpop.f32.mrb[0].mxu0
    %4537 = vmatprep.mubr.f32.mxu0 0.0
    %4538 = vmatmul.mubr.f32.gmra.mrb[0].mxu0 %v1978
    %v4539 = vpop.f32.mrb[0].mxu0
    %v4540 = vadd.f32 %v540, %v4539
    %v4541 = vpop.f32.mrb[0].mxu0
    %4542 = vmatprep.mubr.f32.mxu0 0.0
    %4543 = vmatmul.mubr.f32.gmra.mrb[0].mxu0 %v1981
    %v4544 = vpop.f32.mrb[0].mxu0
    %v4545 = vadd.f32 %v540, %v4544
    %v4546 = vpop.f32.mrb[0].mxu0
    %4547 = vmatprep.mubr.f32.mxu0 0.0
    %4548 = vmatmul.mubr.f32.gmra.mrb[0].mxu0 %v1984
    %v4549 = vpop.f32.mrb[0].mxu0
    %v4550 = vadd.f32 %v540, %v4549
    %v4551 = vpop.f32.mrb[0].mxu0
    %4552 = vmatprep.mubr.f32.mxu0 0.0
    %4553 = vmatmul.mubr.f32.gmra.mrb[0].mxu0 %v1987
    %v4554 = vpop.f32.mrb[0].mxu0
    %v4555 = vadd.f32 %v540, %v4554
    %v4556 = vpop.f32.mrb[0].mxu0
    %4557 = vmatprep.mubr.f32.mxu0 0.0
    %4558 = vmatmul.mubr.f32.gmra.mrb[0].mxu0 %v1990
    %v4559 = vpop.f32.mrb[0].mxu0
    %v4560 = vadd.f32 %v540, %v4559
    %v4561 = vpop.f32.mrb[0].mxu0
    %4562 = vmatprep.mubr.f32.mxu0 0.0
    %4563 = vmatmul.mubr.f32.gmra.mrb[0].mxu0 %v1993
    %v4564 = vpop.f32.mrb[0].mxu0
    %v4565 = vadd.f32 %v540, %v4564
    %v4566 = vpop.f32.mrb[0].mxu0
    %4567 = vmatprep.mubr.f32.mxu0 0.0
    %4568 = vmatmul.mubr.f32.gmra.mrb[0].mxu0 %v1996
    %v4569 = vpop.f32.mrb[0].mxu0
    %v4570 = vadd.f32 %v540, %v4569
    %v4571 = vpop.f32.mrb[0].mxu0
    %4572 = vmatprep.mubr.f32.mxu0 0.0
    %4573 = vmatmul.mubr.f32.gmra.mrb[0].mxu0 %v1999
    %v4574 = vpop.f32.mrb[0].mxu0
    %v4575 = vadd.f32 %v540, %v4574
    %v4576 = vpop.f32.mrb[0].mxu0
    %4577 = vmatprep.mubr.f32.mxu0 0.0
    %4578 = vmatmul.mubr.f32.gmra.mrb[0].mxu0 %v2002
    %v4579 = vpop.f32.mrb[0].mxu0
    %v4580 = vadd.f32 %v540, %v4579
    %v4581 = vpop.f32.mrb[0].mxu0
    %4582 = vmatprep.mubr.f32.mxu0 0.0
    %4583 = vmatmul.mubr.f32.gmra.mrb[0].mxu0 %v2005
    %v4584 = vpop.f32.mrb[0].mxu0
    %v4585 = vadd.f32 %v540, %v4584
    %v4586 = vpop.f32.mrb[0].mxu0
    %4587 = vmatprep.mubr.f32.mxu0 0.0
    %4588 = vmatmul.mubr.f32.gmra.mrb[0].mxu0 %v2008
    %v4589 = vpop.f32.mrb[0].mxu0
    %v4590 = vadd.f32 %v540, %v4589
    %v4591 = vpop.f32.mrb[0].mxu0
    %4592 = vmatprep.mubr.f32.mxu0 0.0
    %4593 = vmatmul.mubr.f32.gmra.mrb[0].mxu0 %v2011
    %v4594 = vpop.f32.mrb[0].mxu0
    %v4595 = vadd.f32 %v540, %v4594
    %v4596 = vpop.f32.mrb[0].mxu0
    %4597 = vmatprep.mubr.f32.mxu0 0.0
    %4598 = vmatmul.mubr.f32.gmra.mrb[0].mxu0 %v2014
    %v4599 = vpop.f32.mrb[0].mxu0
    %v4600 = vadd.f32 %v540, %v4599
    %v4601 = vpop.f32.mrb[0].mxu0
    %4602 = vmatprep.mubr.f32.mxu0 0.0
    %4603 = vmatmul.mubr.f32.gmra.mrb[0].mxu0 %v2017
    %v4604 = vpop.f32.mrb[0].mxu0
    %v4605 = vadd.f32 %v540, %v4604
    %v4606 = vpop.f32.mrb[0].mxu0
    %4607 = vmatprep.mubr.f32.mxu0 0.0
    %4608 = vmatmul.mubr.f32.gmra.mrb[0].mxu0 %v2020
    %v4609 = vpop.f32.mrb[0].mxu0
    %v4610 = vadd.f32 %v540, %v4609
    %v4611 = vpop.f32.mrb[0].mxu0
    %4612 = vmatprep.mubr.f32.mxu0 0.0
    %4613 = vmatmul.mubr.f32.gmra.mrb[0].mxu0 %v2023
    %v4614 = vpop.f32.mrb[0].mxu0
    %v4615 = vadd.f32 %v540, %v4614
    %v4616 = vpop.f32.mrb[0].mxu0
    %4617 = vmatprep.mubr.f32.mxu0 0.0
    %4618 = vmatmul.mubr.f32.gmra.mrb[0].mxu0 %v2026
    %v4619 = vpop.f32.mrb[0].mxu0
    %v4620 = vadd.f32 %v540, %v4619
    %v4621 = vpop.f32.mrb[0].mxu0
    %4622 = vmatprep.mubr.f32.mxu0 0.0
    %4623 = vmatmul.mubr.f32.gmra.mrb[0].mxu0 %v2029
    %v4624 = vpop.f32.mrb[0].mxu0
    %v4625 = vadd.f32 %v540, %v4624
    %v4626 = vpop.f32.mrb[0].mxu0
    %4627 = vmatprep.mubr.f32.mxu0 0.0
    %4628 = vmatmul.mubr.f32.gmra.mrb[0].mxu0 %v2032
    %v4629 = vpop.f32.mrb[0].mxu0
    %v4630 = vadd.f32 %v540, %v4629
    %v4631 = vpop.f32.mrb[0].mxu0
    %4632 = vmatprep.mubr.f32.mxu0 0.0
    %4633 = vmatmul.mubr.f32.gmra.mrb[0].mxu0 %v2035
    %v4634 = vpop.f32.mrb[0].mxu0
    %v4635 = vadd.f32 %v540, %v4634
    %v4636 = vpop.f32.mrb[0].mxu0
    %4637 = vmatprep.mubr.f32.mxu0 0.0
    %4638 = vmatmul.mubr.f32.gmra.mrb[0].mxu0 %v2038
    %v4639 = vpop.f32.mrb[0].mxu0
    %v4640 = vadd.f32 %v540, %v4639
    %v4641 = vpop.f32.mrb[0].mxu0
    %4642 = vmatprep.mubr.f32.mxu0 0.0
    %4643 = vmatmul.mubr.f32.gmra.mrb[0].mxu0 %v2041
    %v4644 = vpop.f32.mrb[0].mxu0
    %v4645 = vadd.f32 %v540, %v4644
    %v4646 = vpop.f32.mrb[0].mxu0
    %4647 = vmatprep.mubr.f32.mxu0 0.0
    %4648 = vmatmul.mubr.f32.gmra.mrb[0].mxu0 %v2044
    %v4649 = vpop.f32.mrb[0].mxu0
    %v4650 = vadd.f32 %v540, %v4649
    %v4651 = vpop.f32.mrb[0].mxu0
    %4652 = vmatprep.mubr.f32.mxu0 0.0
    %4653 = vmatmul.mubr.f32.gmra.mrb[0].mxu0 %v2047
    %v4654 = vpop.f32.mrb[0].mxu0
    %v4655 = vadd.f32 %v540, %v4654
    %v4656 = vpop.f32.mrb[0].mxu0
    %4657 = vmatprep.mubr.f32.mxu0 0.0
    %4658 = vmatmul.mubr.f32.gmra.mrb[0].mxu0 %v2050
    %v4659 = vpop.f32.mrb[0].mxu0
    %v4660 = vadd.f32 %v540, %v4659
    %v4661 = vpop.f32.mrb[0].mxu0
    %4662 = vmatprep.mubr.f32.mxu0 0.0
    %4663 = vmatmul.mubr.f32.gmra.mrb[0].mxu0 %v2053
    %v4664 = vpop.f32.mrb[0].mxu0
    %v4665 = vadd.f32 %v540, %v4664
    %v4666 = vpop.f32.mrb[0].mxu0
    %4667 = vmatprep.mubr.f32.mxu0 0.0
    %4668 = vmatmul.mubr.f32.gmra.mrb[0].mxu0 %v2056
    %v4669 = vpop.f32.mrb[0].mxu0
    %v4670 = vadd.f32 %v540, %v4669
    %v4671 = vpop.f32.mrb[0].mxu0
    %4672 = vmatprep.mubr.f32.mxu0 0.0
    %4673 = vmatmul.mubr.f32.gmra.mrb[0].mxu0 %v2059
    %v4674 = vpop.f32.mrb[0].mxu0
    %v4675 = vadd.f32 %v540, %v4674
    %v4676 = vpop.f32.mrb[0].mxu0
    %4677 = vmatprep.mubr.f32.mxu0 0.0
    %4678 = vmatmul.mubr.f32.gmra.mrb[0].mxu0 %v2062
    %v4679 = vpop.f32.mrb[0].mxu0
    %v4680 = vadd.f32 %v540, %v4679
    %v4681 = vpop.f32.mrb[0].mxu0
    %4682 = vmatprep.mubr.f32.mxu0 0.0
    %4683 = vmatmul.mubr.f32.gmra.mrb[0].mxu0 %v2065
    %v4684 = vpop.f32.mrb[0].mxu0
    %v4685 = vadd.f32 %v540, %v4684
    %v4686 = vpop.f32.mrb[0].mxu0
    %4687 = vmatprep.mubr.f32.mxu0 0.0
    %4688 = vmatmul.mubr.f32.gmra.mrb[0].mxu0 %v2068
    %v4689 = vpop.f32.mrb[0].mxu0
    %v4690 = vadd.f32 %v540, %v4689
    %v4691 = vpop.f32.mrb[0].mxu0
    %4692 = vmatprep.mubr.f32.mxu0 0.0
    %4693 = vmatmul.mubr.f32.gmra.mrb[0].mxu0 %v2071
    %v4694 = vpop.f32.mrb[0].mxu0
    %v4695 = vadd.f32 %v540, %v4694
    %v4696 = vpop.f32.mrb[0].mxu0
    %4697 = vmatprep.mubr.f32.mxu0 0.0
    %4698 = vmatmul.mubr.f32.gmra.mrb[0].mxu0 %v2074
    %v4699 = vpop.f32.mrb[0].mxu0
    %v4700 = vadd.f32 %v540, %v4699
    %v4701 = vpop.f32.mrb[0].mxu0
    %4702 = vmatprep.mubr.f32.mxu0 0.0
    %4703 = vmatmul.mubr.f32.gmra.mrb[0].mxu0 %v2077
    %v4704 = vpop.f32.mrb[0].mxu0
    %v4705 = vadd.f32 %v540, %v4704
    %v4706 = vpop.f32.mrb[0].mxu0
    %4707 = vdwg.mxu0
    %v4708 = vmax.f32 %v2150, 0.0
    %v4709 = vmax.f32 %v2155, 0.0
    %v4710 = vmax.f32 %v2160, 0.0
    %v4711 = vmax.f32 %v2165, 0.0
    %v4712 = vmax.f32 %v2170, 0.0
    %v4713 = vmax.f32 %v2175, 0.0
    %v4714 = vmax.f32 %v2180, 0.0
    %v4715 = vmax.f32 %v2185, 0.0
    %v4716 = vmax.f32 %v2190, 0.0
    %v4717 = vmax.f32 %v2195, 0.0
    %v4718 = vmax.f32 %v2200, 0.0
    %v4719 = vmax.f32 %v2205, 0.0
    %v4720 = vmax.f32 %v2210, 0.0
    %v4721 = vmax.f32 %v2215, 0.0
    %v4722 = vmax.f32 %v2220, 0.0
    %v4723 = vmax.f32 %v2225, 0.0
    %v4724 = vmax.f32 %v2230, 0.0
    %v4725 = vmax.f32 %v2235, 0.0
    %v4726 = vmax.f32 %v2240, 0.0
    %v4727 = vmax.f32 %v2245, 0.0
    %v4728 = vmax.f32 %v2250, 0.0
    %v4729 = vmax.f32 %v2255, 0.0
    %v4730 = vmax.f32 %v2260, 0.0
    %v4731 = vmax.f32 %v2265, 0.0
    %v4732 = vmax.f32 %v2270, 0.0
    %v4733 = vmax.f32 %v2275, 0.0
    %v4734 = vmax.f32 %v2280, 0.0
    %v4735 = vmax.f32 %v2285, 0.0
    %v4736 = vmax.f32 %v2290, 0.0
    %v4737 = vmax.f32 %v2295, 0.0
    %v4738 = vmax.f32 %v2300, 0.0
    %v4739 = vmax.f32 %v2305, 0.0
    %v4740 = vmax.f32 %v2310, 0.0
    %v4741 = vmax.f32 %v2315, 0.0
    %v4742 = vmax.f32 %v2320, 0.0
    %v4743 = vmax.f32 %v2325, 0.0
    %v4744 = vmax.f32 %v2330, 0.0
    %v4745 = vmax.f32 %v2335, 0.0
    %v4746 = vmax.f32 %v2340, 0.0
    %v4747 = vmax.f32 %v2345, 0.0
    %v4748 = vmax.f32 %v2350, 0.0
    %v4749 = vmax.f32 %v2355, 0.0
    %v4750 = vmax.f32 %v2360, 0.0
    %v4751 = vmax.f32 %v2365, 0.0
    %v4752 = vmax.f32 %v2370, 0.0
    %v4753 = vmax.f32 %v2375, 0.0
    %v4754 = vmax.f32 %v2380, 0.0
    %v4755 = vmax.f32 %v2385, 0.0
    %v4756 = vmax.f32 %v2390, 0.0
    %v4757 = vmax.f32 %v2395, 0.0
    %v4758 = vmax.f32 %v2400, 0.0
    %v4759 = vmax.f32 %v2405, 0.0
    %v4760 = vmax.f32 %v2410, 0.0
    %v4761 = vmax.f32 %v2415, 0.0
    %v4762 = vmax.f32 %v2420, 0.0
    %v4763 = vmax.f32 %v2425, 0.0
    %v4764 = vmax.f32 %v2430, 0.0
    %v4765 = vmax.f32 %v2435, 0.0
    %v4766 = vmax.f32 %v2440, 0.0
    %v4767 = vmax.f32 %v2445, 0.0
    %v4768 = vmax.f32 %v2450, 0.0
    %v4769 = vmax.f32 %v2455, 0.0
    %v4770 = vmax.f32 %v2460, 0.0
    %v4771 = vmax.f32 %v2465, 0.0
    %v4772 = vmax.f32 %v2470, 0.0
    %v4773 = vmax.f32 %v2475, 0.0
    %v4774 = vmax.f32 %v2480, 0.0
    %v4775 = vmax.f32 %v2485, 0.0
    %v4776 = vmax.f32 %v2490, 0.0
    %v4777 = vmax.f32 %v2495, 0.0
    %v4778 = vmax.f32 %v2500, 0.0
    %v4779 = vmax.f32 %v2505, 0.0
    %v4780 = vmax.f32 %v2510, 0.0
    %v4781 = vmax.f32 %v2515, 0.0
    %v4782 = vmax.f32 %v2520, 0.0
    %v4783 = vmax.f32 %v2525, 0.0
    %v4784 = vmax.f32 %v2530, 0.0
    %v4785 = vmax.f32 %v2535, 0.0
    %v4786 = vmax.f32 %v2540, 0.0
    %v4787 = vmax.f32 %v2545, 0.0
    %v4788 = vmax.f32 %v2550, 0.0
    %v4789 = vmax.f32 %v2555, 0.0
    %v4790 = vmax.f32 %v2560, 0.0
    %v4791 = vmax.f32 %v2565, 0.0
    %v4792 = vmax.f32 %v2570, 0.0
    %v4793 = vmax.f32 %v2575, 0.0
    %v4794 = vmax.f32 %v2580, 0.0
    %v4795 = vmax.f32 %v2585, 0.0
    %v4796 = vmax.f32 %v2590, 0.0
    %v4797 = vmax.f32 %v2595, 0.0
    %v4798 = vmax.f32 %v2600, 0.0
    %v4799 = vmax.f32 %v2605, 0.0
    %v4800 = vmax.f32 %v2610, 0.0
    %v4801 = vmax.f32 %v2615, 0.0
    %v4802 = vmax.f32 %v2620, 0.0
    %v4803 = vmax.f32 %v2625, 0.0
    %v4804 = vmax.f32 %v2630, 0.0
    %v4805 = vmax.f32 %v2635, 0.0
    %v4806 = vmax.f32 %v2640, 0.0
    %v4807 = vmax.f32 %v2645, 0.0
    %v4808 = vmax.f32 %v2650, 0.0
    %v4809 = vmax.f32 %v2655, 0.0
    %v4810 = vmax.f32 %v2660, 0.0
    %v4811 = vmax.f32 %v2665, 0.0
    %v4812 = vmax.f32 %v2670, 0.0
    %v4813 = vmax.f32 %v2675, 0.0
    %v4814 = vmax.f32 %v2680, 0.0
    %v4815 = vmax.f32 %v2685, 0.0
    %v4816 = vmax.f32 %v2690, 0.0
    %v4817 = vmax.f32 %v2695, 0.0
    %v4818 = vmax.f32 %v2700, 0.0
    %v4819 = vmax.f32 %v2705, 0.0
    %v4820 = vmax.f32 %v2710, 0.0
    %v4821 = vmax.f32 %v2715, 0.0
    %v4822 = vmax.f32 %v2720, 0.0
    %v4823 = vmax.f32 %v2725, 0.0
    %v4824 = vmax.f32 %v2730, 0.0
    %v4825 = vmax.f32 %v2735, 0.0
    %v4826 = vmax.f32 %v2740, 0.0
    %v4827 = vmax.f32 %v2745, 0.0
    %v4828 = vmax.f32 %v2750, 0.0
    %v4829 = vmax.f32 %v2755, 0.0
    %v4830 = vmax.f32 %v2760, 0.0
    %v4831 = vmax.f32 %v2765, 0.0
    %v4832 = vmax.f32 %v2770, 0.0
    %v4833 = vmax.f32 %v2775, 0.0
    %v4834 = vmax.f32 %v2780, 0.0
    %v4835 = vmax.f32 %v2785, 0.0
    %v4836 = vmax.f32 %v2790, 0.0
    %v4837 = vmax.f32 %v2795, 0.0
    %v4838 = vmax.f32 %v2800, 0.0
    %v4839 = vmax.f32 %v2805, 0.0
    %v4840 = vmax.f32 %v2810, 0.0
    %v4841 = vmax.f32 %v2815, 0.0
    %v4842 = vmax.f32 %v2820, 0.0
    %v4843 = vmax.f32 %v2825, 0.0
    %v4844 = vmax.f32 %v2830, 0.0
    %v4845 = vmax.f32 %v2835, 0.0
    %v4846 = vmax.f32 %v2840, 0.0
    %v4847 = vmax.f32 %v2845, 0.0
    %v4848 = vmax.f32 %v2850, 0.0
    %v4849 = vmax.f32 %v2855, 0.0
    %v4850 = vmax.f32 %v2860, 0.0
    %v4851 = vmax.f32 %v2865, 0.0
    %v4852 = vmax.f32 %v2870, 0.0
    %v4853 = vmax.f32 %v2875, 0.0
    %v4854 = vmax.f32 %v2880, 0.0
    %v4855 = vmax.f32 %v2885, 0.0
    %v4856 = vmax.f32 %v2890, 0.0
    %v4857 = vmax.f32 %v2895, 0.0
    %v4858 = vmax.f32 %v2900, 0.0
    %v4859 = vmax.f32 %v2905, 0.0
    %v4860 = vmax.f32 %v2910, 0.0
    %v4861 = vmax.f32 %v2915, 0.0
    %v4862 = vmax.f32 %v2920, 0.0
    %v4863 = vmax.f32 %v2925, 0.0
    %v4864 = vmax.f32 %v2930, 0.0
    %v4865 = vmax.f32 %v2935, 0.0
    %v4866 = vmax.f32 %v2940, 0.0
    %v4867 = vmax.f32 %v2945, 0.0
    %v4868 = vmax.f32 %v2950, 0.0
    %v4869 = vmax.f32 %v2955, 0.0
    %v4870 = vmax.f32 %v2960, 0.0
    %v4871 = vmax.f32 %v2965, 0.0
    %v4872 = vmax.f32 %v2970, 0.0
    %v4873 = vmax.f32 %v2975, 0.0
    %v4874 = vmax.f32 %v2980, 0.0
    %v4875 = vmax.f32 %v2985, 0.0
    %v4876 = vmax.f32 %v2990, 0.0
    %v4877 = vmax.f32 %v2995, 0.0
    %v4878 = vmax.f32 %v3000, 0.0
    %v4879 = vmax.f32 %v3005, 0.0
    %v4880 = vmax.f32 %v3010, 0.0
    %v4881 = vmax.f32 %v3015, 0.0
    %v4882 = vmax.f32 %v3020, 0.0
    %v4883 = vmax.f32 %v3025, 0.0
    %v4884 = vmax.f32 %v3030, 0.0
    %v4885 = vmax.f32 %v3035, 0.0
    %v4886 = vmax.f32 %v3040, 0.0
    %v4887 = vmax.f32 %v3045, 0.0
    %v4888 = vmax.f32 %v3050, 0.0
    %v4889 = vmax.f32 %v3055, 0.0
    %v4890 = vmax.f32 %v3060, 0.0
    %v4891 = vmax.f32 %v3065, 0.0
    %v4892 = vmax.f32 %v3070, 0.0
    %v4893 = vmax.f32 %v3075, 0.0
    %v4894 = vmax.f32 %v3080, 0.0
    %v4895 = vmax.f32 %v3085, 0.0
    %v4896 = vmax.f32 %v3090, 0.0
    %v4897 = vmax.f32 %v3095, 0.0
    %v4898 = vmax.f32 %v3100, 0.0
    %v4899 = vmax.f32 %v3105, 0.0
    %v4900 = vmax.f32 %v3110, 0.0
    %v4901 = vmax.f32 %v3115, 0.0
    %v4902 = vmax.f32 %v3120, 0.0
    %v4903 = vmax.f32 %v3125, 0.0
    %v4904 = vmax.f32 %v3130, 0.0
    %v4905 = vmax.f32 %v3135, 0.0
    %v4906 = vmax.f32 %v3140, 0.0
    %v4907 = vmax.f32 %v3145, 0.0
    %v4908 = vmax.f32 %v3150, 0.0
    %v4909 = vmax.f32 %v3155, 0.0
    %v4910 = vmax.f32 %v3160, 0.0
    %v4911 = vmax.f32 %v3165, 0.0
    %v4912 = vmax.f32 %v3170, 0.0
    %v4913 = vmax.f32 %v3175, 0.0
    %v4914 = vmax.f32 %v3180, 0.0
    %v4915 = vmax.f32 %v3185, 0.0
    %v4916 = vmax.f32 %v3190, 0.0
    %v4917 = vmax.f32 %v3195, 0.0
    %v4918 = vmax.f32 %v3200, 0.0
    %v4919 = vmax.f32 %v3205, 0.0
    %v4920 = vmax.f32 %v3210, 0.0
    %v4921 = vmax.f32 %v3215, 0.0
    %v4922 = vmax.f32 %v3220, 0.0
    %v4923 = vmax.f32 %v3225, 0.0
    %v4924 = vmax.f32 %v3230, 0.0
    %v4925 = vmax.f32 %v3235, 0.0
    %v4926 = vmax.f32 %v3240, 0.0
    %v4927 = vmax.f32 %v3245, 0.0
    %v4928 = vmax.f32 %v3250, 0.0
    %v4929 = vmax.f32 %v3255, 0.0
    %v4930 = vmax.f32 %v3260, 0.0
    %v4931 = vmax.f32 %v3265, 0.0
    %v4932 = vmax.f32 %v3270, 0.0
    %v4933 = vmax.f32 %v3275, 0.0
    %v4934 = vmax.f32 %v3280, 0.0
    %v4935 = vmax.f32 %v3285, 0.0
    %v4936 = vmax.f32 %v3290, 0.0
    %v4937 = vmax.f32 %v3295, 0.0
    %v4938 = vmax.f32 %v3300, 0.0
    %v4939 = vmax.f32 %v3305, 0.0
    %v4940 = vmax.f32 %v3310, 0.0
    %v4941 = vmax.f32 %v3315, 0.0
    %v4942 = vmax.f32 %v3320, 0.0
    %v4943 = vmax.f32 %v3325, 0.0
    %v4944 = vmax.f32 %v3330, 0.0
    %v4945 = vmax.f32 %v3335, 0.0
    %v4946 = vmax.f32 %v3340, 0.0
    %v4947 = vmax.f32 %v3345, 0.0
    %v4948 = vmax.f32 %v3350, 0.0
    %v4949 = vmax.f32 %v3355, 0.0
    %v4950 = vmax.f32 %v3360, 0.0
    %v4951 = vmax.f32 %v3365, 0.0
    %v4952 = vmax.f32 %v3370, 0.0
    %v4953 = vmax.f32 %v3375, 0.0
    %v4954 = vmax.f32 %v3380, 0.0
    %v4955 = vmax.f32 %v3385, 0.0
    %v4956 = vmax.f32 %v3390, 0.0
    %v4957 = vmax.f32 %v3395, 0.0
    %v4958 = vmax.f32 %v3400, 0.0
    %v4959 = vmax.f32 %v3405, 0.0
    %v4960 = vmax.f32 %v3410, 0.0
    %v4961 = vmax.f32 %v3415, 0.0
    %v4962 = vmax.f32 %v3420, 0.0
    %v4963 = vmax.f32 %v3425, 0.0
    %v4964 = vmax.f32 %v3430, 0.0
    %v4965 = vmax.f32 %v3435, 0.0
    %v4966 = vmax.f32 %v3440, 0.0
    %v4967 = vmax.f32 %v3445, 0.0
    %v4968 = vmax.f32 %v3450, 0.0
    %v4969 = vmax.f32 %v3455, 0.0
    %v4970 = vmax.f32 %v3460, 0.0
    %v4971 = vmax.f32 %v3465, 0.0
    %v4972 = vmax.f32 %v3470, 0.0
    %v4973 = vmax.f32 %v3475, 0.0
    %v4974 = vmax.f32 %v3480, 0.0
    %v4975 = vmax.f32 %v3485, 0.0
    %v4976 = vmax.f32 %v3490, 0.0
    %v4977 = vmax.f32 %v3495, 0.0
    %v4978 = vmax.f32 %v3500, 0.0
    %v4979 = vmax.f32 %v3505, 0.0
    %v4980 = vmax.f32 %v3510, 0.0
    %v4981 = vmax.f32 %v3515, 0.0
    %v4982 = vmax.f32 %v3520, 0.0
    %v4983 = vmax.f32 %v3525, 0.0
    %v4984 = vmax.f32 %v3530, 0.0
    %v4985 = vmax.f32 %v3535, 0.0
    %v4986 = vmax.f32 %v3540, 0.0
    %v4987 = vmax.f32 %v3545, 0.0
    %v4988 = vmax.f32 %v3550, 0.0
    %v4989 = vmax.f32 %v3555, 0.0
    %v4990 = vmax.f32 %v3560, 0.0
    %v4991 = vmax.f32 %v3565, 0.0
    %v4992 = vmax.f32 %v3570, 0.0
    %v4993 = vmax.f32 %v3575, 0.0
    %v4994 = vmax.f32 %v3580, 0.0
    %v4995 = vmax.f32 %v3585, 0.0
    %v4996 = vmax.f32 %v3590, 0.0
    %v4997 = vmax.f32 %v3595, 0.0
    %v4998 = vmax.f32 %v3600, 0.0
    %v4999 = vmax.f32 %v3605, 0.0
    %v5000 = vmax.f32 %v3610, 0.0
    %v5001 = vmax.f32 %v3615, 0.0
    %v5002 = vmax.f32 %v3620, 0.0
    %v5003 = vmax.f32 %v3625, 0.0
    %v5004 = vmax.f32 %v3630, 0.0
    %v5005 = vmax.f32 %v3635, 0.0
    %v5006 = vmax.f32 %v3640, 0.0
    %v5007 = vmax.f32 %v3645, 0.0
    %v5008 = vmax.f32 %v3650, 0.0
    %v5009 = vmax.f32 %v3655, 0.0
    %v5010 = vmax.f32 %v3660, 0.0
    %v5011 = vmax.f32 %v3665, 0.0
    %v5012 = vmax.f32 %v3670, 0.0
    %v5013 = vmax.f32 %v3675, 0.0
    %v5014 = vmax.f32 %v3680, 0.0
    %v5015 = vmax.f32 %v3685, 0.0
    %v5016 = vmax.f32 %v3690, 0.0
    %v5017 = vmax.f32 %v3695, 0.0
    %v5018 = vmax.f32 %v3700, 0.0
    %v5019 = vmax.f32 %v3705, 0.0
    %v5020 = vmax.f32 %v3710, 0.0
    %v5021 = vmax.f32 %v3715, 0.0
    %v5022 = vmax.f32 %v3720, 0.0
    %v5023 = vmax.f32 %v3725, 0.0
    %v5024 = vmax.f32 %v3730, 0.0
    %v5025 = vmax.f32 %v3735, 0.0
    %v5026 = vmax.f32 %v3740, 0.0
    %v5027 = vmax.f32 %v3745, 0.0
    %v5028 = vmax.f32 %v3750, 0.0
    %v5029 = vmax.f32 %v3755, 0.0
    %v5030 = vmax.f32 %v3760, 0.0
    %v5031 = vmax.f32 %v3765, 0.0
    %v5032 = vmax.f32 %v3770, 0.0
    %v5033 = vmax.f32 %v3775, 0.0
    %v5034 = vmax.f32 %v3780, 0.0
    %v5035 = vmax.f32 %v3785, 0.0
    %v5036 = vmax.f32 %v3790, 0.0
    %v5037 = vmax.f32 %v3795, 0.0
    %v5038 = vmax.f32 %v3800, 0.0
    %v5039 = vmax.f32 %v3805, 0.0
    %v5040 = vmax.f32 %v3810, 0.0
    %v5041 = vmax.f32 %v3815, 0.0
    %v5042 = vmax.f32 %v3820, 0.0
    %v5043 = vmax.f32 %v3825, 0.0
    %v5044 = vmax.f32 %v3830, 0.0
    %v5045 = vmax.f32 %v3835, 0.0
    %v5046 = vmax.f32 %v3840, 0.0
    %v5047 = vmax.f32 %v3845, 0.0
    %v5048 = vmax.f32 %v3850, 0.0
    %v5049 = vmax.f32 %v3855, 0.0
    %v5050 = vmax.f32 %v3860, 0.0
    %v5051 = vmax.f32 %v3865, 0.0
    %v5052 = vmax.f32 %v3870, 0.0
    %v5053 = vmax.f32 %v3875, 0.0
    %v5054 = vmax.f32 %v3880, 0.0
    %v5055 = vmax.f32 %v3885, 0.0
    %v5056 = vmax.f32 %v3890, 0.0
    %v5057 = vmax.f32 %v3895, 0.0
    %v5058 = vmax.f32 %v3900, 0.0
    %v5059 = vmax.f32 %v3905, 0.0
    %v5060 = vmax.f32 %v3910, 0.0
    %v5061 = vmax.f32 %v3915, 0.0
    %v5062 = vmax.f32 %v3920, 0.0
    %v5063 = vmax.f32 %v3925, 0.0
    %v5064 = vmax.f32 %v3930, 0.0
    %v5065 = vmax.f32 %v3935, 0.0
    %v5066 = vmax.f32 %v3940, 0.0
    %v5067 = vmax.f32 %v3945, 0.0
    %v5068 = vmax.f32 %v3950, 0.0
    %v5069 = vmax.f32 %v3955, 0.0
    %v5070 = vmax.f32 %v3960, 0.0
    %v5071 = vmax.f32 %v3965, 0.0
    %v5072 = vmax.f32 %v3970, 0.0
    %v5073 = vmax.f32 %v3975, 0.0
    %v5074 = vmax.f32 %v3980, 0.0
    %v5075 = vmax.f32 %v3985, 0.0
    %v5076 = vmax.f32 %v3990, 0.0
    %v5077 = vmax.f32 %v3995, 0.0
    %v5078 = vmax.f32 %v4000, 0.0
    %v5079 = vmax.f32 %v4005, 0.0
    %v5080 = vmax.f32 %v4010, 0.0
    %v5081 = vmax.f32 %v4015, 0.0
    %v5082 = vmax.f32 %v4020, 0.0
    %v5083 = vmax.f32 %v4025, 0.0
    %v5084 = vmax.f32 %v4030, 0.0
    %v5085 = vmax.f32 %v4035, 0.0
    %v5086 = vmax.f32 %v4040, 0.0
    %v5087 = vmax.f32 %v4045, 0.0
    %v5088 = vmax.f32 %v4050, 0.0
    %v5089 = vmax.f32 %v4055, 0.0
    %v5090 = vmax.f32 %v4060, 0.0
    %v5091 = vmax.f32 %v4065, 0.0
    %v5092 = vmax.f32 %v4070, 0.0
    %v5093 = vmax.f32 %v4075, 0.0
    %v5094 = vmax.f32 %v4080, 0.0
    %v5095 = vmax.f32 %v4085, 0.0
    %v5096 = vmax.f32 %v4090, 0.0
    %v5097 = vmax.f32 %v4095, 0.0
    %v5098 = vmax.f32 %v4100, 0.0
    %v5099 = vmax.f32 %v4105, 0.0
    %v5100 = vmax.f32 %v4110, 0.0
    %v5101 = vmax.f32 %v4115, 0.0
    %v5102 = vmax.f32 %v4120, 0.0
    %v5103 = vmax.f32 %v4125, 0.0
    %v5104 = vmax.f32 %v4130, 0.0
    %v5105 = vmax.f32 %v4135, 0.0
    %v5106 = vmax.f32 %v4140, 0.0
    %v5107 = vmax.f32 %v4145, 0.0
    %v5108 = vmax.f32 %v4150, 0.0
    %v5109 = vmax.f32 %v4155, 0.0
    %v5110 = vmax.f32 %v4160, 0.0
    %v5111 = vmax.f32 %v4165, 0.0
    %v5112 = vmax.f32 %v4170, 0.0
    %v5113 = vmax.f32 %v4175, 0.0
    %v5114 = vmax.f32 %v4180, 0.0
    %v5115 = vmax.f32 %v4185, 0.0
    %v5116 = vmax.f32 %v4190, 0.0
    %v5117 = vmax.f32 %v4195, 0.0
    %v5118 = vmax.f32 %v4200, 0.0
    %v5119 = vmax.f32 %v4205, 0.0
    %v5120 = vmax.f32 %v4210, 0.0
    %v5121 = vmax.f32 %v4215, 0.0
    %v5122 = vmax.f32 %v4220, 0.0
    %v5123 = vmax.f32 %v4225, 0.0
    %v5124 = vmax.f32 %v4230, 0.0
    %v5125 = vmax.f32 %v4235, 0.0
    %v5126 = vmax.f32 %v4240, 0.0
    %v5127 = vmax.f32 %v4245, 0.0
    %v5128 = vmax.f32 %v4250, 0.0
    %v5129 = vmax.f32 %v4255, 0.0
    %v5130 = vmax.f32 %v4260, 0.0
    %v5131 = vmax.f32 %v4265, 0.0
    %v5132 = vmax.f32 %v4270, 0.0
    %v5133 = vmax.f32 %v4275, 0.0
    %v5134 = vmax.f32 %v4280, 0.0
    %v5135 = vmax.f32 %v4285, 0.0
    %v5136 = vmax.f32 %v4290, 0.0
    %v5137 = vmax.f32 %v4295, 0.0
    %v5138 = vmax.f32 %v4300, 0.0
    %v5139 = vmax.f32 %v4305, 0.0
    %v5140 = vmax.f32 %v4310, 0.0
    %v5141 = vmax.f32 %v4315, 0.0
    %v5142 = vmax.f32 %v4320, 0.0
    %v5143 = vmax.f32 %v4325, 0.0
    %v5144 = vmax.f32 %v4330, 0.0
    %v5145 = vmax.f32 %v4335, 0.0
    %v5146 = vmax.f32 %v4340, 0.0
    %v5147 = vmax.f32 %v4345, 0.0
    %v5148 = vmax.f32 %v4350, 0.0
    %v5149 = vmax.f32 %v4355, 0.0
    %v5150 = vmax.f32 %v4360, 0.0
    %v5151 = vmax.f32 %v4365, 0.0
    %v5152 = vmax.f32 %v4370, 0.0
    %v5153 = vmax.f32 %v4375, 0.0
    %v5154 = vmax.f32 %v4380, 0.0
    %v5155 = vmax.f32 %v4385, 0.0
    %v5156 = vmax.f32 %v4390, 0.0
    %v5157 = vmax.f32 %v4395, 0.0
    %v5158 = vmax.f32 %v4400, 0.0
    %v5159 = vmax.f32 %v4405, 0.0
    %v5160 = vmax.f32 %v4410, 0.0
    %v5161 = vmax.f32 %v4415, 0.0
    %v5162 = vmax.f32 %v4420, 0.0
    %v5163 = vmax.f32 %v4425, 0.0
    %v5164 = vmax.f32 %v4430, 0.0
    %v5165 = vmax.f32 %v4435, 0.0
    %v5166 = vmax.f32 %v4440, 0.0
    %v5167 = vmax.f32 %v4445, 0.0
    %v5168 = vmax.f32 %v4450, 0.0
    %v5169 = vmax.f32 %v4455, 0.0
    %v5170 = vmax.f32 %v4460, 0.0
    %v5171 = vmax.f32 %v4465, 0.0
    %v5172 = vmax.f32 %v4470, 0.0
    %v5173 = vmax.f32 %v4475, 0.0
    %v5174 = vmax.f32 %v4480, 0.0
    %v5175 = vmax.f32 %v4485, 0.0
    %v5176 = vmax.f32 %v4490, 0.0
    %v5177 = vmax.f32 %v4495, 0.0
    %v5178 = vmax.f32 %v4500, 0.0
    %v5179 = vmax.f32 %v4505, 0.0
    %v5180 = vmax.f32 %v4510, 0.0
    %v5181 = vmax.f32 %v4515, 0.0
    %v5182 = vmax.f32 %v4520, 0.0
    %v5183 = vmax.f32 %v4525, 0.0
    %v5184 = vmax.f32 %v4530, 0.0
    %v5185 = vmax.f32 %v4535, 0.0
    %v5186 = vmax.f32 %v4540, 0.0
    %v5187 = vmax.f32 %v4545, 0.0
    %v5188 = vmax.f32 %v4550, 0.0
    %v5189 = vmax.f32 %v4555, 0.0
    %v5190 = vmax.f32 %v4560, 0.0
    %v5191 = vmax.f32 %v4565, 0.0
    %v5192 = vmax.f32 %v4570, 0.0
    %v5193 = vmax.f32 %v4575, 0.0
    %v5194 = vmax.f32 %v4580, 0.0
    %v5195 = vmax.f32 %v4585, 0.0
    %v5196 = vmax.f32 %v4590, 0.0
    %v5197 = vmax.f32 %v4595, 0.0
    %v5198 = vmax.f32 %v4600, 0.0
    %v5199 = vmax.f32 %v4605, 0.0
    %v5200 = vmax.f32 %v4610, 0.0
    %v5201 = vmax.f32 %v4615, 0.0
    %v5202 = vmax.f32 %v4620, 0.0
    %v5203 = vmax.f32 %v4625, 0.0
    %v5204 = vmax.f32 %v4630, 0.0
    %v5205 = vmax.f32 %v4635, 0.0
    %v5206 = vmax.f32 %v4640, 0.0
    %v5207 = vmax.f32 %v4645, 0.0
    %v5208 = vmax.f32 %v4650, 0.0
    %v5209 = vmax.f32 %v4655, 0.0
    %v5210 = vmax.f32 %v4660, 0.0
    %v5211 = vmax.f32 %v4665, 0.0
    %v5212 = vmax.f32 %v4670, 0.0
    %v5213 = vmax.f32 %v4675, 0.0
    %v5214 = vmax.f32 %v4680, 0.0
    %v5215 = vmax.f32 %v4685, 0.0
    %v5216 = vmax.f32 %v4690, 0.0
    %v5217 = vmax.f32 %v4695, 0.0
    %v5218 = vmax.f32 %v4700, 0.0
    %v5219 = vmax.f32 %v4705, 0.0
    %vm5220 = vcmask 523264
    %v5221 = vsel %vm5220, %v4708, 0.0
    %v5222 = vsel %vm5220, %v4709, 0.0
    %v5223 = vadd.f32 %v5221, %v5222
    %v5224 = vsel %vm5220, %v4710, 0.0
    %v5225 = vadd.f32 %v5223, %v5224
    %v5226 = vsel %vm5220, %v4711, 0.0
    %v5227 = vadd.f32 %v5225, %v5226
    %v5228 = vsel %vm5220, %v4712, 0.0
    %v5229 = vadd.f32 %v5227, %v5228
    %v5230 = vsel %vm5220, %v4713, 0.0
    %v5231 = vadd.f32 %v5229, %v5230
    %v5232 = vsel %vm5220, %v4714, 0.0
    %v5233 = vadd.f32 %v5231, %v5232
    %v5234 = vsel %vm5220, %v4715, 0.0
    %v5235 = vadd.f32 %v5233, %v5234
    %v5236 = vsel %vm5220, %v4716, 0.0
    %v5237 = vadd.f32 %v5235, %v5236
    %v5238 = vsel %vm5220, %v4717, 0.0
    %v5239 = vadd.f32 %v5237, %v5238
    %v5240 = vsel %vm5220, %v4718, 0.0
    %v5241 = vadd.f32 %v5239, %v5240
    %v5242 = vsel %vm5220, %v4719, 0.0
    %v5243 = vadd.f32 %v5241, %v5242
    %v5244 = vsel %vm5220, %v4720, 0.0
    %v5245 = vadd.f32 %v5243, %v5244
    %v5246 = vsel %vm5220, %v4721, 0.0
    %v5247 = vadd.f32 %v5245, %v5246
    %v5248 = vsel %vm5220, %v4722, 0.0
    %v5249 = vadd.f32 %v5247, %v5248
    %v5250 = vsel %vm5220, %v4723, 0.0
    %v5251 = vadd.f32 %v5249, %v5250
    %v5252 = vsel %vm5220, %v4724, 0.0
    %v5253 = vadd.f32 %v5251, %v5252
    %v5254 = vsel %vm5220, %v4725, 0.0
    %v5255 = vadd.f32 %v5253, %v5254
    %v5256 = vsel %vm5220, %v4726, 0.0
    %v5257 = vadd.f32 %v5255, %v5256
    %v5258 = vsel %vm5220, %v4727, 0.0
    %v5259 = vadd.f32 %v5257, %v5258
    %v5260 = vsel %vm5220, %v4728, 0.0
    %v5261 = vadd.f32 %v5259, %v5260
    %v5262 = vsel %vm5220, %v4729, 0.0
    %v5263 = vadd.f32 %v5261, %v5262
    %v5264 = vsel %vm5220, %v4730, 0.0
    %v5265 = vadd.f32 %v5263, %v5264
    %v5266 = vsel %vm5220, %v4731, 0.0
    %v5267 = vadd.f32 %v5265, %v5266
    %v5268 = vsel %vm5220, %v4732, 0.0
    %v5269 = vadd.f32 %v5267, %v5268
    %v5270 = vsel %vm5220, %v4733, 0.0
    %v5271 = vadd.f32 %v5269, %v5270
    %v5272 = vsel %vm5220, %v4734, 0.0
    %v5273 = vadd.f32 %v5271, %v5272
    %v5274 = vsel %vm5220, %v4735, 0.0
    %v5275 = vadd.f32 %v5273, %v5274
    %v5276 = vsel %vm5220, %v4736, 0.0
    %v5277 = vadd.f32 %v5275, %v5276
    %v5278 = vsel %vm5220, %v4737, 0.0
    %v5279 = vadd.f32 %v5277, %v5278
    %v5280 = vsel %vm5220, %v4738, 0.0
    %v5281 = vadd.f32 %v5279, %v5280
    %v5282 = vsel %vm5220, %v4739, 0.0
    %v5283 = vadd.f32 %v5281, %v5282
    %v5284 = vrot.slane %v5283, 4
    %v5285 = vadd.f32 %v5283, %v5284
    %v5286 = vrot.slane %v5285, 2
    %v5287 = vadd.f32 %v5285, %v5286
    %v5288 = vrot.slane %v5287, 1
    %v5289 = vadd.f32 %v5287, %v5288
    %v5290 = vsel %vm5220, %v4740, 0.0
    %v5291 = vsel %vm5220, %v4741, 0.0
    %v5292 = vadd.f32 %v5290, %v5291
    %v5293 = vsel %vm5220, %v4742, 0.0
    %v5294 = vadd.f32 %v5292, %v5293
    %v5295 = vsel %vm5220, %v4743, 0.0
    %v5296 = vadd.f32 %v5294, %v5295
    %v5297 = vsel %vm5220, %v4744, 0.0
    %v5298 = vadd.f32 %v5296, %v5297
    %v5299 = vsel %vm5220, %v4745, 0.0
    %v5300 = vadd.f32 %v5298, %v5299
    %v5301 = vsel %vm5220, %v4746, 0.0
    %v5302 = vadd.f32 %v5300, %v5301
    %v5303 = vsel %vm5220, %v4747, 0.0
    %v5304 = vadd.f32 %v5302, %v5303
    %v5305 = vsel %vm5220, %v4748, 0.0
    %v5306 = vadd.f32 %v5304, %v5305
    %v5307 = vsel %vm5220, %v4749, 0.0
    %v5308 = vadd.f32 %v5306, %v5307
    %v5309 = vsel %vm5220, %v4750, 0.0
    %v5310 = vadd.f32 %v5308, %v5309
    %v5311 = vsel %vm5220, %v4751, 0.0
    %v5312 = vadd.f32 %v5310, %v5311
    %v5313 = vsel %vm5220, %v4752, 0.0
    %v5314 = vadd.f32 %v5312, %v5313
    %v5315 = vsel %vm5220, %v4753, 0.0
    %v5316 = vadd.f32 %v5314, %v5315
    %v5317 = vsel %vm5220, %v4754, 0.0
    %v5318 = vadd.f32 %v5316, %v5317
    %v5319 = vsel %vm5220, %v4755, 0.0
    %v5320 = vadd.f32 %v5318, %v5319
    %v5321 = vsel %vm5220, %v4756, 0.0
    %v5322 = vadd.f32 %v5320, %v5321
    %v5323 = vsel %vm5220, %v4757, 0.0
    %v5324 = vadd.f32 %v5322, %v5323
    %v5325 = vsel %vm5220, %v4758, 0.0
    %v5326 = vadd.f32 %v5324, %v5325
    %v5327 = vsel %vm5220, %v4759, 0.0
    %v5328 = vadd.f32 %v5326, %v5327
    %v5329 = vsel %vm5220, %v4760, 0.0
    %v5330 = vadd.f32 %v5328, %v5329
    %v5331 = vsel %vm5220, %v4761, 0.0
    %v5332 = vadd.f32 %v5330, %v5331
    %v5333 = vsel %vm5220, %v4762, 0.0
    %v5334 = vadd.f32 %v5332, %v5333
    %v5335 = vsel %vm5220, %v4763, 0.0
    %v5336 = vadd.f32 %v5334, %v5335
    %v5337 = vsel %vm5220, %v4764, 0.0
    %v5338 = vadd.f32 %v5336, %v5337
    %v5339 = vsel %vm5220, %v4765, 0.0
    %v5340 = vadd.f32 %v5338, %v5339
    %v5341 = vsel %vm5220, %v4766, 0.0
    %v5342 = vadd.f32 %v5340, %v5341
    %v5343 = vsel %vm5220, %v4767, 0.0
    %v5344 = vadd.f32 %v5342, %v5343
    %v5345 = vsel %vm5220, %v4768, 0.0
    %v5346 = vadd.f32 %v5344, %v5345
    %v5347 = vsel %vm5220, %v4769, 0.0
    %v5348 = vadd.f32 %v5346, %v5347
    %v5349 = vsel %vm5220, %v4770, 0.0
    %v5350 = vadd.f32 %v5348, %v5349
    %v5351 = vsel %vm5220, %v4771, 0.0
    %v5352 = vadd.f32 %v5350, %v5351
    %v5353 = vrot.slane %v5352, 4
    %v5354 = vadd.f32 %v5352, %v5353
    %v5355 = vrot.slane %v5354, 2
    %v5356 = vadd.f32 %v5354, %v5355
    %v5357 = vrot.slane %v5356, 1
    %v5358 = vadd.f32 %v5356, %v5357
    %v5359 = vsel %vm5220, %v4772, 0.0
    %v5360 = vsel %vm5220, %v4773, 0.0
    %v5361 = vadd.f32 %v5359, %v5360
    %v5362 = vsel %vm5220, %v4774, 0.0
    %v5363 = vadd.f32 %v5361, %v5362
    %v5364 = vsel %vm5220, %v4775, 0.0
    %v5365 = vadd.f32 %v5363, %v5364
    %v5366 = vsel %vm5220, %v4776, 0.0
    %v5367 = vadd.f32 %v5365, %v5366
    %v5368 = vsel %vm5220, %v4777, 0.0
    %v5369 = vadd.f32 %v5367, %v5368
    %v5370 = vsel %vm5220, %v4778, 0.0
    %v5371 = vadd.f32 %v5369, %v5370
    %v5372 = vsel %vm5220, %v4779, 0.0
    %v5373 = vadd.f32 %v5371, %v5372
    %v5374 = vsel %vm5220, %v4780, 0.0
    %v5375 = vadd.f32 %v5373, %v5374
    %v5376 = vsel %vm5220, %v4781, 0.0
    %v5377 = vadd.f32 %v5375, %v5376
    %v5378 = vsel %vm5220, %v4782, 0.0
    %v5379 = vadd.f32 %v5377, %v5378
    %v5380 = vsel %vm5220, %v4783, 0.0
    %v5381 = vadd.f32 %v5379, %v5380
    %v5382 = vsel %vm5220, %v4784, 0.0
    %v5383 = vadd.f32 %v5381, %v5382
    %v5384 = vsel %vm5220, %v4785, 0.0
    %v5385 = vadd.f32 %v5383, %v5384
    %v5386 = vsel %vm5220, %v4786, 0.0
    %v5387 = vadd.f32 %v5385, %v5386
    %v5388 = vsel %vm5220, %v4787, 0.0
    %v5389 = vadd.f32 %v5387, %v5388
    %v5390 = vsel %vm5220, %v4788, 0.0
    %v5391 = vadd.f32 %v5389, %v5390
    %v5392 = vsel %vm5220, %v4789, 0.0
    %v5393 = vadd.f32 %v5391, %v5392
    %v5394 = vsel %vm5220, %v4790, 0.0
    %v5395 = vadd.f32 %v5393, %v5394
    %v5396 = vsel %vm5220, %v4791, 0.0
    %v5397 = vadd.f32 %v5395, %v5396
    %v5398 = vsel %vm5220, %v4792, 0.0
    %v5399 = vadd.f32 %v5397, %v5398
    %v5400 = vsel %vm5220, %v4793, 0.0
    %v5401 = vadd.f32 %v5399, %v5400
    %v5402 = vsel %vm5220, %v4794, 0.0
    %v5403 = vadd.f32 %v5401, %v5402
    %v5404 = vsel %vm5220, %v4795, 0.0
    %v5405 = vadd.f32 %v5403, %v5404
    %v5406 = vsel %vm5220, %v4796, 0.0
    %v5407 = vadd.f32 %v5405, %v5406
    %v5408 = vsel %vm5220, %v4797, 0.0
    %v5409 = vadd.f32 %v5407, %v5408
    %v5410 = vsel %vm5220, %v4798, 0.0
    %v5411 = vadd.f32 %v5409, %v5410
    %v5412 = vsel %vm5220, %v4799, 0.0
    %v5413 = vadd.f32 %v5411, %v5412
    %v5414 = vsel %vm5220, %v4800, 0.0
    %v5415 = vadd.f32 %v5413, %v5414
    %v5416 = vsel %vm5220, %v4801, 0.0
    %v5417 = vadd.f32 %v5415, %v5416
    %v5418 = vsel %vm5220, %v4802, 0.0
    %v5419 = vadd.f32 %v5417, %v5418
    %v5420 = vsel %vm5220, %v4803, 0.0
    %v5421 = vadd.f32 %v5419, %v5420
    %v5422 = vrot.slane %v5421, 4
    %v5423 = vadd.f32 %v5421, %v5422
    %v5424 = vrot.slane %v5423, 2
    %v5425 = vadd.f32 %v5423, %v5424
    %v5426 = vrot.slane %v5425, 1
    %v5427 = vadd.f32 %v5425, %v5426
    %v5428 = vsel %vm5220, %v4804, 0.0
    %v5429 = vsel %vm5220, %v4805, 0.0
    %v5430 = vadd.f32 %v5428, %v5429
    %v5431 = vsel %vm5220, %v4806, 0.0
    %v5432 = vadd.f32 %v5430, %v5431
    %v5433 = vsel %vm5220, %v4807, 0.0
    %v5434 = vadd.f32 %v5432, %v5433
    %v5435 = vsel %vm5220, %v4808, 0.0
    %v5436 = vadd.f32 %v5434, %v5435
    %v5437 = vsel %vm5220, %v4809, 0.0
    %v5438 = vadd.f32 %v5436, %v5437
    %v5439 = vsel %vm5220, %v4810, 0.0
    %v5440 = vadd.f32 %v5438, %v5439
    %v5441 = vsel %vm5220, %v4811, 0.0
    %v5442 = vadd.f32 %v5440, %v5441
    %v5443 = vsel %vm5220, %v4812, 0.0
    %v5444 = vadd.f32 %v5442, %v5443
    %v5445 = vsel %vm5220, %v4813, 0.0
    %v5446 = vadd.f32 %v5444, %v5445
    %v5447 = vsel %vm5220, %v4814, 0.0
    %v5448 = vadd.f32 %v5446, %v5447
    %v5449 = vsel %vm5220, %v4815, 0.0
    %v5450 = vadd.f32 %v5448, %v5449
    %v5451 = vsel %vm5220, %v4816, 0.0
    %v5452 = vadd.f32 %v5450, %v5451
    %v5453 = vsel %vm5220, %v4817, 0.0
    %v5454 = vadd.f32 %v5452, %v5453
    %v5455 = vsel %vm5220, %v4818, 0.0
    %v5456 = vadd.f32 %v5454, %v5455
    %v5457 = vsel %vm5220, %v4819, 0.0
    %v5458 = vadd.f32 %v5456, %v5457
    %v5459 = vsel %vm5220, %v4820, 0.0
    %v5460 = vadd.f32 %v5458, %v5459
    %v5461 = vsel %vm5220, %v4821, 0.0
    %v5462 = vadd.f32 %v5460, %v5461
    %v5463 = vsel %vm5220, %v4822, 0.0
    %v5464 = vadd.f32 %v5462, %v5463
    %v5465 = vsel %vm5220, %v4823, 0.0
    %v5466 = vadd.f32 %v5464, %v5465
    %v5467 = vsel %vm5220, %v4824, 0.0
    %v5468 = vadd.f32 %v5466, %v5467
    %v5469 = vsel %vm5220, %v4825, 0.0
    %v5470 = vadd.f32 %v5468, %v5469
    %v5471 = vsel %vm5220, %v4826, 0.0
    %v5472 = vadd.f32 %v5470, %v5471
    %v5473 = vsel %vm5220, %v4827, 0.0
    %v5474 = vadd.f32 %v5472, %v5473
    %v5475 = vsel %vm5220, %v4828, 0.0
    %v5476 = vadd.f32 %v5474, %v5475
    %v5477 = vsel %vm5220, %v4829, 0.0
    %v5478 = vadd.f32 %v5476, %v5477
    %v5479 = vsel %vm5220, %v4830, 0.0
    %v5480 = vadd.f32 %v5478, %v5479
    %v5481 = vsel %vm5220, %v4831, 0.0
    %v5482 = vadd.f32 %v5480, %v5481
    %v5483 = vsel %vm5220, %v4832, 0.0
    %v5484 = vadd.f32 %v5482, %v5483
    %v5485 = vsel %vm5220, %v4833, 0.0
    %v5486 = vadd.f32 %v5484, %v5485
    %v5487 = vsel %vm5220, %v4834, 0.0
    %v5488 = vadd.f32 %v5486, %v5487
    %v5489 = vsel %vm5220, %v4835, 0.0
    %v5490 = vadd.f32 %v5488, %v5489
    %v5491 = vrot.slane %v5490, 4
    %v5492 = vadd.f32 %v5490, %v5491
    %v5493 = vrot.slane %v5492, 2
    %v5494 = vadd.f32 %v5492, %v5493
    %v5495 = vrot.slane %v5494, 1
    %v5496 = vadd.f32 %v5494, %v5495
    %v5497 = vsel %vm5220, %v4836, 0.0
    %v5498 = vsel %vm5220, %v4837, 0.0
    %v5499 = vadd.f32 %v5497, %v5498
    %v5500 = vsel %vm5220, %v4838, 0.0
    %v5501 = vadd.f32 %v5499, %v5500
    %v5502 = vsel %vm5220, %v4839, 0.0
    %v5503 = vadd.f32 %v5501, %v5502
    %v5504 = vsel %vm5220, %v4840, 0.0
    %v5505 = vadd.f32 %v5503, %v5504
    %v5506 = vsel %vm5220, %v4841, 0.0
    %v5507 = vadd.f32 %v5505, %v5506
    %v5508 = vsel %vm5220, %v4842, 0.0
    %v5509 = vadd.f32 %v5507, %v5508
    %v5510 = vsel %vm5220, %v4843, 0.0
    %v5511 = vadd.f32 %v5509, %v5510
    %v5512 = vsel %vm5220, %v4844, 0.0
    %v5513 = vadd.f32 %v5511, %v5512
    %v5514 = vsel %vm5220, %v4845, 0.0
    %v5515 = vadd.f32 %v5513, %v5514
    %v5516 = vsel %vm5220, %v4846, 0.0
    %v5517 = vadd.f32 %v5515, %v5516
    %v5518 = vsel %vm5220, %v4847, 0.0
    %v5519 = vadd.f32 %v5517, %v5518
    %v5520 = vsel %vm5220, %v4848, 0.0
    %v5521 = vadd.f32 %v5519, %v5520
    %v5522 = vsel %vm5220, %v4849, 0.0
    %v5523 = vadd.f32 %v5521, %v5522
    %v5524 = vsel %vm5220, %v4850, 0.0
    %v5525 = vadd.f32 %v5523, %v5524
    %v5526 = vsel %vm5220, %v4851, 0.0
    %v5527 = vadd.f32 %v5525, %v5526
    %v5528 = vsel %vm5220, %v4852, 0.0
    %v5529 = vadd.f32 %v5527, %v5528
    %v5530 = vsel %vm5220, %v4853, 0.0
    %v5531 = vadd.f32 %v5529, %v5530
    %v5532 = vsel %vm5220, %v4854, 0.0
    %v5533 = vadd.f32 %v5531, %v5532
    %v5534 = vsel %vm5220, %v4855, 0.0
    %v5535 = vadd.f32 %v5533, %v5534
    %v5536 = vsel %vm5220, %v4856, 0.0
    %v5537 = vadd.f32 %v5535, %v5536
    %v5538 = vsel %vm5220, %v4857, 0.0
    %v5539 = vadd.f32 %v5537, %v5538
    %v5540 = vsel %vm5220, %v4858, 0.0
    %v5541 = vadd.f32 %v5539, %v5540
    %v5542 = vsel %vm5220, %v4859, 0.0
    %v5543 = vadd.f32 %v5541, %v5542
    %v5544 = vsel %vm5220, %v4860, 0.0
    %v5545 = vadd.f32 %v5543, %v5544
    %v5546 = vsel %vm5220, %v4861, 0.0
    %v5547 = vadd.f32 %v5545, %v5546
    %v5548 = vsel %vm5220, %v4862, 0.0
    %v5549 = vadd.f32 %v5547, %v5548
    %v5550 = vsel %vm5220, %v4863, 0.0
    %v5551 = vadd.f32 %v5549, %v5550
    %v5552 = vsel %vm5220, %v4864, 0.0
    %v5553 = vadd.f32 %v5551, %v5552
    %v5554 = vsel %vm5220, %v4865, 0.0
    %v5555 = vadd.f32 %v5553, %v5554
    %v5556 = vsel %vm5220, %v4866, 0.0
    %v5557 = vadd.f32 %v5555, %v5556
    %v5558 = vsel %vm5220, %v4867, 0.0
    %v5559 = vadd.f32 %v5557, %v5558
    %v5560 = vrot.slane %v5559, 4
    %v5561 = vadd.f32 %v5559, %v5560
    %v5562 = vrot.slane %v5561, 2
    %v5563 = vadd.f32 %v5561, %v5562
    %v5564 = vrot.slane %v5563, 1
    %v5565 = vadd.f32 %v5563, %v5564
    %v5566 = vsel %vm5220, %v4868, 0.0
    %v5567 = vsel %vm5220, %v4869, 0.0
    %v5568 = vadd.f32 %v5566, %v5567
    %v5569 = vsel %vm5220, %v4870, 0.0
    %v5570 = vadd.f32 %v5568, %v5569
    %v5571 = vsel %vm5220, %v4871, 0.0
    %v5572 = vadd.f32 %v5570, %v5571
    %v5573 = vsel %vm5220, %v4872, 0.0
    %v5574 = vadd.f32 %v5572, %v5573
    %v5575 = vsel %vm5220, %v4873, 0.0
    %v5576 = vadd.f32 %v5574, %v5575
    %v5577 = vsel %vm5220, %v4874, 0.0
    %v5578 = vadd.f32 %v5576, %v5577
    %v5579 = vsel %vm5220, %v4875, 0.0
    %v5580 = vadd.f32 %v5578, %v5579
    %v5581 = vsel %vm5220, %v4876, 0.0
    %v5582 = vadd.f32 %v5580, %v5581
    %v5583 = vsel %vm5220, %v4877, 0.0
    %v5584 = vadd.f32 %v5582, %v5583
    %v5585 = vsel %vm5220, %v4878, 0.0
    %v5586 = vadd.f32 %v5584, %v5585
    %v5587 = vsel %vm5220, %v4879, 0.0
    %v5588 = vadd.f32 %v5586, %v5587
    %v5589 = vsel %vm5220, %v4880, 0.0
    %v5590 = vadd.f32 %v5588, %v5589
    %v5591 = vsel %vm5220, %v4881, 0.0
    %v5592 = vadd.f32 %v5590, %v5591
    %v5593 = vsel %vm5220, %v4882, 0.0
    %v5594 = vadd.f32 %v5592, %v5593
    %v5595 = vsel %vm5220, %v4883, 0.0
    %v5596 = vadd.f32 %v5594, %v5595
    %v5597 = vsel %vm5220, %v4884, 0.0
    %v5598 = vadd.f32 %v5596, %v5597
    %v5599 = vsel %vm5220, %v4885, 0.0
    %v5600 = vadd.f32 %v5598, %v5599
    %v5601 = vsel %vm5220, %v4886, 0.0
    %v5602 = vadd.f32 %v5600, %v5601
    %v5603 = vsel %vm5220, %v4887, 0.0
    %v5604 = vadd.f32 %v5602, %v5603
    %v5605 = vsel %vm5220, %v4888, 0.0
    %v5606 = vadd.f32 %v5604, %v5605
    %v5607 = vsel %vm5220, %v4889, 0.0
    %v5608 = vadd.f32 %v5606, %v5607
    %v5609 = vsel %vm5220, %v4890, 0.0
    %v5610 = vadd.f32 %v5608, %v5609
    %v5611 = vsel %vm5220, %v4891, 0.0
    %v5612 = vadd.f32 %v5610, %v5611
    %v5613 = vsel %vm5220, %v4892, 0.0
    %v5614 = vadd.f32 %v5612, %v5613
    %v5615 = vsel %vm5220, %v4893, 0.0
    %v5616 = vadd.f32 %v5614, %v5615
    %v5617 = vsel %vm5220, %v4894, 0.0
    %v5618 = vadd.f32 %v5616, %v5617
    %v5619 = vsel %vm5220, %v4895, 0.0
    %v5620 = vadd.f32 %v5618, %v5619
    %v5621 = vsel %vm5220, %v4896, 0.0
    %v5622 = vadd.f32 %v5620, %v5621
    %v5623 = vsel %vm5220, %v4897, 0.0
    %v5624 = vadd.f32 %v5622, %v5623
    %v5625 = vsel %vm5220, %v4898, 0.0
    %v5626 = vadd.f32 %v5624, %v5625
    %v5627 = vsel %vm5220, %v4899, 0.0
    %v5628 = vadd.f32 %v5626, %v5627
    %v5629 = vrot.slane %v5628, 4
    %v5630 = vadd.f32 %v5628, %v5629
    %v5631 = vrot.slane %v5630, 2
    %v5632 = vadd.f32 %v5630, %v5631
    %v5633 = vrot.slane %v5632, 1
    %v5634 = vadd.f32 %v5632, %v5633
    %v5635 = vsel %vm5220, %v4900, 0.0
    %v5636 = vsel %vm5220, %v4901, 0.0
    %v5637 = vadd.f32 %v5635, %v5636
    %v5638 = vsel %vm5220, %v4902, 0.0
    %v5639 = vadd.f32 %v5637, %v5638
    %v5640 = vsel %vm5220, %v4903, 0.0
    %v5641 = vadd.f32 %v5639, %v5640
    %v5642 = vsel %vm5220, %v4904, 0.0
    %v5643 = vadd.f32 %v5641, %v5642
    %v5644 = vsel %vm5220, %v4905, 0.0
    %v5645 = vadd.f32 %v5643, %v5644
    %v5646 = vsel %vm5220, %v4906, 0.0
    %v5647 = vadd.f32 %v5645, %v5646
    %v5648 = vsel %vm5220, %v4907, 0.0
    %v5649 = vadd.f32 %v5647, %v5648
    %v5650 = vsel %vm5220, %v4908, 0.0
    %v5651 = vadd.f32 %v5649, %v5650
    %v5652 = vsel %vm5220, %v4909, 0.0
    %v5653 = vadd.f32 %v5651, %v5652
    %v5654 = vsel %vm5220, %v4910, 0.0
    %v5655 = vadd.f32 %v5653, %v5654
    %v5656 = vsel %vm5220, %v4911, 0.0
    %v5657 = vadd.f32 %v5655, %v5656
    %v5658 = vsel %vm5220, %v4912, 0.0
    %v5659 = vadd.f32 %v5657, %v5658
    %v5660 = vsel %vm5220, %v4913, 0.0
    %v5661 = vadd.f32 %v5659, %v5660
    %v5662 = vsel %vm5220, %v4914, 0.0
    %v5663 = vadd.f32 %v5661, %v5662
    %v5664 = vsel %vm5220, %v4915, 0.0
    %v5665 = vadd.f32 %v5663, %v5664
    %v5666 = vsel %vm5220, %v4916, 0.0
    %v5667 = vadd.f32 %v5665, %v5666
    %v5668 = vsel %vm5220, %v4917, 0.0
    %v5669 = vadd.f32 %v5667, %v5668
    %v5670 = vsel %vm5220, %v4918, 0.0
    %v5671 = vadd.f32 %v5669, %v5670
    %v5672 = vsel %vm5220, %v4919, 0.0
    %v5673 = vadd.f32 %v5671, %v5672
    %v5674 = vsel %vm5220, %v4920, 0.0
    %v5675 = vadd.f32 %v5673, %v5674
    %v5676 = vsel %vm5220, %v4921, 0.0
    %v5677 = vadd.f32 %v5675, %v5676
    %v5678 = vsel %vm5220, %v4922, 0.0
    %v5679 = vadd.f32 %v5677, %v5678
    %v5680 = vsel %vm5220, %v4923, 0.0
    %v5681 = vadd.f32 %v5679, %v5680
    %v5682 = vsel %vm5220, %v4924, 0.0
    %v5683 = vadd.f32 %v5681, %v5682
    %v5684 = vsel %vm5220, %v4925, 0.0
    %v5685 = vadd.f32 %v5683, %v5684
    %v5686 = vsel %vm5220, %v4926, 0.0
    %v5687 = vadd.f32 %v5685, %v5686
    %v5688 = vsel %vm5220, %v4927, 0.0
    %v5689 = vadd.f32 %v5687, %v5688
    %v5690 = vsel %vm5220, %v4928, 0.0
    %v5691 = vadd.f32 %v5689, %v5690
    %v5692 = vsel %vm5220, %v4929, 0.0
    %v5693 = vadd.f32 %v5691, %v5692
    %v5694 = vsel %vm5220, %v4930, 0.0
    %v5695 = vadd.f32 %v5693, %v5694
    %v5696 = vsel %vm5220, %v4931, 0.0
    %v5697 = vadd.f32 %v5695, %v5696
    %v5698 = vrot.slane %v5697, 4
    %v5699 = vadd.f32 %v5697, %v5698
    %v5700 = vrot.slane %v5699, 2
    %v5701 = vadd.f32 %v5699, %v5700
    %v5702 = vrot.slane %v5701, 1
    %v5703 = vadd.f32 %v5701, %v5702
    %v5704 = vsel %vm5220, %v4932, 0.0
    %v5705 = vsel %vm5220, %v4933, 0.0
    %v5706 = vadd.f32 %v5704, %v5705
    %v5707 = vsel %vm5220, %v4934, 0.0
    %v5708 = vadd.f32 %v5706, %v5707
    %v5709 = vsel %vm5220, %v4935, 0.0
    %v5710 = vadd.f32 %v5708, %v5709
    %v5711 = vsel %vm5220, %v4936, 0.0
    %v5712 = vadd.f32 %v5710, %v5711
    %v5713 = vsel %vm5220, %v4937, 0.0
    %v5714 = vadd.f32 %v5712, %v5713
    %v5715 = vsel %vm5220, %v4938, 0.0
    %v5716 = vadd.f32 %v5714, %v5715
    %v5717 = vsel %vm5220, %v4939, 0.0
    %v5718 = vadd.f32 %v5716, %v5717
    %v5719 = vsel %vm5220, %v4940, 0.0
    %v5720 = vadd.f32 %v5718, %v5719
    %v5721 = vsel %vm5220, %v4941, 0.0
    %v5722 = vadd.f32 %v5720, %v5721
    %v5723 = vsel %vm5220, %v4942, 0.0
    %v5724 = vadd.f32 %v5722, %v5723
    %v5725 = vsel %vm5220, %v4943, 0.0
    %v5726 = vadd.f32 %v5724, %v5725
    %v5727 = vsel %vm5220, %v4944, 0.0
    %v5728 = vadd.f32 %v5726, %v5727
    %v5729 = vsel %vm5220, %v4945, 0.0
    %v5730 = vadd.f32 %v5728, %v5729
    %v5731 = vsel %vm5220, %v4946, 0.0
    %v5732 = vadd.f32 %v5730, %v5731
    %v5733 = vsel %vm5220, %v4947, 0.0
    %v5734 = vadd.f32 %v5732, %v5733
    %v5735 = vsel %vm5220, %v4948, 0.0
    %v5736 = vadd.f32 %v5734, %v5735
    %v5737 = vsel %vm5220, %v4949, 0.0
    %v5738 = vadd.f32 %v5736, %v5737
    %v5739 = vsel %vm5220, %v4950, 0.0
    %v5740 = vadd.f32 %v5738, %v5739
    %v5741 = vsel %vm5220, %v4951, 0.0
    %v5742 = vadd.f32 %v5740, %v5741
    %v5743 = vsel %vm5220, %v4952, 0.0
    %v5744 = vadd.f32 %v5742, %v5743
    %v5745 = vsel %vm5220, %v4953, 0.0
    %v5746 = vadd.f32 %v5744, %v5745
    %v5747 = vsel %vm5220, %v4954, 0.0
    %v5748 = vadd.f32 %v5746, %v5747
    %v5749 = vsel %vm5220, %v4955, 0.0
    %v5750 = vadd.f32 %v5748, %v5749
    %v5751 = vsel %vm5220, %v4956, 0.0
    %v5752 = vadd.f32 %v5750, %v5751
    %v5753 = vsel %vm5220, %v4957, 0.0
    %v5754 = vadd.f32 %v5752, %v5753
    %v5755 = vsel %vm5220, %v4958, 0.0
    %v5756 = vadd.f32 %v5754, %v5755
    %v5757 = vsel %vm5220, %v4959, 0.0
    %v5758 = vadd.f32 %v5756, %v5757
    %v5759 = vsel %vm5220, %v4960, 0.0
    %v5760 = vadd.f32 %v5758, %v5759
    %v5761 = vsel %vm5220, %v4961, 0.0
    %v5762 = vadd.f32 %v5760, %v5761
    %v5763 = vsel %vm5220, %v4962, 0.0
    %v5764 = vadd.f32 %v5762, %v5763
    %v5765 = vsel %vm5220, %v4963, 0.0
    %v5766 = vadd.f32 %v5764, %v5765
    %v5767 = vrot.slane %v5766, 4
    %v5768 = vadd.f32 %v5766, %v5767
    %v5769 = vrot.slane %v5768, 2
    %v5770 = vadd.f32 %v5768, %v5769
    %v5771 = vrot.slane %v5770, 1
    %v5772 = vadd.f32 %v5770, %v5771
    %v5773 = vsel %vm5220, %v4964, 0.0
    %v5774 = vsel %vm5220, %v4965, 0.0
    %v5775 = vadd.f32 %v5773, %v5774
    %v5776 = vsel %vm5220, %v4966, 0.0
    %v5777 = vadd.f32 %v5775, %v5776
    %v5778 = vsel %vm5220, %v4967, 0.0
    %v5779 = vadd.f32 %v5777, %v5778
    %v5780 = vsel %vm5220, %v4968, 0.0
    %v5781 = vadd.f32 %v5779, %v5780
    %v5782 = vsel %vm5220, %v4969, 0.0
    %v5783 = vadd.f32 %v5781, %v5782
    %v5784 = vsel %vm5220, %v4970, 0.0
    %v5785 = vadd.f32 %v5783, %v5784
    %v5786 = vsel %vm5220, %v4971, 0.0
    %v5787 = vadd.f32 %v5785, %v5786
    %v5788 = vsel %vm5220, %v4972, 0.0
    %v5789 = vadd.f32 %v5787, %v5788
    %v5790 = vsel %vm5220, %v4973, 0.0
    %v5791 = vadd.f32 %v5789, %v5790
    %v5792 = vsel %vm5220, %v4974, 0.0
    %v5793 = vadd.f32 %v5791, %v5792
    %v5794 = vsel %vm5220, %v4975, 0.0
    %v5795 = vadd.f32 %v5793, %v5794
    %v5796 = vsel %vm5220, %v4976, 0.0
    %v5797 = vadd.f32 %v5795, %v5796
    %v5798 = vsel %vm5220, %v4977, 0.0
    %v5799 = vadd.f32 %v5797, %v5798
    %v5800 = vsel %vm5220, %v4978, 0.0
    %v5801 = vadd.f32 %v5799, %v5800
    %v5802 = vsel %vm5220, %v4979, 0.0
    %v5803 = vadd.f32 %v5801, %v5802
    %v5804 = vsel %vm5220, %v4980, 0.0
    %v5805 = vadd.f32 %v5803, %v5804
    %v5806 = vsel %vm5220, %v4981, 0.0
    %v5807 = vadd.f32 %v5805, %v5806
    %v5808 = vsel %vm5220, %v4982, 0.0
    %v5809 = vadd.f32 %v5807, %v5808
    %v5810 = vsel %vm5220, %v4983, 0.0
    %v5811 = vadd.f32 %v5809, %v5810
    %v5812 = vsel %vm5220, %v4984, 0.0
    %v5813 = vadd.f32 %v5811, %v5812
    %v5814 = vsel %vm5220, %v4985, 0.0
    %v5815 = vadd.f32 %v5813, %v5814
    %v5816 = vsel %vm5220, %v4986, 0.0
    %v5817 = vadd.f32 %v5815, %v5816
    %v5818 = vsel %vm5220, %v4987, 0.0
    %v5819 = vadd.f32 %v5817, %v5818
    %v5820 = vsel %vm5220, %v4988, 0.0
    %v5821 = vadd.f32 %v5819, %v5820
    %v5822 = vsel %vm5220, %v4989, 0.0
    %v5823 = vadd.f32 %v5821, %v5822
    %v5824 = vsel %vm5220, %v4990, 0.0
    %v5825 = vadd.f32 %v5823, %v5824
    %v5826 = vsel %vm5220, %v4991, 0.0
    %v5827 = vadd.f32 %v5825, %v5826
    %v5828 = vsel %vm5220, %v4992, 0.0
    %v5829 = vadd.f32 %v5827, %v5828
    %v5830 = vsel %vm5220, %v4993, 0.0
    %v5831 = vadd.f32 %v5829, %v5830
    %v5832 = vsel %vm5220, %v4994, 0.0
    %v5833 = vadd.f32 %v5831, %v5832
    %v5834 = vsel %vm5220, %v4995, 0.0
    %v5835 = vadd.f32 %v5833, %v5834
    %v5836 = vrot.slane %v5835, 4
    %v5837 = vadd.f32 %v5835, %v5836
    %v5838 = vrot.slane %v5837, 2
    %v5839 = vadd.f32 %v5837, %v5838
    %v5840 = vrot.slane %v5839, 1
    %v5841 = vadd.f32 %v5839, %v5840
    %v5842 = vsel %vm5220, %v4996, 0.0
    %v5843 = vsel %vm5220, %v4997, 0.0
    %v5844 = vadd.f32 %v5842, %v5843
    %v5845 = vsel %vm5220, %v4998, 0.0
    %v5846 = vadd.f32 %v5844, %v5845
    %v5847 = vsel %vm5220, %v4999, 0.0
    %v5848 = vadd.f32 %v5846, %v5847
    %v5849 = vsel %vm5220, %v5000, 0.0
    %v5850 = vadd.f32 %v5848, %v5849
    %v5851 = vsel %vm5220, %v5001, 0.0
    %v5852 = vadd.f32 %v5850, %v5851
    %v5853 = vsel %vm5220, %v5002, 0.0
    %v5854 = vadd.f32 %v5852, %v5853
    %v5855 = vsel %vm5220, %v5003, 0.0
    %v5856 = vadd.f32 %v5854, %v5855
    %v5857 = vsel %vm5220, %v5004, 0.0
    %v5858 = vadd.f32 %v5856, %v5857
    %v5859 = vsel %vm5220, %v5005, 0.0
    %v5860 = vadd.f32 %v5858, %v5859
    %v5861 = vsel %vm5220, %v5006, 0.0
    %v5862 = vadd.f32 %v5860, %v5861
    %v5863 = vsel %vm5220, %v5007, 0.0
    %v5864 = vadd.f32 %v5862, %v5863
    %v5865 = vsel %vm5220, %v5008, 0.0
    %v5866 = vadd.f32 %v5864, %v5865
    %v5867 = vsel %vm5220, %v5009, 0.0
    %v5868 = vadd.f32 %v5866, %v5867
    %v5869 = vsel %vm5220, %v5010, 0.0
    %v5870 = vadd.f32 %v5868, %v5869
    %v5871 = vsel %vm5220, %v5011, 0.0
    %v5872 = vadd.f32 %v5870, %v5871
    %v5873 = vsel %vm5220, %v5012, 0.0
    %v5874 = vadd.f32 %v5872, %v5873
    %v5875 = vsel %vm5220, %v5013, 0.0
    %v5876 = vadd.f32 %v5874, %v5875
    %v5877 = vsel %vm5220, %v5014, 0.0
    %v5878 = vadd.f32 %v5876, %v5877
    %v5879 = vsel %vm5220, %v5015, 0.0
    %v5880 = vadd.f32 %v5878, %v5879
    %v5881 = vsel %vm5220, %v5016, 0.0
    %v5882 = vadd.f32 %v5880, %v5881
    %v5883 = vsel %vm5220, %v5017, 0.0
    %v5884 = vadd.f32 %v5882, %v5883
    %v5885 = vsel %vm5220, %v5018, 0.0
    %v5886 = vadd.f32 %v5884, %v5885
    %v5887 = vsel %vm5220, %v5019, 0.0
    %v5888 = vadd.f32 %v5886, %v5887
    %v5889 = vsel %vm5220, %v5020, 0.0
    %v5890 = vadd.f32 %v5888, %v5889
    %v5891 = vsel %vm5220, %v5021, 0.0
    %v5892 = vadd.f32 %v5890, %v5891
    %v5893 = vsel %vm5220, %v5022, 0.0
    %v5894 = vadd.f32 %v5892, %v5893
    %v5895 = vsel %vm5220, %v5023, 0.0
    %v5896 = vadd.f32 %v5894, %v5895
    %v5897 = vsel %vm5220, %v5024, 0.0
    %v5898 = vadd.f32 %v5896, %v5897
    %v5899 = vsel %vm5220, %v5025, 0.0
    %v5900 = vadd.f32 %v5898, %v5899
    %v5901 = vsel %vm5220, %v5026, 0.0
    %v5902 = vadd.f32 %v5900, %v5901
    %v5903 = vsel %vm5220, %v5027, 0.0
    %v5904 = vadd.f32 %v5902, %v5903
    %v5905 = vrot.slane %v5904, 4
    %v5906 = vadd.f32 %v5904, %v5905
    %v5907 = vrot.slane %v5906, 2
    %v5908 = vadd.f32 %v5906, %v5907
    %v5909 = vrot.slane %v5908, 1
    %v5910 = vadd.f32 %v5908, %v5909
    %v5911 = vsel %vm5220, %v5028, 0.0
    %v5912 = vsel %vm5220, %v5029, 0.0
    %v5913 = vadd.f32 %v5911, %v5912
    %v5914 = vsel %vm5220, %v5030, 0.0
    %v5915 = vadd.f32 %v5913, %v5914
    %v5916 = vsel %vm5220, %v5031, 0.0
    %v5917 = vadd.f32 %v5915, %v5916
    %v5918 = vsel %vm5220, %v5032, 0.0
    %v5919 = vadd.f32 %v5917, %v5918
    %v5920 = vsel %vm5220, %v5033, 0.0
    %v5921 = vadd.f32 %v5919, %v5920
    %v5922 = vsel %vm5220, %v5034, 0.0
    %v5923 = vadd.f32 %v5921, %v5922
    %v5924 = vsel %vm5220, %v5035, 0.0
    %v5925 = vadd.f32 %v5923, %v5924
    %v5926 = vsel %vm5220, %v5036, 0.0
    %v5927 = vadd.f32 %v5925, %v5926
    %v5928 = vsel %vm5220, %v5037, 0.0
    %v5929 = vadd.f32 %v5927, %v5928
    %v5930 = vsel %vm5220, %v5038, 0.0
    %v5931 = vadd.f32 %v5929, %v5930
    %v5932 = vsel %vm5220, %v5039, 0.0
    %v5933 = vadd.f32 %v5931, %v5932
    %v5934 = vsel %vm5220, %v5040, 0.0
    %v5935 = vadd.f32 %v5933, %v5934
    %v5936 = vsel %vm5220, %v5041, 0.0
    %v5937 = vadd.f32 %v5935, %v5936
    %v5938 = vsel %vm5220, %v5042, 0.0
    %v5939 = vadd.f32 %v5937, %v5938
    %v5940 = vsel %vm5220, %v5043, 0.0
    %v5941 = vadd.f32 %v5939, %v5940
    %v5942 = vsel %vm5220, %v5044, 0.0
    %v5943 = vadd.f32 %v5941, %v5942
    %v5944 = vsel %vm5220, %v5045, 0.0
    %v5945 = vadd.f32 %v5943, %v5944
    %v5946 = vsel %vm5220, %v5046, 0.0
    %v5947 = vadd.f32 %v5945, %v5946
    %v5948 = vsel %vm5220, %v5047, 0.0
    %v5949 = vadd.f32 %v5947, %v5948
    %v5950 = vsel %vm5220, %v5048, 0.0
    %v5951 = vadd.f32 %v5949, %v5950
    %v5952 = vsel %vm5220, %v5049, 0.0
    %v5953 = vadd.f32 %v5951, %v5952
    %v5954 = vsel %vm5220, %v5050, 0.0
    %v5955 = vadd.f32 %v5953, %v5954
    %v5956 = vsel %vm5220, %v5051, 0.0
    %v5957 = vadd.f32 %v5955, %v5956
    %v5958 = vsel %vm5220, %v5052, 0.0
    %v5959 = vadd.f32 %v5957, %v5958
    %v5960 = vsel %vm5220, %v5053, 0.0
    %v5961 = vadd.f32 %v5959, %v5960
    %v5962 = vsel %vm5220, %v5054, 0.0
    %v5963 = vadd.f32 %v5961, %v5962
    %v5964 = vsel %vm5220, %v5055, 0.0
    %v5965 = vadd.f32 %v5963, %v5964
    %v5966 = vsel %vm5220, %v5056, 0.0
    %v5967 = vadd.f32 %v5965, %v5966
    %v5968 = vsel %vm5220, %v5057, 0.0
    %v5969 = vadd.f32 %v5967, %v5968
    %v5970 = vsel %vm5220, %v5058, 0.0
    %v5971 = vadd.f32 %v5969, %v5970
    %v5972 = vsel %vm5220, %v5059, 0.0
    %v5973 = vadd.f32 %v5971, %v5972
    %v5974 = vrot.slane %v5973, 4
    %v5975 = vadd.f32 %v5973, %v5974
    %v5976 = vrot.slane %v5975, 2
    %v5977 = vadd.f32 %v5975, %v5976
    %v5978 = vrot.slane %v5977, 1
    %v5979 = vadd.f32 %v5977, %v5978
    %v5980 = vsel %vm5220, %v5060, 0.0
    %v5981 = vsel %vm5220, %v5061, 0.0
    %v5982 = vadd.f32 %v5980, %v5981
    %v5983 = vsel %vm5220, %v5062, 0.0
    %v5984 = vadd.f32 %v5982, %v5983
    %v5985 = vsel %vm5220, %v5063, 0.0
    %v5986 = vadd.f32 %v5984, %v5985
    %v5987 = vsel %vm5220, %v5064, 0.0
    %v5988 = vadd.f32 %v5986, %v5987
    %v5989 = vsel %vm5220, %v5065, 0.0
    %v5990 = vadd.f32 %v5988, %v5989
    %v5991 = vsel %vm5220, %v5066, 0.0
    %v5992 = vadd.f32 %v5990, %v5991
    %v5993 = vsel %vm5220, %v5067, 0.0
    %v5994 = vadd.f32 %v5992, %v5993
    %v5995 = vsel %vm5220, %v5068, 0.0
    %v5996 = vadd.f32 %v5994, %v5995
    %v5997 = vsel %vm5220, %v5069, 0.0
    %v5998 = vadd.f32 %v5996, %v5997
    %v5999 = vsel %vm5220, %v5070, 0.0
    %v6000 = vadd.f32 %v5998, %v5999
    %v6001 = vsel %vm5220, %v5071, 0.0
    %v6002 = vadd.f32 %v6000, %v6001
    %v6003 = vsel %vm5220, %v5072, 0.0
    %v6004 = vadd.f32 %v6002, %v6003
    %v6005 = vsel %vm5220, %v5073, 0.0
    %v6006 = vadd.f32 %v6004, %v6005
    %v6007 = vsel %vm5220, %v5074, 0.0
    %v6008 = vadd.f32 %v6006, %v6007
    %v6009 = vsel %vm5220, %v5075, 0.0
    %v6010 = vadd.f32 %v6008, %v6009
    %v6011 = vsel %vm5220, %v5076, 0.0
    %v6012 = vadd.f32 %v6010, %v6011
    %v6013 = vsel %vm5220, %v5077, 0.0
    %v6014 = vadd.f32 %v6012, %v6013
    %v6015 = vsel %vm5220, %v5078, 0.0
    %v6016 = vadd.f32 %v6014, %v6015
    %v6017 = vsel %vm5220, %v5079, 0.0
    %v6018 = vadd.f32 %v6016, %v6017
    %v6019 = vsel %vm5220, %v5080, 0.0
    %v6020 = vadd.f32 %v6018, %v6019
    %v6021 = vsel %vm5220, %v5081, 0.0
    %v6022 = vadd.f32 %v6020, %v6021
    %v6023 = vsel %vm5220, %v5082, 0.0
    %v6024 = vadd.f32 %v6022, %v6023
    %v6025 = vsel %vm5220, %v5083, 0.0
    %v6026 = vadd.f32 %v6024, %v6025
    %v6027 = vsel %vm5220, %v5084, 0.0
    %v6028 = vadd.f32 %v6026, %v6027
    %v6029 = vsel %vm5220, %v5085, 0.0
    %v6030 = vadd.f32 %v6028, %v6029
    %v6031 = vsel %vm5220, %v5086, 0.0
    %v6032 = vadd.f32 %v6030, %v6031
    %v6033 = vsel %vm5220, %v5087, 0.0
    %v6034 = vadd.f32 %v6032, %v6033
    %v6035 = vsel %vm5220, %v5088, 0.0
    %v6036 = vadd.f32 %v6034, %v6035
    %v6037 = vsel %vm5220, %v5089, 0.0
    %v6038 = vadd.f32 %v6036, %v6037
    %v6039 = vsel %vm5220, %v5090, 0.0
    %v6040 = vadd.f32 %v6038, %v6039
    %v6041 = vsel %vm5220, %v5091, 0.0
    %v6042 = vadd.f32 %v6040, %v6041
    %v6043 = vrot.slane %v6042, 4
    %v6044 = vadd.f32 %v6042, %v6043
    %v6045 = vrot.slane %v6044, 2
    %v6046 = vadd.f32 %v6044, %v6045
    %v6047 = vrot.slane %v6046, 1
    %v6048 = vadd.f32 %v6046, %v6047
    %v6049 = vsel %vm5220, %v5092, 0.0
    %v6050 = vsel %vm5220, %v5093, 0.0
    %v6051 = vadd.f32 %v6049, %v6050
    %v6052 = vsel %vm5220, %v5094, 0.0
    %v6053 = vadd.f32 %v6051, %v6052
    %v6054 = vsel %vm5220, %v5095, 0.0
    %v6055 = vadd.f32 %v6053, %v6054
    %v6056 = vsel %vm5220, %v5096, 0.0
    %v6057 = vadd.f32 %v6055, %v6056
    %v6058 = vsel %vm5220, %v5097, 0.0
    %v6059 = vadd.f32 %v6057, %v6058
    %v6060 = vsel %vm5220, %v5098, 0.0
    %v6061 = vadd.f32 %v6059, %v6060
    %v6062 = vsel %vm5220, %v5099, 0.0
    %v6063 = vadd.f32 %v6061, %v6062
    %v6064 = vsel %vm5220, %v5100, 0.0
    %v6065 = vadd.f32 %v6063, %v6064
    %v6066 = vsel %vm5220, %v5101, 0.0
    %v6067 = vadd.f32 %v6065, %v6066
    %v6068 = vsel %vm5220, %v5102, 0.0
    %v6069 = vadd.f32 %v6067, %v6068
    %v6070 = vsel %vm5220, %v5103, 0.0
    %v6071 = vadd.f32 %v6069, %v6070
    %v6072 = vsel %vm5220, %v5104, 0.0
    %v6073 = vadd.f32 %v6071, %v6072
    %v6074 = vsel %vm5220, %v5105, 0.0
    %v6075 = vadd.f32 %v6073, %v6074
    %v6076 = vsel %vm5220, %v5106, 0.0
    %v6077 = vadd.f32 %v6075, %v6076
    %v6078 = vsel %vm5220, %v5107, 0.0
    %v6079 = vadd.f32 %v6077, %v6078
    %v6080 = vsel %vm5220, %v5108, 0.0
    %v6081 = vadd.f32 %v6079, %v6080
    %v6082 = vsel %vm5220, %v5109, 0.0
    %v6083 = vadd.f32 %v6081, %v6082
    %v6084 = vsel %vm5220, %v5110, 0.0
    %v6085 = vadd.f32 %v6083, %v6084
    %v6086 = vsel %vm5220, %v5111, 0.0
    %v6087 = vadd.f32 %v6085, %v6086
    %v6088 = vsel %vm5220, %v5112, 0.0
    %v6089 = vadd.f32 %v6087, %v6088
    %v6090 = vsel %vm5220, %v5113, 0.0
    %v6091 = vadd.f32 %v6089, %v6090
    %v6092 = vsel %vm5220, %v5114, 0.0
    %v6093 = vadd.f32 %v6091, %v6092
    %v6094 = vsel %vm5220, %v5115, 0.0
    %v6095 = vadd.f32 %v6093, %v6094
    %v6096 = vsel %vm5220, %v5116, 0.0
    %v6097 = vadd.f32 %v6095, %v6096
    %v6098 = vsel %vm5220, %v5117, 0.0
    %v6099 = vadd.f32 %v6097, %v6098
    %v6100 = vsel %vm5220, %v5118, 0.0
    %v6101 = vadd.f32 %v6099, %v6100
    %v6102 = vsel %vm5220, %v5119, 0.0
    %v6103 = vadd.f32 %v6101, %v6102
    %v6104 = vsel %vm5220, %v5120, 0.0
    %v6105 = vadd.f32 %v6103, %v6104
    %v6106 = vsel %vm5220, %v5121, 0.0
    %v6107 = vadd.f32 %v6105, %v6106
    %v6108 = vsel %vm5220, %v5122, 0.0
    %v6109 = vadd.f32 %v6107, %v6108
    %v6110 = vsel %vm5220, %v5123, 0.0
    %v6111 = vadd.f32 %v6109, %v6110
    %v6112 = vrot.slane %v6111, 4
    %v6113 = vadd.f32 %v6111, %v6112
    %v6114 = vrot.slane %v6113, 2
    %v6115 = vadd.f32 %v6113, %v6114
    %v6116 = vrot.slane %v6115, 1
    %v6117 = vadd.f32 %v6115, %v6116
    %v6118 = vsel %vm5220, %v5124, 0.0
    %v6119 = vsel %vm5220, %v5125, 0.0
    %v6120 = vadd.f32 %v6118, %v6119
    %v6121 = vsel %vm5220, %v5126, 0.0
    %v6122 = vadd.f32 %v6120, %v6121
    %v6123 = vsel %vm5220, %v5127, 0.0
    %v6124 = vadd.f32 %v6122, %v6123
    %v6125 = vsel %vm5220, %v5128, 0.0
    %v6126 = vadd.f32 %v6124, %v6125
    %v6127 = vsel %vm5220, %v5129, 0.0
    %v6128 = vadd.f32 %v6126, %v6127
    %v6129 = vsel %vm5220, %v5130, 0.0
    %v6130 = vadd.f32 %v6128, %v6129
    %v6131 = vsel %vm5220, %v5131, 0.0
    %v6132 = vadd.f32 %v6130, %v6131
    %v6133 = vsel %vm5220, %v5132, 0.0
    %v6134 = vadd.f32 %v6132, %v6133
    %v6135 = vsel %vm5220, %v5133, 0.0
    %v6136 = vadd.f32 %v6134, %v6135
    %v6137 = vsel %vm5220, %v5134, 0.0
    %v6138 = vadd.f32 %v6136, %v6137
    %v6139 = vsel %vm5220, %v5135, 0.0
    %v6140 = vadd.f32 %v6138, %v6139
    %v6141 = vsel %vm5220, %v5136, 0.0
    %v6142 = vadd.f32 %v6140, %v6141
    %v6143 = vsel %vm5220, %v5137, 0.0
    %v6144 = vadd.f32 %v6142, %v6143
    %v6145 = vsel %vm5220, %v5138, 0.0
    %v6146 = vadd.f32 %v6144, %v6145
    %v6147 = vsel %vm5220, %v5139, 0.0
    %v6148 = vadd.f32 %v6146, %v6147
    %v6149 = vsel %vm5220, %v5140, 0.0
    %v6150 = vadd.f32 %v6148, %v6149
    %v6151 = vsel %vm5220, %v5141, 0.0
    %v6152 = vadd.f32 %v6150, %v6151
    %v6153 = vsel %vm5220, %v5142, 0.0
    %v6154 = vadd.f32 %v6152, %v6153
    %v6155 = vsel %vm5220, %v5143, 0.0
    %v6156 = vadd.f32 %v6154, %v6155
    %v6157 = vsel %vm5220, %v5144, 0.0
    %v6158 = vadd.f32 %v6156, %v6157
    %v6159 = vsel %vm5220, %v5145, 0.0
    %v6160 = vadd.f32 %v6158, %v6159
    %v6161 = vsel %vm5220, %v5146, 0.0
    %v6162 = vadd.f32 %v6160, %v6161
    %v6163 = vsel %vm5220, %v5147, 0.0
    %v6164 = vadd.f32 %v6162, %v6163
    %v6165 = vsel %vm5220, %v5148, 0.0
    %v6166 = vadd.f32 %v6164, %v6165
    %v6167 = vsel %vm5220, %v5149, 0.0
    %v6168 = vadd.f32 %v6166, %v6167
    %v6169 = vsel %vm5220, %v5150, 0.0
    %v6170 = vadd.f32 %v6168, %v6169
    %v6171 = vsel %vm5220, %v5151, 0.0
    %v6172 = vadd.f32 %v6170, %v6171
    %v6173 = vsel %vm5220, %v5152, 0.0
    %v6174 = vadd.f32 %v6172, %v6173
    %v6175 = vsel %vm5220, %v5153, 0.0
    %v6176 = vadd.f32 %v6174, %v6175
    %v6177 = vsel %vm5220, %v5154, 0.0
    %v6178 = vadd.f32 %v6176, %v6177
    %v6179 = vsel %vm5220, %v5155, 0.0
    %v6180 = vadd.f32 %v6178, %v6179
    %v6181 = vrot.slane %v6180, 4
    %v6182 = vadd.f32 %v6180, %v6181
    %v6183 = vrot.slane %v6182, 2
    %v6184 = vadd.f32 %v6182, %v6183
    %v6185 = vrot.slane %v6184, 1
    %v6186 = vadd.f32 %v6184, %v6185
    %v6187 = vsel %vm5220, %v5156, 0.0
    %v6188 = vsel %vm5220, %v5157, 0.0
    %v6189 = vadd.f32 %v6187, %v6188
    %v6190 = vsel %vm5220, %v5158, 0.0
    %v6191 = vadd.f32 %v6189, %v6190
    %v6192 = vsel %vm5220, %v5159, 0.0
    %v6193 = vadd.f32 %v6191, %v6192
    %v6194 = vsel %vm5220, %v5160, 0.0
    %v6195 = vadd.f32 %v6193, %v6194
    %v6196 = vsel %vm5220, %v5161, 0.0
    %v6197 = vadd.f32 %v6195, %v6196
    %v6198 = vsel %vm5220, %v5162, 0.0
    %v6199 = vadd.f32 %v6197, %v6198
    %v6200 = vsel %vm5220, %v5163, 0.0
    %v6201 = vadd.f32 %v6199, %v6200
    %v6202 = vsel %vm5220, %v5164, 0.0
    %v6203 = vadd.f32 %v6201, %v6202
    %v6204 = vsel %vm5220, %v5165, 0.0
    %v6205 = vadd.f32 %v6203, %v6204
    %v6206 = vsel %vm5220, %v5166, 0.0
    %v6207 = vadd.f32 %v6205, %v6206
    %v6208 = vsel %vm5220, %v5167, 0.0
    %v6209 = vadd.f32 %v6207, %v6208
    %v6210 = vsel %vm5220, %v5168, 0.0
    %v6211 = vadd.f32 %v6209, %v6210
    %v6212 = vsel %vm5220, %v5169, 0.0
    %v6213 = vadd.f32 %v6211, %v6212
    %v6214 = vsel %vm5220, %v5170, 0.0
    %v6215 = vadd.f32 %v6213, %v6214
    %v6216 = vsel %vm5220, %v5171, 0.0
    %v6217 = vadd.f32 %v6215, %v6216
    %v6218 = vsel %vm5220, %v5172, 0.0
    %v6219 = vadd.f32 %v6217, %v6218
    %v6220 = vsel %vm5220, %v5173, 0.0
    %v6221 = vadd.f32 %v6219, %v6220
    %v6222 = vsel %vm5220, %v5174, 0.0
    %v6223 = vadd.f32 %v6221, %v6222
    %v6224 = vsel %vm5220, %v5175, 0.0
    %v6225 = vadd.f32 %v6223, %v6224
    %v6226 = vsel %vm5220, %v5176, 0.0
    %v6227 = vadd.f32 %v6225, %v6226
    %v6228 = vsel %vm5220, %v5177, 0.0
    %v6229 = vadd.f32 %v6227, %v6228
    %v6230 = vsel %vm5220, %v5178, 0.0
    %v6231 = vadd.f32 %v6229, %v6230
    %v6232 = vsel %vm5220, %v5179, 0.0
    %v6233 = vadd.f32 %v6231, %v6232
    %v6234 = vsel %vm5220, %v5180, 0.0
    %v6235 = vadd.f32 %v6233, %v6234
    %v6236 = vsel %vm5220, %v5181, 0.0
    %v6237 = vadd.f32 %v6235, %v6236
    %v6238 = vsel %vm5220, %v5182, 0.0
    %v6239 = vadd.f32 %v6237, %v6238
    %v6240 = vsel %vm5220, %v5183, 0.0
    %v6241 = vadd.f32 %v6239, %v6240
    %v6242 = vsel %vm5220, %v5184, 0.0
    %v6243 = vadd.f32 %v6241, %v6242
    %v6244 = vsel %vm5220, %v5185, 0.0
    %v6245 = vadd.f32 %v6243, %v6244
    %v6246 = vsel %vm5220, %v5186, 0.0
    %v6247 = vadd.f32 %v6245, %v6246
    %v6248 = vsel %vm5220, %v5187, 0.0
    %v6249 = vadd.f32 %v6247, %v6248
    %v6250 = vrot.slane %v6249, 4
    %v6251 = vadd.f32 %v6249, %v6250
    %v6252 = vrot.slane %v6251, 2
    %v6253 = vadd.f32 %v6251, %v6252
    %v6254 = vrot.slane %v6253, 1
    %v6255 = vadd.f32 %v6253, %v6254
    %v6256 = vsel %vm5220, %v5188, 0.0
    %v6257 = vsel %vm5220, %v5189, 0.0
    %v6258 = vadd.f32 %v6256, %v6257
    %v6259 = vsel %vm5220, %v5190, 0.0
    %v6260 = vadd.f32 %v6258, %v6259
    %v6261 = vsel %vm5220, %v5191, 0.0
    %v6262 = vadd.f32 %v6260, %v6261
    %v6263 = vsel %vm5220, %v5192, 0.0
    %v6264 = vadd.f32 %v6262, %v6263
    %v6265 = vsel %vm5220, %v5193, 0.0
    %v6266 = vadd.f32 %v6264, %v6265
    %v6267 = vsel %vm5220, %v5194, 0.0
    %v6268 = vadd.f32 %v6266, %v6267
    %v6269 = vsel %vm5220, %v5195, 0.0
    %v6270 = vadd.f32 %v6268, %v6269
    %v6271 = vsel %vm5220, %v5196, 0.0
    %v6272 = vadd.f32 %v6270, %v6271
    %v6273 = vsel %vm5220, %v5197, 0.0
    %v6274 = vadd.f32 %v6272, %v6273
    %v6275 = vsel %vm5220, %v5198, 0.0
    %v6276 = vadd.f32 %v6274, %v6275
    %v6277 = vsel %vm5220, %v5199, 0.0
    %v6278 = vadd.f32 %v6276, %v6277
    %v6279 = vsel %vm5220, %v5200, 0.0
    %v6280 = vadd.f32 %v6278, %v6279
    %v6281 = vsel %vm5220, %v5201, 0.0
    %v6282 = vadd.f32 %v6280, %v6281
    %v6283 = vsel %vm5220, %v5202, 0.0
    %v6284 = vadd.f32 %v6282, %v6283
    %v6285 = vsel %vm5220, %v5203, 0.0
    %v6286 = vadd.f32 %v6284, %v6285
    %v6287 = vsel %vm5220, %v5204, 0.0
    %v6288 = vadd.f32 %v6286, %v6287
    %v6289 = vsel %vm5220, %v5205, 0.0
    %v6290 = vadd.f32 %v6288, %v6289
    %v6291 = vsel %vm5220, %v5206, 0.0
    %v6292 = vadd.f32 %v6290, %v6291
    %v6293 = vsel %vm5220, %v5207, 0.0
    %v6294 = vadd.f32 %v6292, %v6293
    %v6295 = vsel %vm5220, %v5208, 0.0
    %v6296 = vadd.f32 %v6294, %v6295
    %v6297 = vsel %vm5220, %v5209, 0.0
    %v6298 = vadd.f32 %v6296, %v6297
    %v6299 = vsel %vm5220, %v5210, 0.0
    %v6300 = vadd.f32 %v6298, %v6299
    %v6301 = vsel %vm5220, %v5211, 0.0
    %v6302 = vadd.f32 %v6300, %v6301
    %v6303 = vsel %vm5220, %v5212, 0.0
    %v6304 = vadd.f32 %v6302, %v6303
    %v6305 = vsel %vm5220, %v5213, 0.0
    %v6306 = vadd.f32 %v6304, %v6305
    %v6307 = vsel %vm5220, %v5214, 0.0
    %v6308 = vadd.f32 %v6306, %v6307
    %v6309 = vsel %vm5220, %v5215, 0.0
    %v6310 = vadd.f32 %v6308, %v6309
    %v6311 = vsel %vm5220, %v5216, 0.0
    %v6312 = vadd.f32 %v6310, %v6311
    %v6313 = vsel %vm5220, %v5217, 0.0
    %v6314 = vadd.f32 %v6312, %v6313
    %v6315 = vsel %vm5220, %v5218, 0.0
    %v6316 = vadd.f32 %v6314, %v6315
    %v6317 = vsel %vm5220, %v5219, 0.0
    %v6318 = vadd.f32 %v6316, %v6317
    %v6319 = vrot.slane %v6318, 4
    %v6320 = vadd.f32 %v6318, %v6319
    %v6321 = vrot.slane %v6320, 2
    %v6322 = vadd.f32 %v6320, %v6321
    %v6323 = vrot.slane %v6322, 1
    %v6324 = vadd.f32 %v6322, %v6323
    %v6325 = vrcp.pop 256.0
    %v6326 = vmul.f32 %v5289, %v6325
    %v6327 = vmul.f32 %v5358, %v6325
    %v6328 = vmul.f32 %v5427, %v6325
    %v6329 = vmul.f32 %v5496, %v6325
    %v6330 = vmul.f32 %v5565, %v6325
    %v6331 = vmul.f32 %v5634, %v6325
    %v6332 = vmul.f32 %v5703, %v6325
    %v6333 = vmul.f32 %v5772, %v6325
    %v6334 = vmul.f32 %v5841, %v6325
    %v6335 = vmul.f32 %v5910, %v6325
    %v6336 = vmul.f32 %v5979, %v6325
    %v6337 = vmul.f32 %v6048, %v6325
    %v6338 = vmul.f32 %v6117, %v6325
    %v6339 = vmul.f32 %v6186, %v6325
    %v6340 = vmul.f32 %v6255, %v6325
    %v6341 = vmul.f32 %v6324, %v6325
    %v6342 = vld [vmem:[%s3] sm:$0xff]
    %v6343 = vld [vmem:[%s3 + $0x8] sm:$0xff]
    %v6344 = vld [vmem:[%s3 + $0x10] sm:$0xff]
    %v6345 = vld [vmem:[%s3 + $0x18] sm:$0xff]
    %v6346 = vld [vmem:[%s3 + $0x20] sm:$0xff]
    %v6347 = vld [vmem:[%s3 + $0x28] sm:$0xff]
    %v6348 = vld [vmem:[%s3 + $0x30] sm:$0xff]
    %v6349 = vld [vmem:[%s3 + $0x38] sm:$0xff]
    %vm6366 = vcmask 1041409
    %v6367 = vsel %vm6366, %v6327, %v6326
    %vm6368 = vcmask 1042434
    %v6369 = vsel %vm6368, %v6328, %v6367
    %vm6370 = vcmask 1043459
    %v6371 = vsel %vm6370, %v6329, %v6369
    %vm6372 = vcmask 1044484
    %v6373 = vsel %vm6372, %v6330, %v6371
    %vm6374 = vcmask 1045509
    %v6375 = vsel %vm6374, %v6331, %v6373
    %vm6376 = vcmask 1046534
    %v6377 = vsel %vm6376, %v6332, %v6375
    %vm6378 = vcmask 1047559
    %v6379 = vsel %vm6378, %v6333, %v6377
    %v6380 = vsel %vm6366, %v6335, %v6334
    %v6381 = vsel %vm6368, %v6336, %v6380
    %v6382 = vsel %vm6370, %v6337, %v6381
    %v6383 = vsel %vm6372, %v6338, %v6382
    %v6384 = vsel %vm6374, %v6339, %v6383
    %v6385 = vsel %vm6376, %v6340, %v6384
    %v6386 = vsel %vm6378, %v6341, %v6385
    %v6387 = vsel %vm5220, %v6379, 0
    %v6389 = vsel %vm5220, %v6386, 0
    %6391 = vmatprep.subr.mxu0 0.0
    %6392 = vmatpush1.msra.mxu0 %v6342
    %6393 = vmatprep.subr.mxu0 0.0
    %6394 = vmatpush1.msra.mxu0 %v6343
    %6395 = vmatprep.subr.mxu0 0.0
    %6396 = vmatpush1.msra.mxu0 %v6344
    %6397 = vmatprep.subr.mxu0 0.0
    %6398 = vmatpush1.msra.mxu0 %v6345
    %6399 = vmatprep.subr.mxu0 0.0
    %6400 = vmatpush1.msra.mxu0 %v6346
    %6401 = vmatprep.subr.mxu0 0.0
    %6402 = vmatpush1.msra.mxu0 %v6347
    %6403 = vmatprep.subr.mxu0 0.0
    %6404 = vmatpush1.msra.mxu0 %v6348
    %6405 = vmatprep.subr.mxu0 0.0
    %6406 = vmatpush1.msra.mxu0 %v6349
    %6407 = vmatprep.subr.mxu0 0.0
    %6408 = vmatpush1.msra.mxu0 0.0
    %6409 = vmatprep.subr.mxu0 0.0
    %6410 = vmatpush1.msra.mxu0 0.0
    %6411 = vmatprep.subr.mxu0 0.0
    %6412 = vmatpush1.msra.mxu0 0.0
    %6413 = vmatprep.subr.mxu0 0.0
    %6414 = vmatpush1.msra.mxu0 0.0
    %6415 = vmatprep.subr.mxu0 0.0
    %6416 = vmatpush1.msra.mxu0 0.0
    %6417 = vmatprep.subr.mxu0 0.0
    %6418 = vmatpush1.msra.mxu0 0.0
    %6419 = vmatprep.subr.mxu0 0.0
    %6420 = vmatpush1.msra.mxu0 0.0
    %6421 = vmatprep.subr.mxu0 0.0
    %6422 = vmatpush1.msra.mxu0 0.0
    %6423 = vmatprep.subr.mxu0 0.0
    %6424 = vmatpush1.msra.mxu0 0.0
    %6425 = vmatprep.subr.mxu0 0.0
    %6426 = vmatpush1.msra.mxu0 0.0
    %6427 = vmatprep.subr.mxu0 0.0
    %6428 = vmatpush1.msra.mxu0 0.0
    %6429 = vmatprep.subr.mxu0 0.0
    %6430 = vmatpush1.msra.mxu0 0.0
    %6431 = vmatprep.subr.mxu0 0.0
    %6432 = vmatpush1.msra.mxu0 0.0
    %6433 = vmatprep.subr.mxu0 0.0
    %6434 = vmatpush1.msra.mxu0 0.0
    %6435 = vmatprep.subr.mxu0 0.0
    %6436 = vmatpush1.msra.mxu0 0.0
    %6437 = vmatprep.subr.mxu0 0.0
    %6438 = vmatpush1.msra.mxu0 0.0
    %6439 = vmatprep.subr.mxu0 0.0
    %6440 = vmatpush1.msra.mxu0 0.0
    %6441 = vmatprep.subr.mxu0 0.0
    %6442 = vmatpush1.msra.mxu0 0.0
    %6443 = vmatprep.subr.mxu0 0.0
    %6444 = vmatpush1.msra.mxu0 0.0
    %6445 = vmatprep.subr.mxu0 0.0
    %6446 = vmatpush1.msra.mxu0 0.0
    %6447 = vmatprep.subr.mxu0 0.0
    %6448 = vmatpush1.msra.mxu0 0.0
    %6449 = vmatprep.subr.mxu0 0.0
    %6450 = vmatpush1.msra.mxu0 0.0
    %6451 = vmatprep.subr.mxu0 0.0
    %6452 = vmatpush1.msra.mxu0 0.0
    %6453 = vmatprep.subr.mxu0 0.0
    %6454 = vmatpush1.msra.mxu0 0.0
    %6455 = vmatprep.mubr.f32.mxu0 0.0
    %6456 = vmatmul.mubr.f32.gmra.mrb[0].mxu0 %v6387
    %v6457 = vpop.f32.mrb[0].mxu0
    %v6458 = vadd.f32 0.0, %v6457
    %v6459 = vpop.f32.mrb[0].mxu0
    %6460 = vmatprep.mubr.f32.mxu0 0.0
    %6461 = vmatmul.mubr.f32.gmra.mrb[0].mxu0 %v6389
    %v6462 = vpop.f32.mrb[0].mxu0
    %v6463 = vadd.f32 0.0, %v6462
    %v6464 = vpop.f32.mrb[0].mxu0
    %6465 = vdwg.mxu0
    %6466 = vst [vmem:[#allocation2] sm:$0xff] %v6458
    %6467 = vst [vmem:[#allocation2 + $0x8] sm:$0xff] %v6463
    // Predicated region
    $region18: #{tpu_custom_call.1} parent=1 // pred_check
      _
    $region19: #{tpu_custom_call.1} parent=1 // pred_check_branch
      %6469 = sbr.rel (0) target = $region21
    $region20: #{tpu_custom_call.1} parent=1 // pred_region
      %s6471 = ssub.s32 256, 256
      %6472 = vsyncadd [#allocation3], %s6471
      %s6473 = sshll.u32 [#allocation2], 4
      %s6474 = int_to_ptr.vmem [resolvable:$true] %s6473
      %6479 = dma.vmem_to_hbm [thread:$0]  %s6474, 256, %s4, [#allocation3], 128, 128, 8
    $region21: #{tpu_custom_call.1} parent=1 // pred_fallthru
      _
    // Predicated region
    $region22: #{tpu_custom_call.1} parent=1 // pred_check
      _
    $region23: #{tpu_custom_call.1} parent=1 // pred_check_branch
      %6481 = sbr.rel (0) target = $region25
    $region24: #{tpu_custom_call.1} parent=1 // pred_region
      %6482 = dma.done [#allocation3], 256
    $region25: #{tpu_custom_call.1} parent=1 // pred_fallthru
      _
    %6483 = vsyncpa [#allocation3], 1

</llo_original>
